<compile_context>
chip_gen: v6e
topology: v6e:2x2x1
jax: 0.10.0
libtpu: 0.0.40
codegen_flags: <defaults>
</compile_context>

<pallas_src>
import jax
import jax.numpy as jnp
from jax.experimental import pallas as pl
from jax.experimental.pallas import tpu as pltpu

LN_EPS = 1e-12
BF16 = jnp.bfloat16


def _round_up(n, m):
    return (n + m - 1) // m * m


def _bf16(w):
    return w.astype(BF16)


def _vmem_limit(tile_bytes):
    # Explicit scoped-VMEM budget: 2x tiles (double buffering) + headroom, clamped to a range
    # that is safe on every generation (v7x has 64 MiB physical VMEM; raise the cap toward
    # ~100 MiB when targeting v5e/v6e only).
    return int(min(max(2 * tile_bytes + (4 << 20), 32 << 20), 56 << 20))


def _const_spec(shape):
    """Grid-constant operand (1-D grid): single-buffered, no wasted double-buffer VMEM."""
    zeros = (0,) * len(shape)
    return pl.BlockSpec(shape, lambda i: zeros, pipeline_mode=pl.Buffered(1))


# ----------------------------------------------------------------------------
# In-kernel building blocks
# ----------------------------------------------------------------------------
def _layer_norm(x, g, b, eps=LN_EPS):
    mu = jnp.mean(x, axis=-1, keepdims=True)
    var = jnp.mean(jnp.square(x - mu), axis=-1, keepdims=True)
    return (x - mu) * jax.lax.rsqrt(var + eps) * g + b


def _ffn_rows(rows, n1g, n1b, w1, b1, nfg, nfb, w2):
    """PositionwiseFeedForwardDecoderSANM on flattened rows: w2 @ LN(relu(w1 @ LN1(x) + b1))."""
    t = _layer_norm(rows, n1g, n1b)
    h = jnp.dot(t.astype(BF16), w1, preferred_element_type=jnp.float32) + b1
    h = jnp.maximum(h, 0.0)
    h = _layer_norm(h, nfg, nfb)
    return jnp.dot(h.astype(BF16), w2, preferred_element_type=jnp.float32)


# ----------------------------------------------------------------------------
# Fused decoder-layer kernel (FFN + FSMN [+ cross attention]) over a stacked layer axis
# ----------------------------------------------------------------------------
_DEC1_WNAMES = ("n1g", "n1b", "w1", "b1", "nfg", "nfb", "w2",
                "n2g", "n2b", "fw",
                "n3g", "n3b", "wq", "bq", "wkv", "bkv", "wo", "bo")
_DEC2_WNAMES = ("n1g", "n1b", "w1", "b1", "nfg", "nfb", "w2", "n2g", "n2b", "fw")


def _make_dec_layer_kernel(BB, T, Ti, D, K, left, H, cross):
    P = T + K - 1                               # padded length (torch ConstantPad1d)
    wlen = max(min(T, P - left), 0)             # right-crop when left > K-1 (sanm_shfit > 0)
    right = P - left - wlen
    dk = D // H
    scale = float(dk) ** -0.5
    neg = float(jnp.finfo(jnp.float32).min)

    def kernel(*refs):
        if cross:
            (x_ref, mask_ref, mem_ref, mmask_ref,
             n1g, n1b, w1, b1, nfg, nfb, w2,
             n2g, n2b, fw,
             n3g, n3b, wq, bq, wkv, bkv, wo, bo,
             o_ref, pad_ref) = refs
        else:
            (x_ref, mask_ref,
             n1g, n1b, w1, b1, nfg, nfb, w2,
             n2g, n2b, fw,
             o_ref, pad_ref) = refs

        # x is carried in VMEM across the layer grid axis (out block index constant in l).
        @pl.when(pl.program_id(1) == 0)
        def _():
            o_ref[...] = x_ref[...]

        x = o_ref[...]                          # (BB, T, D) f32 state / residual
        mask = mask_ref[...]                    # (BB, T, 1)

        # ---- FFN: flattened over BB*T rows so the MXU row dimension is filled ----
        t = _ffn_rows(x.reshape(BB * T, D),
                      n1g[0], n1b[0], w1[0], b1[0], nfg[0], nfb[0], w2[0])

        # ---- FSMN memory block: masked depthwise conv over time + skip, re-masked ----
        t2 = _layer_norm(t, n2g[0], n2b[0]).reshape(BB, T, D)
        inp = t2 * mask
        if left > 0:
            pad_ref[:, 0:left, :] = jnp.zeros((BB, left, D), jnp.float32)
        if right > 0:
            pad_ref[:, left + wlen:P, :] = jnp.zeros((BB, right, D), jnp.float32)
        if wlen > 0:
            pad_ref[:, left:left + wlen, :] = inp if wlen == T else inp[:, :wlen, :]
        padded = pad_ref[...]
        fwv = fw[0]                             # (K, D): fw[k, d] == torch conv weight[d, 0, k]
        acc = inp                               # "+ inputs" skip term
        # TODO(synk): the K unaligned time slices cost XLU sublane rotates; revisit with
        # pltpu.roll only if bundle dumps show the XLU slot as binding.
        for k in range(K):
            acc = acc + padded[:, k:k + T, :] * fwv[k:k + 1, :][None]
        x = x + acc * mask                      # residual around FSMN

        if not cross:
            o_ref[...] = x
            return

        # ---- cross attention over the encoder memory ----
        xn = _layer_norm(x.reshape(BB * T, D), n3g[0], n3b[0])
        q = jnp.dot(xn.astype(BF16), wq[0], preferred_element_type=jnp.float32) + bq[0]
        q = (q * scale).reshape(BB, T, D)
        mem = mem_ref[...]                      # (BB, Ti, D) bf16 (pre-cast once outside)
        kv = jnp.dot(mem.reshape(BB * Ti, D), wkv[0],
                     preferred_element_type=jnp.float32) + bkv[0]
        kv = kv.astype(BF16).reshape(BB, Ti, 2 * D)   # single bf16 cast of the kv tensor
        wo_l = wo[0]
        bo_l = bo[0]
        for b in range(BB):
            masked = (mmask_ref[b] == 0.0)      # (1, Ti)
            kb = kv[b, :, :D]
            vb = kv[b, :, D:]
            out_b = jnp.zeros((T, D), jnp.float32) + bo_l
            ctxs = []
            for hh in range(H):
                sl = slice(hh * dk, (hh + 1) * dk)
                qh = q[b, :, sl].astype(BF16)
                scores = jax.lax.dot_general(qh, kb[:, sl], (((1,), (1,)), ((), ())),
                                             preferred_element_type=jnp.float32)  # (T, Ti)
                scores = jnp.where(masked, neg, scores)
                mx = jnp.max(scores, axis=-1, keepdims=True)
                e = jnp.exp(scores - mx)
                den = jnp.sum(e, axis=-1, keepdims=True)
                attn = e * pl.reciprocal(den, approx=True)     # EUP rcp, not VALU divide
                attn = jnp.where(masked, 0.0, attn)
                ctx = jnp.dot(attn.astype(BF16), vb[:, sl],
                              preferred_element_type=jnp.float32)                 # (T, dk)
                if dk % 128 == 0:
                    ctxs.append(ctx.astype(BF16))              # lane-aligned head merge
                else:
                    out_b = out_b + jnp.dot(ctx.astype(BF16), wo_l[sl, :],
                                            preferred_element_type=jnp.float32)
            if dk % 128 == 0:
                # one full-depth (T,D)x(D,D) wo matmul instead of H rank-dk pushes (v6e/v7x)
                ctx_full = jnp.concatenate(ctxs, axis=-1)
                out_b = out_b + jnp.dot(ctx_full, wo_l, preferred_element_type=jnp.float32)
            o_ref[b] = x[b] + out_b

    return kernel


def _dec_group_call(x, tgt_mask, memory_bf16, memory_mask, wstack, K, left, H, cross, BB):
    Bp, T, D = x.shape
    nb = Bp // BB
    L = wstack["w1"].shape[0]
    U = wstack["w1"].shape[2]
    Ti = memory_bf16.shape[1] if cross else 0
    names = _DEC1_WNAMES if cross else _DEC2_WNAMES
    wargs = tuple(wstack[n] for n in names)

    kern = _make_dec_layer_kernel(BB, T, Ti, D, K, left, H, cross)

    def bmap(bi, l):
        return (bi, 0, 0)

    def wmap(bi, l):
        return (l, 0, 0)

    act_specs = [pl.BlockSpec((BB, T, D), bmap),
                 pl.BlockSpec((BB, T, 1), bmap)]
    ins = [x, tgt_mask]
    if cross:
        act_specs += [pl.BlockSpec((BB, Ti, D), bmap),
                      pl.BlockSpec((BB, 1, Ti), bmap)]
        ins += [memory_bf16, memory_mask]
    w_specs = [pl.BlockSpec((1,) + a.shape[1:], wmap) for a in wargs]

    est = (2 * BB * T * D * 4                     # x in + carried out state (f32)
           + BB * T * 4                           # tgt mask
           + BB * T * U * 4                       # FFN hidden intermediate
           + BB * (T + K - 1) * D * 4             # FSMN pad scratch
           + sum(int(a.nbytes) // L for a in wargs))   # one layer's weights
    if cross:
        est += BB * Ti * D * 2 + BB * Ti * 4 + BB * Ti * 2 * D * 4

    return pl.pallas_call(
        kern,
        out_shape=jax.ShapeDtypeStruct((Bp, T, D), jnp.float32),
        grid_spec=pltpu.PrefetchScalarGridSpec(
            num_scalar_prefetch=0, grid=(nb, L),
            in_specs=act_specs + w_specs,
            out_specs=pl.BlockSpec((BB, T, D), bmap),
            scratch_shapes=[pltpu.VMEM((BB, T + K - 1, D), jnp.float32)]),
        compiler_params=pltpu.CompilerParams(
            dimension_semantics=("parallel", "arbitrary"),
            vmem_limit_bytes=_vmem_limit(est)),
    )(*ins, *wargs)


# ----------------------------------------------------------------------------
# decoders3 (FFN only, no residual) + after_norm, over flattened rows
# ----------------------------------------------------------------------------
def _dec3_kernel(x_ref, n1g, n1b, w1, b1, nfg, nfb, w2, ag, ab, o_ref):
    y = _ffn_rows(x_ref[...], n1g[...], n1b[...], w1[...], b1[...],
                  nfg[...], nfb[...], w2[...])
    o_ref[...] = _layer_norm(y, ag[...], ab[...])   # after_norm fused (hoisted out of final)


def _dec3_after_call(x, p3, after):
    B, T, D = x.shape
    M = B * T
    xf = x.reshape(M, D)
    TM = min(_round_up(M, 8), 512)
    Mp = _round_up(M, TM)
    if Mp != M:
        xf = jnp.pad(xf, ((0, Mp - M), (0, 0)))
    wargs = (p3["n1g"], p3["n1b"], p3["w1"], p3["b1"], p3["nfg"], p3["nfb"], p3["w2"],
             after["g"], after["b"])
    U = p3["w1"].shape[1]
    est = 4 * TM * D * 4 + TM * U * 4 + sum(int(a.nbytes) for a in wargs)
    out = pl.pallas_call(
        _dec3_kernel,
        out_shape=jax.ShapeDtypeStruct((Mp, D), jnp.float32),
        grid_spec=pltpu.PrefetchScalarGridSpec(
            num_scalar_prefetch=0, grid=(Mp // TM,),
            in_specs=[pl.BlockSpec((TM, D), lambda i: (i, 0))]
                     + [_const_spec(a.shape) for a in wargs],
            out_specs=pl.BlockSpec((TM, D), lambda i: (i, 0))),
        compiler_params=pltpu.CompilerParams(
            dimension_semantics=("parallel",),
            vmem_limit_bytes=_vmem_limit(est)),
    )(xf, *wargs)
    return out, M


# ----------------------------------------------------------------------------
# Final vocab projection: matmul + bias only, vocab-tiled, rows resident
# ----------------------------------------------------------------------------
def _final_kernel(x_ref, w_ref, b_ref, o_ref):
    o_ref[...] = jnp.dot(x_ref[...].astype(BF16), w_ref[...],
                         preferred_element_type=jnp.float32) + b_ref[...]


def _final_call(xf, w_pad, b_pad, M, B, T, V):
    Mp, D = xf.shape
    Vp = w_pad.shape[1]                    # already padded to a multiple of 128 in prep
    # Pick a vocab tile that divides Vp exactly (no padded-column MXU waste) and keeps the
    # (Mp, TV) f32 output tile modest.
    TV = 128
    for cand in range(min(Vp, 2048), 0, -128):
        if Vp % cand == 0 and Mp * cand * 4 <= (4 << 20):
            TV = cand
            break
    est = Mp * D * 4 + 2 * (D * TV * 2 + TV * 4 + Mp * TV * 4)
    logits = pl.pallas_call(
        _final_kernel,
        out_shape=jax.ShapeDtypeStruct((Mp, Vp), jnp.float32),
        grid_spec=pltpu.PrefetchScalarGridSpec(
            num_scalar_prefetch=0, grid=(Vp // TV,),
            in_specs=[_const_spec((Mp, D)),                      # rows stay VMEM-resident
                      pl.BlockSpec((D, TV), lambda j: (0, j)),
                      pl.BlockSpec((1, TV), lambda j: (0, j))],
            out_specs=pl.BlockSpec((Mp, TV), lambda j: (0, j))),
        compiler_params=pltpu.CompilerParams(
            dimension_semantics=("parallel",),
            vmem_limit_bytes=_vmem_limit(est)),
    )(xf, w_pad, b_pad)
    return logits[:M, :V].reshape(B, T, V)


# ----------------------------------------------------------------------------
# Parameters (synthetic init; PyTorch Linear weights stored as (in, out)) + one-time prep
# ----------------------------------------------------------------------------
def init_params(key, vocab_size, D, U, K, att_layer_num, num_blocks):
    keys = iter(jax.random.split(key, 128))

    def w(shape, fan_in):
        return jax.random.normal(next(keys), shape, jnp.float32) * (0.5 / float(fan_in) ** 0.5)

    def ffn_p():
        return dict(n1g=jnp.ones((1, D), jnp.float32), n1b=jnp.zeros((1, D), jnp.float32),
                    w1=w((D, U), D), b1=w((1, U), U),
                    nfg=jnp.ones((1, U), jnp.float32), nfb=jnp.zeros((1, U), jnp.float32),
                    w2=w((U, D), U))

    def fsmn_p():
        return dict(n2g=jnp.ones((1, D), jnp.float32), n2b=jnp.zeros((1, D), jnp.float32),
                    fw=w((K, D), K))   # (K, D): fw[k, d] == torch conv weight[d, 0, k]

    def cross_p():
        return dict(n3g=jnp.ones((1, D), jnp.float32), n3b=jnp.zeros((1, D), jnp.float32),
                    wq=w((D, D), D), bq=w((1, D), D),
                    wkv=w((D, 2 * D), D), bkv=w((1, 2 * D), D),
                    wo=w((D, D), D), bo=w((1, D), D))

    dec1 = [dict(**ffn_p(), **fsmn_p(), **cross_p()) for _ in range(att_layer_num)]
    dec2 = [dict(**ffn_p(), **fsmn_p()) for _ in range(max(num_blocks - att_layer_num, 0))]
    dec3 = [ffn_p() for _ in range(1)]
    after = dict(g=jnp.ones((1, D), jnp.float32), b=jnp.zeros((1, D), jnp.float32))
    outp = dict(w=w((D, vocab_size), D), b=w((1, vocab_size), vocab_size))
    return dict(dec1=dec1, dec2=dec2, dec3=dec3, after=after, out=outp)


def prepare_params(params):
    """One-time prep (review item): bf16-cast matmul weights, stack dec1/dec2 weights on a
    leading layer axis, pre-pad the vocab projection to a multiple of 128."""
    def cast_mm(p, keys):
        q = dict(p)
        for k in keys:
            q[k] = _bf16(q[k])
        return q

    def stack(layers):
        if not layers:
            return None
        return jax.tree_util.tree_map(lambda *xs: jnp.stack(xs, axis=0), *layers)

    dec1 = stack([cast_mm(p, ("w1", "w2", "wq", "wkv", "wo")) for p in params["dec1"]])
    dec2 = stack([cast_mm(p, ("w1", "w2")) for p in params["dec2"]])
    assert len(params["dec3"]) == 1
    dec3 = cast_mm(params["dec3"][0], ("w1", "w2"))

    V = params["out"]["w"].shape[1]
    Vp = _round_up(V, 128)
    w = _bf16(params["out"]["w"])
    b = params["out"]["b"]
    if Vp != V:
        w = jnp.pad(w, ((0, 0), (0, Vp - V)))
        b = jnp.pad(b, ((0, 0), (0, Vp - V)))
    return dict(dec1=dec1, dec2=dec2, dec3=dec3, after=params["after"],
                out_w=w, out_b=b, vocab=V)


def _pick_bb(B, T, Ti, D):
    """Batch-block so BB*T >= ~256 MXU rows, capped by a modest per-step memory-tile budget."""
    bb = max(1, min(B, -(-256 // max(T, 1))))
    while bb > 1 and bb * Ti * D * 8 > (12 << 20):
        bb -= 1
    return bb


# ----------------------------------------------------------------------------
# Forward (glue in JAX, hot path in Pallas kernels)
# ----------------------------------------------------------------------------
def cif_decoder_sanm_forward(prep, hs_pad, hlens, ys_in_pad, ys_in_lens,
                             attention_heads, kernel_size, sanm_shfit=0):
    B, Ti, D = hs_pad.shape
    To = ys_in_pad.shape[1]
    tgt_mask = (jnp.arange(To)[None, :] < ys_in_lens[:, None]).astype(jnp.float32)[:, :, None]
    memory_mask = (jnp.arange(Ti)[None, :] < hlens[:, None]).astype(jnp.float32)[:, None, :]
    olens = jnp.sum(tgt_mask, axis=1)

    # TODO(synk): sanm_shfit > 0 right-crops the padded FSMN buffer (ConstantPad1d with a
    # negative right pad); that branch is implemented but not exercised by the demo.
    left1 = (kernel_size - 1) // 2 + (sanm_shfit if sanm_shfit > 0 else 0)
    left2 = (kernel_size - 1) // 2

    BB = _pick_bb(B, To, Ti, D)
    Bp = _round_up(B, BB)

    x = ys_in_pad
    mem = hs_pad.astype(BF16)            # cast memory once, outside the layer loop
    tm, mm = tgt_mask, memory_mask
    if Bp != B:
        padb = ((0, Bp - B), (0, 0), (0, 0))
        x = jnp.pad(x, padb)
        mem = jnp.pad(mem, padb)
        tm = jnp.pad(tm, padb)
        mm = jnp.pad(mm, padb)

    if prep["dec1"] is not None:          # decoders: FFN + FSMN + cross attention (layer-stacked)
        x = _dec_group_call(x, tm, mem, mm, prep["dec1"],
                            kernel_size, left1, attention_heads, True, BB)
    if prep["dec2"] is not None:          # decoders2: FFN + FSMN (layer-stacked)
        x = _dec_group_call(x, tm, None, None, prep["dec2"],
                            kernel_size, left2, attention_heads, False, BB)
    x = x[:B]

    xf, M = _dec3_after_call(x, prep["dec3"], prep["after"])     # decoders3 + after_norm
    logits = _final_call(xf, prep["out_w"], prep["out_b"], M, B, To, prep["vocab"])
    return logits, olens


# ----------------------------------------------------------------------------
# Pure-JAX reference (matches the kernels' bf16 matmul inputs / f32 accumulation)
# ----------------------------------------------------------------------------
def _ffn_ref(x, p):
    h = jnp.einsum("btd,du->btu", _bf16(x), _bf16(p["w1"]),
                   preferred_element_type=jnp.float32) + p["b1"]
    h = jnp.maximum(h, 0.0)
    h = _layer_norm(h, p["nfg"], p["nfb"])
    return jnp.einsum("btu,ud->btd", _bf16(h), _bf16(p["w2"]),
                      preferred_element_type=jnp.float32)


def _fsmn_ref(x, mask, fw, left):
    K, T = fw.shape[0], x.shape[1]
    inp = x * mask
    padded = jnp.pad(inp, ((0, 0), (left, K - 1 - left), (0, 0)))
    acc = jnp.zeros_like(x)
    for k in range(K):
        acc = acc + padded[:, k:k + T, :] * fw[k][None, None, :]
    return (acc + inp) * mask


def _cross_ref(x, mem, mmask, p, H):
    B, T, D = x.shape
    dk = D // H
    q = jnp.einsum("btd,de->bte", _bf16(x), _bf16(p["wq"]),
                   preferred_element_type=jnp.float32) + p["bq"]
    kv = jnp.einsum("bsd,de->bse", _bf16(mem), _bf16(p["wkv"]),
                    preferred_element_type=jnp.float32) + p["bkv"]
    k, v = kv[..., :D], kv[..., D:]
    qh = q.reshape(B, T, H, dk).transpose(0, 2, 1, 3) * dk ** -0.5
    kh = k.reshape(B, -1, H, dk).transpose(0, 2, 1, 3)
    vh = v.reshape(B, -1, H, dk).transpose(0, 2, 1, 3)
    scores = jnp.einsum("bhtd,bhsd->bhts", _bf16(qh), _bf16(kh),
                        preferred_element_type=jnp.float32)
    maskb = (mmask == 0.0)[:, None, :, :]
    scores = jnp.where(maskb, jnp.finfo(jnp.float32).min, scores)
    attn = jax.nn.softmax(scores, axis=-1)
    attn = jnp.where(maskb, 0.0, attn)
    ctx = jnp.einsum("bhts,bhsd->bhtd", _bf16(attn), _bf16(vh),
                     preferred_element_type=jnp.float32)
    ctx = ctx.transpose(0, 2, 1, 3).reshape(B, T, D)
    return jnp.einsum("btd,de->bte", _bf16(ctx), _bf16(p["wo"]),
                      preferred_element_type=jnp.float32) + p["bo"]


def reference_forward(params, hs_pad, hlens, ys_in_pad, ys_in_lens, H, K, sanm_shfit):
    B, Ti, D = hs_pad.shape
    To = ys_in_pad.shape[1]
    tgt_mask = (jnp.arange(To)[None, :] < ys_in_lens[:, None]).astype(jnp.float32)[:, :, None]
    memory_mask = (jnp.arange(Ti)[None, :] < hlens[:, None]).astype(jnp.float32)[:, None, :]
    left1 = (K - 1) // 2 + (sanm_shfit if sanm_shfit > 0 else 0)
    left2 = (K - 1) // 2

    def ffn_fsmn(x, p, left):
        t = _ffn_ref(_layer_norm(x, p["n1g"], p["n1b"]), p)
        t2 = _layer_norm(t, p["n2g"], p["n2b"])
        return x + _fsmn_ref(t2, tgt_mask, p["fw"], left)

    x = ys_in_pad
    for p in params["dec1"]:
        x = ffn_fsmn(x, p, left1)
        x = x + _cross_ref(_layer_norm(x, p["n3g"], p["n3b"]), hs_pad, memory_mask, p, H)
    for p in params["dec2"]:
        x = ffn_fsmn(x, p, left2)
    for p in params["dec3"]:
        x = _ffn_ref(_layer_norm(x, p["n1g"], p["n1b"]), p)
    x = _layer_norm(x, params["after"]["g"], params["after"]["b"])
    logits = jnp.einsum("btd,dv->btv", _bf16(x), _bf16(params["out"]["w"]),
                        preferred_element_type=jnp.float32) + params["out"]["b"]
    olens = jnp.sum(tgt_mask, axis=1)
    return logits, olens


# ----------------------------------------------------------------------------
if __name__ == "__main__":
    B, Ti, To, D, H, U, V, K = 2, 16, 8, 32, 4, 64, 64, 5
    att_layer_num, num_blocks, sanm_shfit = 2, 3, 0   # exercises decoders, decoders2, decoders3

    key = jax.random.PRNGKey(0)
    pkey, k1, k2 = jax.random.split(key, 3)
    params = init_params(pkey, V, D, U, K, att_layer_num, num_blocks)
    prep = prepare_params(params)

    hs_pad = jax.random.normal(k1, (B, Ti, D), jnp.float32)       # encoded memory
    ys_in_pad = jax.random.normal(k2, (B, To, D), jnp.float32)    # CIF acoustic embeddings
    hlens = jnp.array([Ti, 11], jnp.int32)
    ys_in_lens = jnp.array([To, 5], jnp.int32)

    logits, olens = cif_decoder_sanm_forward(
        prep, hs_pad, hlens, ys_in_pad, ys_in_lens,
        attention_heads=H, kernel_size=K, sanm_shfit=sanm_shfit)
    logits = jax.block_until_ready(logits)
    olens = jax.block_until_ready(olens)

    ref_logits, ref_olens = reference_forward(
        params, hs_pad, hlens, ys_in_pad, ys_in_lens, H, K, sanm_shfit)

    assert logits.shape == (B, To, V) and logits.dtype == jnp.float32
    assert olens.shape == (B, 1)
    assert jnp.allclose(olens, ref_olens, atol=1e-6)
    assert jnp.allclose(logits, ref_logits, atol=3e-2, rtol=3e-2)
    print("KERNEL_OK")
</pallas_src>

<mosaic_0001>
module attributes {stable_mosaic.version = 11 : i64} {
  func.func @kernel(%arg0: i32, %arg1: i32, %arg2: memref<2x8x32xf32, #tpu.memory_space<vmem>>, %arg3: memref<2x8x1xf32, #tpu.memory_space<vmem>>, %arg4: memref<2x16x32xbf16, #tpu.memory_space<vmem>>, %arg5: memref<2x1x16xf32, #tpu.memory_space<vmem>>, %arg6: memref<1x1x32xf32, #tpu.memory_space<vmem>>, %arg7: memref<1x1x32xf32, #tpu.memory_space<vmem>>, %arg8: memref<1x32x64xbf16, #tpu.memory_space<vmem>>, %arg9: memref<1x1x64xf32, #tpu.memory_space<vmem>>, %arg10: memref<1x1x64xf32, #tpu.memory_space<vmem>>, %arg11: memref<1x1x64xf32, #tpu.memory_space<vmem>>, %arg12: memref<1x64x32xbf16, #tpu.memory_space<vmem>>, %arg13: memref<1x1x32xf32, #tpu.memory_space<vmem>>, %arg14: memref<1x1x32xf32, #tpu.memory_space<vmem>>, %arg15: memref<1x5x32xf32, #tpu.memory_space<vmem>>, %arg16: memref<1x1x32xf32, #tpu.memory_space<vmem>>, %arg17: memref<1x1x32xf32, #tpu.memory_space<vmem>>, %arg18: memref<1x32x32xbf16, #tpu.memory_space<vmem>>, %arg19: memref<1x1x32xf32, #tpu.memory_space<vmem>>, %arg20: memref<1x32x64xbf16, #tpu.memory_space<vmem>>, %arg21: memref<1x1x64xf32, #tpu.memory_space<vmem>>, %arg22: memref<1x32x32xbf16, #tpu.memory_space<vmem>>, %arg23: memref<1x1x32xf32, #tpu.memory_space<vmem>>, %arg24: memref<2x8x32xf32, #tpu.memory_space<vmem>>, %arg25: memref<2x12x32xf32, #tpu.memory_space<vmem>>) attributes {dimension_semantics = [#tpu.dimension_semantics<parallel>, #tpu.dimension_semantics<arbitrary>], iteration_bounds = array<i64: 1, 2>, scalar_prefetch = 0 : i64, scratch_operands = 1 : i64, tpu.core_type = #tpu.core_type<tc>, window_params = [{transform_indices = @transform_0, window_bounds = array<i64: 2, 8, 32>}, {transform_indices = @transform_1, window_bounds = array<i64: 2, 8, 1>}, {transform_indices = @transform_2, window_bounds = array<i64: 2, 16, 32>}, {transform_indices = @transform_3, window_bounds = array<i64: 2, 1, 16>}, {transform_indices = @transform_4, window_bounds = array<i64: 1, 1, 32>}, {transform_indices = @transform_5, window_bounds = array<i64: 1, 1, 32>}, {transform_indices = @transform_6, window_bounds = array<i64: 1, 32, 64>}, {transform_indices = @transform_7, window_bounds = array<i64: 1, 1, 64>}, {transform_indices = @transform_8, window_bounds = array<i64: 1, 1, 64>}, {transform_indices = @transform_9, window_bounds = array<i64: 1, 1, 64>}, {transform_indices = @transform_10, window_bounds = array<i64: 1, 64, 32>}, {transform_indices = @transform_11, window_bounds = array<i64: 1, 1, 32>}, {transform_indices = @transform_12, window_bounds = array<i64: 1, 1, 32>}, {transform_indices = @transform_13, window_bounds = array<i64: 1, 5, 32>}, {transform_indices = @transform_14, window_bounds = array<i64: 1, 1, 32>}, {transform_indices = @transform_15, window_bounds = array<i64: 1, 1, 32>}, {transform_indices = @transform_16, window_bounds = array<i64: 1, 32, 32>}, {transform_indices = @transform_17, window_bounds = array<i64: 1, 1, 32>}, {transform_indices = @transform_18, window_bounds = array<i64: 1, 32, 64>}, {transform_indices = @transform_19, window_bounds = array<i64: 1, 1, 64>}, {transform_indices = @transform_20, window_bounds = array<i64: 1, 32, 32>}, {transform_indices = @transform_21, window_bounds = array<i64: 1, 1, 32>}, {transform_indices = @transform_22, window_bounds = array<i64: 2, 8, 32>}]} {
    %c0_i32 = arith.constant 0 : i32
    %0 = arith.cmpi eq, %arg1, %c0_i32 : i32
    %1 = arith.extui %0 : i1 to i32
    %c0_i32_0 = arith.constant 0 : i32
    %2 = arith.cmpi ne, %1, %c0_i32_0 : i32
    scf.if %2 {
      %c0_171 = arith.constant 0 : index
      %c0_172 = arith.constant 0 : index
      %c0_173 = arith.constant 0 : index
      %469 = vector.load %arg2[%c0_171, %c0_172, %c0_173] : memref<2x8x32xf32, #tpu.memory_space<vmem>>, vector<2x8x32xf32>
      %c0_174 = arith.constant 0 : index
      %c0_175 = arith.constant 0 : index
      %c0_176 = arith.constant 0 : index
      %470 = vector.load %arg24[%c0_174, %c0_175, %c0_176] : memref<2x8x32xf32, #tpu.memory_space<vmem>>, vector<2x8x32xf32>
      tpu.vector_store %arg24[%c0_174, %c0_175, %c0_176], %469 {strides = array<i32>} : memref<2x8x32xf32, #tpu.memory_space<vmem>>, vector<2x8x32xf32>,
    } else {
    }
    %c0 = arith.constant 0 : index
    %c0_1 = arith.constant 0 : index
    %c0_2 = arith.constant 0 : index
    %3 = vector.load %arg24[%c0, %c0_1, %c0_2] : memref<2x8x32xf32, #tpu.memory_space<vmem>>, vector<2x8x32xf32>
    %c0_3 = arith.constant 0 : index
    %c0_4 = arith.constant 0 : index
    %c0_5 = arith.constant 0 : index
    %4 = vector.load %arg3[%c0_3, %c0_4, %c0_5] : memref<2x8x1xf32, #tpu.memory_space<vmem>>, vector<2x8x1xf32>
    %5 = vector.shape_cast %3 : vector<2x8x32xf32> to vector<16x32xf32>
    %c0_6 = arith.constant 0 : index
    %c0_7 = arith.constant 0 : index
    %c0_8 = arith.constant 0 : index
    %6 = vector.load %arg6[%c0_6, %c0_7, %c0_8] : memref<1x1x32xf32, #tpu.memory_space<vmem>>, vector<1x1x32xf32>
    %7 = vector.shape_cast %6 : vector<1x1x32xf32> to vector<1x32xf32>
    %c0_9 = arith.constant 0 : index
    %c0_10 = arith.constant 0 : index
    %c0_11 = arith.constant 0 : index
    %8 = vector.load %arg7[%c0_9, %c0_10, %c0_11] : memref<1x1x32xf32, #tpu.memory_space<vmem>>, vector<1x1x32xf32>
    %9 = vector.shape_cast %8 : vector<1x1x32xf32> to vector<1x32xf32>
    %c0_12 = arith.constant 0 : index
    %c0_13 = arith.constant 0 : index
    %c0_14 = arith.constant 0 : index
    %10 = vector.load %arg8[%c0_12, %c0_13, %c0_14] : memref<1x32x64xbf16, #tpu.memory_space<vmem>>, vector<1x32x64xbf16>
    %11 = vector.shape_cast %10 : vector<1x32x64xbf16> to vector<32x64xbf16>
    %c0_15 = arith.constant 0 : index
    %c0_16 = arith.constant 0 : index
    %c0_17 = arith.constant 0 : index
    %12 = vector.load %arg9[%c0_15, %c0_16, %c0_17] : memref<1x1x64xf32, #tpu.memory_space<vmem>>, vector<1x1x64xf32>
    %13 = vector.shape_cast %12 : vector<1x1x64xf32> to vector<1x64xf32>
    %c0_18 = arith.constant 0 : index
    %c0_19 = arith.constant 0 : index
    %c0_20 = arith.constant 0 : index
    %14 = vector.load %arg10[%c0_18, %c0_19, %c0_20] : memref<1x1x64xf32, #tpu.memory_space<vmem>>, vector<1x1x64xf32>
    %15 = vector.shape_cast %14 : vector<1x1x64xf32> to vector<1x64xf32>
    %c0_21 = arith.constant 0 : index
    %c0_22 = arith.constant 0 : index
    %c0_23 = arith.constant 0 : index
    %16 = vector.load %arg11[%c0_21, %c0_22, %c0_23] : memref<1x1x64xf32, #tpu.memory_space<vmem>>, vector<1x1x64xf32>
    %17 = vector.shape_cast %16 : vector<1x1x64xf32> to vector<1x64xf32>
    %c0_24 = arith.constant 0 : index
    %c0_25 = arith.constant 0 : index
    %c0_26 = arith.constant 0 : index
    %18 = vector.load %arg12[%c0_24, %c0_25, %c0_26] : memref<1x64x32xbf16, #tpu.memory_space<vmem>>, vector<1x64x32xbf16>
    %19 = vector.shape_cast %18 : vector<1x64x32xbf16> to vector<64x32xbf16>
    %cst = arith.constant dense<0.000000e+00> : vector<16xf32>
    %20 = vector.multi_reduction <add>, %5, %cst [1] : vector<16x32xf32> to vector<16xf32>
    %21 = vector.shape_cast %20 : vector<16xf32> to vector<16x1xf32>
    %cst_27 = arith.constant 3.200000e+01 : f32
    %22 = vector.broadcast %cst_27 : f32 to vector<16x1xf32>
    %23 = arith.divf %21, %22 : vector<16x1xf32>
    %24 = vector.broadcast %23 : vector<16x1xf32> to vector<16x32xf32>
    %25 = arith.subf %5, %24 : vector<16x32xf32>
    %26 = arith.mulf %25, %25 : vector<16x32xf32>
    %cst_28 = arith.constant dense<0.000000e+00> : vector<16xf32>
    %27 = vector.multi_reduction <add>, %26, %cst_28 [1] : vector<16x32xf32> to vector<16xf32>
    %28 = vector.shape_cast %27 : vector<16xf32> to vector<16x1xf32>
    %cst_29 = arith.constant 3.200000e+01 : f32
    %29 = vector.broadcast %cst_29 : f32 to vector<16x1xf32>
    %30 = arith.divf %28, %29 : vector<16x1xf32>
    %31 = vector.broadcast %23 : vector<16x1xf32> to vector<16x32xf32>
    %32 = arith.subf %5, %31 : vector<16x32xf32>
    %cst_30 = arith.constant 9.99999996E-13 : f32
    %33 = vector.broadcast %cst_30 : f32 to vector<16x1xf32>
    %34 = arith.addf %30, %33 : vector<16x1xf32>
    %35 = math.rsqrt %34 : vector<16x1xf32>
    %36 = vector.broadcast %35 : vector<16x1xf32> to vector<16x32xf32>
    %37 = arith.mulf %32, %36 : vector<16x32xf32>
    %38 = vector.broadcast %7 : vector<1x32xf32> to vector<16x32xf32>
    %39 = arith.mulf %37, %38 : vector<16x32xf32>
    %40 = vector.broadcast %9 : vector<1x32xf32> to vector<16x32xf32>
    %41 = arith.addf %39, %40 : vector<16x32xf32>
    %42 = arith.truncf %41 : vector<16x32xf32> to vector<16x32xbf16>
    %cst_31 = arith.constant dense<0.000000e+00> : vector<16x64xf32>
    %43 = tpu.matmul %42, %11, %cst_31 {dimension_numbers = #tpu.dot_dimension_numbers<[1], [0], [0], [1], [0, 0, 1, 1], [], []>} : vector<16x32xbf16>, vector<32x64xbf16>, vector<16x64xf32> -> vector<16x64xf32>
    %44 = vector.broadcast %13 : vector<1x64xf32> to vector<16x64xf32>
    %45 = arith.addf %43, %44 : vector<16x64xf32>
    %cst_32 = arith.constant 0.000000e+00 : f32
    %46 = vector.broadcast %cst_32 : f32 to vector<16x64xf32>
    %47 = arith.maximumf %45, %46 : vector<16x64xf32>
    %cst_33 = arith.constant dense<0.000000e+00> : vector<16xf32>
    %48 = vector.multi_reduction <add>, %47, %cst_33 [1] : vector<16x64xf32> to vector<16xf32>
    %49 = vector.shape_cast %48 : vector<16xf32> to vector<16x1xf32>
    %cst_34 = arith.constant 6.400000e+01 : f32
    %50 = vector.broadcast %cst_34 : f32 to vector<16x1xf32>
    %51 = arith.divf %49, %50 : vector<16x1xf32>
    %52 = vector.broadcast %51 : vector<16x1xf32> to vector<16x64xf32>
    %53 = arith.subf %47, %52 : vector<16x64xf32>
    %54 = arith.mulf %53, %53 : vector<16x64xf32>
    %cst_35 = arith.constant dense<0.000000e+00> : vector<16xf32>
    %55 = vector.multi_reduction <add>, %54, %cst_35 [1] : vector<16x64xf32> to vector<16xf32>
    %56 = vector.shape_cast %55 : vector<16xf32> to vector<16x1xf32>
    %cst_36 = arith.constant 6.400000e+01 : f32
    %57 = vector.broadcast %cst_36 : f32 to vector<16x1xf32>
    %58 = arith.divf %56, %57 : vector<16x1xf32>
    %59 = vector.broadcast %51 : vector<16x1xf32> to vector<16x64xf32>
    %60 = arith.subf %47, %59 : vector<16x64xf32>
    %cst_37 = arith.constant 9.99999996E-13 : f32
    %61 = vector.broadcast %cst_37 : f32 to vector<16x1xf32>
    %62 = arith.addf %58, %61 : vector<16x1xf32>
    %63 = math.rsqrt %62 : vector<16x1xf32>
    %64 = vector.broadcast %63 : vector<16x1xf32> to vector<16x64xf32>
    %65 = arith.mulf %60, %64 : vector<16x64xf32>
    %66 = vector.broadcast %15 : vector<1x64xf32> to vector<16x64xf32>
    %67 = arith.mulf %65, %66 : vector<16x64xf32>
    %68 = vector.broadcast %17 : vector<1x64xf32> to vector<16x64xf32>
    %69 = arith.addf %67, %68 : vector<16x64xf32>
    %70 = arith.truncf %69 : vector<16x64xf32> to vector<16x64xbf16>
    %cst_38 = arith.constant dense<0.000000e+00> : vector<16x32xf32>
    %71 = tpu.matmul %70, %19, %cst_38 {dimension_numbers = #tpu.dot_dimension_numbers<[1], [0], [0], [1], [0, 0, 1, 1], [], []>} : vector<16x64xbf16>, vector<64x32xbf16>, vector<16x32xf32> -> vector<16x32xf32>
    %c0_39 = arith.constant 0 : index
    %c0_40 = arith.constant 0 : index
    %c0_41 = arith.constant 0 : index
    %72 = vector.load %arg13[%c0_39, %c0_40, %c0_41] : memref<1x1x32xf32, #tpu.memory_space<vmem>>, vector<1x1x32xf32>
    %73 = vector.shape_cast %72 : vector<1x1x32xf32> to vector<1x32xf32>
    %c0_42 = arith.constant 0 : index
    %c0_43 = arith.constant 0 : index
    %c0_44 = arith.constant 0 : index
    %74 = vector.load %arg14[%c0_42, %c0_43, %c0_44] : memref<1x1x32xf32, #tpu.memory_space<vmem>>, vector<1x1x32xf32>
    %75 = vector.shape_cast %74 : vector<1x1x32xf32> to vector<1x32xf32>
    %cst_45 = arith.constant dense<0.000000e+00> : vector<16xf32>
    %76 = vector.multi_reduction <add>, %71, %cst_45 [1] : vector<16x32xf32> to vector<16xf32>
    %77 = vector.shape_cast %76 : vector<16xf32> to vector<16x1xf32>
    %cst_46 = arith.constant 3.200000e+01 : f32
    %78 = vector.broadcast %cst_46 : f32 to vector<16x1xf32>
    %79 = arith.divf %77, %78 : vector<16x1xf32>
    %80 = vector.broadcast %79 : vector<16x1xf32> to vector<16x32xf32>
    %81 = arith.subf %71, %80 : vector<16x32xf32>
    %82 = arith.mulf %81, %81 : vector<16x32xf32>
    %cst_47 = arith.constant dense<0.000000e+00> : vector<16xf32>
    %83 = vector.multi_reduction <add>, %82, %cst_47 [1] : vector<16x32xf32> to vector<16xf32>
    %84 = vector.shape_cast %83 : vector<16xf32> to vector<16x1xf32>
    %cst_48 = arith.constant 3.200000e+01 : f32
    %85 = vector.broadcast %cst_48 : f32 to vector<16x1xf32>
    %86 = arith.divf %84, %85 : vector<16x1xf32>
    %87 = vector.broadcast %79 : vector<16x1xf32> to vector<16x32xf32>
    %88 = arith.subf %71, %87 : vector<16x32xf32>
    %cst_49 = arith.constant 9.99999996E-13 : f32
    %89 = vector.broadcast %cst_49 : f32 to vector<16x1xf32>
    %90 = arith.addf %86, %89 : vector<16x1xf32>
    %91 = math.rsqrt %90 : vector<16x1xf32>
    %92 = vector.broadcast %91 : vector<16x1xf32> to vector<16x32xf32>
    %93 = arith.mulf %88, %92 : vector<16x32xf32>
    %94 = vector.broadcast %73 : vector<1x32xf32> to vector<16x32xf32>
    %95 = arith.mulf %93, %94 : vector<16x32xf32>
    %96 = vector.broadcast %75 : vector<1x32xf32> to vector<16x32xf32>
    %97 = arith.addf %95, %96 : vector<16x32xf32>
    %98 = vector.shape_cast %97 : vector<16x32xf32> to vector<2x8x32xf32>
    %99 = vector.broadcast %4 : vector<2x8x1xf32> to vector<2x8x32xf32>
    %100 = arith.mulf %98, %99 : vector<2x8x32xf32>
    %cst_50 = arith.constant 0.000000e+00 : f32
    %101 = vector.broadcast %cst_50 : f32 to vector<2x2x32xf32>
    %c0_51 = arith.constant 0 : index
    %c0_52 = arith.constant 0 : index
    %c0_53 = arith.constant 0 : index
    %102 = vector.load %arg25[%c0_51, %c0_52, %c0_53] : memref<2x12x32xf32, #tpu.memory_space<vmem>>, vector<2x2x32xf32>
    tpu.vector_store %arg25[%c0_51, %c0_52, %c0_53], %101 {strides = array<i32>} : memref<2x12x32xf32, #tpu.memory_space<vmem>>, vector<2x2x32xf32>,
    %cst_54 = arith.constant 0.000000e+00 : f32
    %103 = vector.broadcast %cst_54 : f32 to vector<2x2x32xf32>
    %c0_55 = arith.constant 0 : index
    %c10 = arith.constant 10 : index
    %c0_56 = arith.constant 0 : index
    %104 = vector.load %arg25[%c0_55, %c10, %c0_56] : memref<2x12x32xf32, #tpu.memory_space<vmem>>, vector<2x2x32xf32>
    tpu.vector_store %arg25[%c0_55, %c10, %c0_56], %103 {strides = array<i32>} : memref<2x12x32xf32, #tpu.memory_space<vmem>>, vector<2x2x32xf32>,
    %c0_57 = arith.constant 0 : index
    %c2 = arith.constant 2 : index
    %c0_58 = arith.constant 0 : index
    %105 = vector.load %arg25[%c0_57, %c2, %c0_58] : memref<2x12x32xf32, #tpu.memory_space<vmem>>, vector<2x8x32xf32>
    tpu.vector_store %arg25[%c0_57, %c2, %c0_58], %100 {strides = array<i32>} : memref<2x12x32xf32, #tpu.memory_space<vmem>>, vector<2x8x32xf32>,
    %c0_59 = arith.constant 0 : index
    %c0_60 = arith.constant 0 : index
    %c0_61 = arith.constant 0 : index
    %106 = vector.load %arg25[%c0_59, %c0_60, %c0_61] : memref<2x12x32xf32, #tpu.memory_space<vmem>>, vector<2x12x32xf32>
    %c0_62 = arith.constant 0 : index
    %c0_63 = arith.constant 0 : index
    %c0_64 = arith.constant 0 : index
    %107 = vector.load %arg15[%c0_62, %c0_63, %c0_64] : memref<1x5x32xf32, #tpu.memory_space<vmem>>, vector<1x5x32xf32>
    %108 = vector.shape_cast %107 : vector<1x5x32xf32> to vector<5x32xf32>
    %109 = vector.extract_strided_slice %106 {offsets = [0, 0, 0], sizes = [2, 8, 32], strides = [1, 1, 1]} : vector<2x12x32xf32> to vector<2x8x32xf32>
    %110 = vector.extract_strided_slice %108 {offsets = [0, 0], sizes = [1, 32], strides = [1, 1]} : vector<5x32xf32> to vector<1x32xf32>
    %111 = vector.shape_cast %110 : vector<1x32xf32> to vector<1x1x32xf32>
    %112 = vector.broadcast %111 : vector<1x1x32xf32> to vector<2x8x32xf32>
    %113 = arith.mulf %109, %112 : vector<2x8x32xf32>
    %114 = arith.addf %100, %113 : vector<2x8x32xf32>
    %115 = vector.extract_strided_slice %106 {offsets = [0, 1, 0], sizes = [2, 8, 32], strides = [1, 1, 1]} : vector<2x12x32xf32> to vector<2x8x32xf32>
    %116 = vector.extract_strided_slice %108 {offsets = [1, 0], sizes = [1, 32], strides = [1, 1]} : vector<5x32xf32> to vector<1x32xf32>
    %117 = vector.shape_cast %116 : vector<1x32xf32> to vector<1x1x32xf32>
    %118 = vector.broadcast %117 : vector<1x1x32xf32> to vector<2x8x32xf32>
    %119 = arith.mulf %115, %118 : vector<2x8x32xf32>
    %120 = arith.addf %114, %119 : vector<2x8x32xf32>
    %121 = vector.extract_strided_slice %106 {offsets = [0, 2, 0], sizes = [2, 8, 32], strides = [1, 1, 1]} : vector<2x12x32xf32> to vector<2x8x32xf32>
    %122 = vector.extract_strided_slice %108 {offsets = [2, 0], sizes = [1, 32], strides = [1, 1]} : vector<5x32xf32> to vector<1x32xf32>
    %123 = vector.shape_cast %122 : vector<1x32xf32> to vector<1x1x32xf32>
    %124 = vector.broadcast %123 : vector<1x1x32xf32> to vector<2x8x32xf32>
    %125 = arith.mulf %121, %124 : vector<2x8x32xf32>
    %126 = arith.addf %120, %125 : vector<2x8x32xf32>
    %127 = vector.extract_strided_slice %106 {offsets = [0, 3, 0], sizes = [2, 8, 32], strides = [1, 1, 1]} : vector<2x12x32xf32> to vector<2x8x32xf32>
    %128 = vector.extract_strided_slice %108 {offsets = [3, 0], sizes = [1, 32], strides = [1, 1]} : vector<5x32xf32> to vector<1x32xf32>
    %129 = vector.shape_cast %128 : vector<1x32xf32> to vector<1x1x32xf32>
    %130 = vector.broadcast %129 : vector<1x1x32xf32> to vector<2x8x32xf32>
    %131 = arith.mulf %127, %130 : vector<2x8x32xf32>
    %132 = arith.addf %126, %131 : vector<2x8x32xf32>
    %133 = vector.extract_strided_slice %106 {offsets = [0, 4, 0], sizes = [2, 8, 32], strides = [1, 1, 1]} : vector<2x12x32xf32> to vector<2x8x32xf32>
    %134 = vector.extract_strided_slice %108 {offsets = [4, 0], sizes = [1, 32], strides = [1, 1]} : vector<5x32xf32> to vector<1x32xf32>
    %135 = vector.shape_cast %134 : vector<1x32xf32> to vector<1x1x32xf32>
    %136 = vector.broadcast %135 : vector<1x1x32xf32> to vector<2x8x32xf32>
    %137 = arith.mulf %133, %136 : vector<2x8x32xf32>
    %138 = arith.addf %132, %137 : vector<2x8x32xf32>
    %139 = vector.broadcast %4 : vector<2x8x1xf32> to vector<2x8x32xf32>
    %140 = arith.mulf %138, %139 : vector<2x8x32xf32>
    %141 = arith.addf %3, %140 : vector<2x8x32xf32>
    %142 = vector.shape_cast %141 : vector<2x8x32xf32> to vector<16x32xf32>
    %c0_65 = arith.constant 0 : index
    %c0_66 = arith.constant 0 : index
    %c0_67 = arith.constant 0 : index
    %143 = vector.load %arg16[%c0_65, %c0_66, %c0_67] : memref<1x1x32xf32, #tpu.memory_space<vmem>>, vector<1x1x32xf32>
    %144 = vector.shape_cast %143 : vector<1x1x32xf32> to vector<1x32xf32>
    %c0_68 = arith.constant 0 : index
    %c0_69 = arith.constant 0 : index
    %c0_70 = arith.constant 0 : index
    %145 = vector.load %arg17[%c0_68, %c0_69, %c0_70] : memref<1x1x32xf32, #tpu.memory_space<vmem>>, vector<1x1x32xf32>
    %146 = vector.shape_cast %145 : vector<1x1x32xf32> to vector<1x32xf32>
    %cst_71 = arith.constant dense<0.000000e+00> : vector<16xf32>
    %147 = vector.multi_reduction <add>, %142, %cst_71 [1] : vector<16x32xf32> to vector<16xf32>
    %148 = vector.shape_cast %147 : vector<16xf32> to vector<16x1xf32>
    %cst_72 = arith.constant 3.200000e+01 : f32
    %149 = vector.broadcast %cst_72 : f32 to vector<16x1xf32>
    %150 = arith.divf %148, %149 : vector<16x1xf32>
    %151 = vector.broadcast %150 : vector<16x1xf32> to vector<16x32xf32>
    %152 = arith.subf %142, %151 : vector<16x32xf32>
    %153 = arith.mulf %152, %152 : vector<16x32xf32>
    %cst_73 = arith.constant dense<0.000000e+00> : vector<16xf32>
    %154 = vector.multi_reduction <add>, %153, %cst_73 [1] : vector<16x32xf32> to vector<16xf32>
    %155 = vector.shape_cast %154 : vector<16xf32> to vector<16x1xf32>
    %cst_74 = arith.constant 3.200000e+01 : f32
    %156 = vector.broadcast %cst_74 : f32 to vector<16x1xf32>
    %157 = arith.divf %155, %156 : vector<16x1xf32>
    %158 = vector.broadcast %150 : vector<16x1xf32> to vector<16x32xf32>
    %159 = arith.subf %142, %158 : vector<16x32xf32>
    %cst_75 = arith.constant 9.99999996E-13 : f32
    %160 = vector.broadcast %cst_75 : f32 to vector<16x1xf32>
    %161 = arith.addf %157, %160 : vector<16x1xf32>
    %162 = math.rsqrt %161 : vector<16x1xf32>
    %163 = vector.broadcast %162 : vector<16x1xf32> to vector<16x32xf32>
    %164 = arith.mulf %159, %163 : vector<16x32xf32>
    %165 = vector.broadcast %144 : vector<1x32xf32> to vector<16x32xf32>
    %166 = arith.mulf %164, %165 : vector<16x32xf32>
    %167 = vector.broadcast %146 : vector<1x32xf32> to vector<16x32xf32>
    %168 = arith.addf %166, %167 : vector<16x32xf32>
    %169 = arith.truncf %168 : vector<16x32xf32> to vector<16x32xbf16>
    %c0_76 = arith.constant 0 : index
    %c0_77 = arith.constant 0 : index
    %c0_78 = arith.constant 0 : index
    %170 = vector.load %arg18[%c0_76, %c0_77, %c0_78] : memref<1x32x32xbf16, #tpu.memory_space<vmem>>, vector<1x32x32xbf16>
    %171 = vector.shape_cast %170 : vector<1x32x32xbf16> to vector<32x32xbf16>
    %cst_79 = arith.constant dense<0.000000e+00> : vector<16x32xf32>
    %172 = tpu.matmul %169, %171, %cst_79 {dimension_numbers = #tpu.dot_dimension_numbers<[1], [0], [0], [1], [0, 0, 1, 1], [], []>} : vector<16x32xbf16>, vector<32x32xbf16>, vector<16x32xf32> -> vector<16x32xf32>
    %c0_80 = arith.constant 0 : index
    %c0_81 = arith.constant 0 : index
    %c0_82 = arith.constant 0 : index
    %173 = vector.load %arg19[%c0_80, %c0_81, %c0_82] : memref<1x1x32xf32, #tpu.memory_space<vmem>>, vector<1x1x32xf32>
    %174 = vector.shape_cast %173 : vector<1x1x32xf32> to vector<1x32xf32>
    %175 = vector.broadcast %174 : vector<1x32xf32> to vector<16x32xf32>
    %176 = arith.addf %172, %175 : vector<16x32xf32>
    %cst_83 = arith.constant 0.353553385 : f32
    %177 = vector.broadcast %cst_83 : f32 to vector<16x32xf32>
    %178 = arith.mulf %176, %177 : vector<16x32xf32>
    %179 = vector.shape_cast %178 : vector<16x32xf32> to vector<2x8x32xf32>
    %c0_84 = arith.constant 0 : index
    %c0_85 = arith.constant 0 : index
    %c0_86 = arith.constant 0 : index
    %180 = vector.load %arg4[%c0_84, %c0_85, %c0_86] : memref<2x16x32xbf16, #tpu.memory_space<vmem>>, vector<2x16x32xbf16>
    %181 = vector.shape_cast %180 : vector<2x16x32xbf16> to vector<32x32xbf16>
    %c0_87 = arith.constant 0 : index
    %c0_88 = arith.constant 0 : index
    %c0_89 = arith.constant 0 : index
    %182 = vector.load %arg20[%c0_87, %c0_88, %c0_89] : memref<1x32x64xbf16, #tpu.memory_space<vmem>>, vector<1x32x64xbf16>
    %183 = vector.shape_cast %182 : vector<1x32x64xbf16> to vector<32x64xbf16>
    %cst_90 = arith.constant dense<0.000000e+00> : vector<32x64xf32>
    %184 = tpu.matmul %181, %183, %cst_90 {dimension_numbers = #tpu.dot_dimension_numbers<[1], [0], [0], [1], [0, 0, 1, 1], [], []>} : vector<32x32xbf16>, vector<32x64xbf16>, vector<32x64xf32> -> vector<32x64xf32>
    %c0_91 = arith.constant 0 : index
    %c0_92 = arith.constant 0 : index
    %c0_93 = arith.constant 0 : index
    %185 = vector.load %arg21[%c0_91, %c0_92, %c0_93] : memref<1x1x64xf32, #tpu.memory_space<vmem>>, vector<1x1x64xf32>
    %186 = vector.shape_cast %185 : vector<1x1x64xf32> to vector<1x64xf32>
    %187 = vector.broadcast %186 : vector<1x64xf32> to vector<32x64xf32>
    %188 = arith.addf %184, %187 : vector<32x64xf32>
    %189 = arith.truncf %188 : vector<32x64xf32> to vector<32x64xbf16>
    %190 = vector.shape_cast %189 : vector<32x64xbf16> to vector<2x16x64xbf16>
    %c0_94 = arith.constant 0 : index
    %c0_95 = arith.constant 0 : index
    %c0_96 = arith.constant 0 : index
    %191 = vector.load %arg22[%c0_94, %c0_95, %c0_96] : memref<1x32x32xbf16, #tpu.memory_space<vmem>>, vector<1x32x32xbf16>
    %192 = vector.shape_cast %191 : vector<1x32x32xbf16> to vector<32x32xbf16>
    %c0_97 = arith.constant 0 : index
    %c0_98 = arith.constant 0 : index
    %c0_99 = arith.constant 0 : index
    %193 = vector.load %arg23[%c0_97, %c0_98, %c0_99] : memref<1x1x32xf32, #tpu.memory_space<vmem>>, vector<1x1x32xf32>
    %194 = vector.shape_cast %193 : vector<1x1x32xf32> to vector<1x32xf32>
    %c0_100 = arith.constant 0 : index
    %c0_101 = arith.constant 0 : index
    %c0_102 = arith.constant 0 : index
    %195 = vector.load %arg5[%c0_100, %c0_101, %c0_102] : memref<2x1x16xf32, #tpu.memory_space<vmem>>, vector<1x1x16xf32>
    %196 = vector.shape_cast %195 : vector<1x1x16xf32> to vector<1x16xf32>
    %cst_103 = arith.constant 0.000000e+00 : f32
    %197 = vector.broadcast %cst_103 : f32 to vector<1x16xf32>
    %198 = arith.cmpf oeq, %196, %197 : vector<1x16xf32>
    %199 = vector.extract_strided_slice %190 {offsets = [0, 0, 0], sizes = [1, 16, 32], strides = [1, 1, 1]} : vector<2x16x64xbf16> to vector<1x16x32xbf16>
    %200 = vector.shape_cast %199 : vector<1x16x32xbf16> to vector<16x32xbf16>
    %201 = vector.extract_strided_slice %190 {offsets = [0, 0, 32], sizes = [1, 16, 32], strides = [1, 1, 1]} : vector<2x16x64xbf16> to vector<1x16x32xbf16>
    %202 = vector.shape_cast %201 : vector<1x16x32xbf16> to vector<16x32xbf16>
    %cst_104 = arith.constant 0.000000e+00 : f32
    %203 = vector.broadcast %cst_104 : f32 to vector<8x32xf32>
    %204 = vector.broadcast %194 : vector<1x32xf32> to vector<8x32xf32>
    %205 = arith.addf %203, %204 : vector<8x32xf32>
    %206 = vector.extract_strided_slice %179 {offsets = [0, 0, 0], sizes = [1, 8, 8], strides = [1, 1, 1]} : vector<2x8x32xf32> to vector<1x8x8xf32>
    %207 = vector.shape_cast %206 : vector<1x8x8xf32> to vector<8x8xf32>
    %208 = arith.truncf %207 : vector<8x8xf32> to vector<8x8xbf16>
    %209 = vector.extract_strided_slice %200 {offsets = [0, 0], sizes = [16, 8], strides = [1, 1]} : vector<16x32xbf16> to vector<16x8xbf16>
    %cst_105 = arith.constant dense<0.000000e+00> : vector<8x16xf32>
    %210 = tpu.matmul %208, %209, %cst_105 {dimension_numbers = #tpu.dot_dimension_numbers<[1], [1], [0], [0], [0, 0, 1, 0], [], []>} : vector<8x8xbf16>, vector<16x8xbf16>, vector<8x16xf32> -> vector<8x16xf32>
    %cst_106 = arith.constant -3.40282347E+38 : f32
    %211 = vector.shape_cast %198 : vector<1x16xi1> to vector<1x16xi1>
    %212 = vector.broadcast %211 : vector<1x16xi1> to vector<8x16xi1>
    %213 = vector.broadcast %cst_106 : f32 to vector<8x16xf32>
    %214 = arith.select %212, %213, %210 : vector<8x16xi1>, vector<8x16xf32>
    %cst_107 = arith.constant dense<0xFF800000> : vector<8xf32>
    %215 = vector.multi_reduction <maximumf>, %214, %cst_107 [1] : vector<8x16xf32> to vector<8xf32>
    %216 = vector.shape_cast %215 : vector<8xf32> to vector<8x1xf32>
    %217 = vector.broadcast %216 : vector<8x1xf32> to vector<8x16xf32>
    %218 = arith.subf %214, %217 : vector<8x16xf32>
    %219 = math.exp %218 : vector<8x16xf32>
    %cst_108 = arith.constant dense<0.000000e+00> : vector<8xf32>
    %220 = vector.multi_reduction <add>, %219, %cst_108 [1] : vector<8x16xf32> to vector<8xf32>
    %221 = vector.shape_cast %220 : vector<8xf32> to vector<8x1xf32>
    %222 = tpu.reciprocal %221 {approx = true} : vector<8x1xf32> -> vector<8x1xf32>
    %223 = vector.broadcast %222 : vector<8x1xf32> to vector<8x16xf32>
    %224 = arith.mulf %219, %223 : vector<8x16xf32>
    %cst_109 = arith.constant 0.000000e+00 : f32
    %225 = vector.shape_cast %198 : vector<1x16xi1> to vector<1x16xi1>
    %226 = vector.broadcast %225 : vector<1x16xi1> to vector<8x16xi1>
    %227 = vector.broadcast %cst_109 : f32 to vector<8x16xf32>
    %228 = arith.select %226, %227, %224 : vector<8x16xi1>, vector<8x16xf32>
    %229 = arith.truncf %228 : vector<8x16xf32> to vector<8x16xbf16>
    %230 = vector.extract_strided_slice %202 {offsets = [0, 0], sizes = [16, 8], strides = [1, 1]} : vector<16x32xbf16> to vector<16x8xbf16>
    %cst_110 = arith.constant dense<0.000000e+00> : vector<8x8xf32>
    %231 = tpu.matmul %229, %230, %cst_110 {dimension_numbers = #tpu.dot_dimension_numbers<[1], [0], [0], [1], [0, 0, 1, 1], [], []>} : vector<8x16xbf16>, vector<16x8xbf16>, vector<8x8xf32> -> vector<8x8xf32>
    %232 = arith.truncf %231 : vector<8x8xf32> to vector<8x8xbf16>
    %233 = vector.extract_strided_slice %192 {offsets = [0, 0], sizes = [8, 32], strides = [1, 1]} : vector<32x32xbf16> to vector<8x32xbf16>
    %cst_111 = arith.constant dense<0.000000e+00> : vector<8x32xf32>
    %234 = tpu.matmul %232, %233, %cst_111 {dimension_numbers = #tpu.dot_dimension_numbers<[1], [0], [0], [1], [0, 0, 1, 1], [], []>} : vector<8x8xbf16>, vector<8x32xbf16>, vector<8x32xf32> -> vector<8x32xf32>
    %235 = arith.addf %205, %234 : vector<8x32xf32>
    %236 = vector.extract_strided_slice %179 {offsets = [0, 0, 8], sizes = [1, 8, 8], strides = [1, 1, 1]} : vector<2x8x32xf32> to vector<1x8x8xf32>
    %237 = vector.shape_cast %236 : vector<1x8x8xf32> to vector<8x8xf32>
    %238 = arith.truncf %237 : vector<8x8xf32> to vector<8x8xbf16>
    %239 = vector.extract_strided_slice %200 {offsets = [0, 8], sizes = [16, 8], strides = [1, 1]} : vector<16x32xbf16> to vector<16x8xbf16>
    %cst_112 = arith.constant dense<0.000000e+00> : vector<8x16xf32>
    %240 = tpu.matmul %238, %239, %cst_112 {dimension_numbers = #tpu.dot_dimension_numbers<[1], [1], [0], [0], [0, 0, 1, 0], [], []>} : vector<8x8xbf16>, vector<16x8xbf16>, vector<8x16xf32> -> vector<8x16xf32>
    %cst_113 = arith.constant -3.40282347E+38 : f32
    %241 = vector.shape_cast %198 : vector<1x16xi1> to vector<1x16xi1>
    %242 = vector.broadcast %241 : vector<1x16xi1> to vector<8x16xi1>
    %243 = vector.broadcast %cst_113 : f32 to vector<8x16xf32>
    %244 = arith.select %242, %243, %240 : vector<8x16xi1>, vector<8x16xf32>
    %cst_114 = arith.constant dense<0xFF800000> : vector<8xf32>
    %245 = vector.multi_reduction <maximumf>, %244, %cst_114 [1] : vector<8x16xf32> to vector<8xf32>
    %246 = vector.shape_cast %245 : vector<8xf32> to vector<8x1xf32>
    %247 = vector.broadcast %246 : vector<8x1xf32> to vector<8x16xf32>
    %248 = arith.subf %244, %247 : vector<8x16xf32>
    %249 = math.exp %248 : vector<8x16xf32>
    %cst_115 = arith.constant dense<0.000000e+00> : vector<8xf32>
    %250 = vector.multi_reduction <add>, %249, %cst_115 [1] : vector<8x16xf32> to vector<8xf32>
    %251 = vector.shape_cast %250 : vector<8xf32> to vector<8x1xf32>
    %252 = tpu.reciprocal %251 {approx = true} : vector<8x1xf32> -> vector<8x1xf32>
    %253 = vector.broadcast %252 : vector<8x1xf32> to vector<8x16xf32>
    %254 = arith.mulf %249, %253 : vector<8x16xf32>
    %cst_116 = arith.constant 0.000000e+00 : f32
    %255 = vector.shape_cast %198 : vector<1x16xi1> to vector<1x16xi1>
    %256 = vector.broadcast %255 : vector<1x16xi1> to vector<8x16xi1>
    %257 = vector.broadcast %cst_116 : f32 to vector<8x16xf32>
    %258 = arith.select %256, %257, %254 : vector<8x16xi1>, vector<8x16xf32>
    %259 = arith.truncf %258 : vector<8x16xf32> to vector<8x16xbf16>
    %260 = vector.extract_strided_slice %202 {offsets = [0, 8], sizes = [16, 8], strides = [1, 1]} : vector<16x32xbf16> to vector<16x8xbf16>
    %cst_117 = arith.constant dense<0.000000e+00> : vector<8x8xf32>
    %261 = tpu.matmul %259, %260, %cst_117 {dimension_numbers = #tpu.dot_dimension_numbers<[1], [0], [0], [1], [0, 0, 1, 1], [], []>} : vector<8x16xbf16>, vector<16x8xbf16>, vector<8x8xf32> -> vector<8x8xf32>
    %262 = arith.truncf %261 : vector<8x8xf32> to vector<8x8xbf16>
    %263 = vector.extract_strided_slice %192 {offsets = [8, 0], sizes = [8, 32], strides = [1, 1]} : vector<32x32xbf16> to vector<8x32xbf16>
    %cst_118 = arith.constant dense<0.000000e+00> : vector<8x32xf32>
    %264 = tpu.matmul %262, %263, %cst_118 {dimension_numbers = #tpu.dot_dimension_numbers<[1], [0], [0], [1], [0, 0, 1, 1], [], []>} : vector<8x8xbf16>, vector<8x32xbf16>, vector<8x32xf32> -> vector<8x32xf32>
    %265 = arith.addf %235, %264 : vector<8x32xf32>
    %266 = vector.extract_strided_slice %179 {offsets = [0, 0, 16], sizes = [1, 8, 8], strides = [1, 1, 1]} : vector<2x8x32xf32> to vector<1x8x8xf32>
    %267 = vector.shape_cast %266 : vector<1x8x8xf32> to vector<8x8xf32>
    %268 = arith.truncf %267 : vector<8x8xf32> to vector<8x8xbf16>
    %269 = vector.extract_strided_slice %200 {offsets = [0, 16], sizes = [16, 8], strides = [1, 1]} : vector<16x32xbf16> to vector<16x8xbf16>
    %cst_119 = arith.constant dense<0.000000e+00> : vector<8x16xf32>
    %270 = tpu.matmul %268, %269, %cst_119 {dimension_numbers = #tpu.dot_dimension_numbers<[1], [1], [0], [0], [0, 0, 1, 0], [], []>} : vector<8x8xbf16>, vector<16x8xbf16>, vector<8x16xf32> -> vector<8x16xf32>
    %cst_120 = arith.constant -3.40282347E+38 : f32
    %271 = vector.shape_cast %198 : vector<1x16xi1> to vector<1x16xi1>
    %272 = vector.broadcast %271 : vector<1x16xi1> to vector<8x16xi1>
    %273 = vector.broadcast %cst_120 : f32 to vector<8x16xf32>
    %274 = arith.select %272, %273, %270 : vector<8x16xi1>, vector<8x16xf32>
    %cst_121 = arith.constant dense<0xFF800000> : vector<8xf32>
    %275 = vector.multi_reduction <maximumf>, %274, %cst_121 [1] : vector<8x16xf32> to vector<8xf32>
    %276 = vector.shape_cast %275 : vector<8xf32> to vector<8x1xf32>
    %277 = vector.broadcast %276 : vector<8x1xf32> to vector<8x16xf32>
    %278 = arith.subf %274, %277 : vector<8x16xf32>
    %279 = math.exp %278 : vector<8x16xf32>
    %cst_122 = arith.constant dense<0.000000e+00> : vector<8xf32>
    %280 = vector.multi_reduction <add>, %279, %cst_122 [1] : vector<8x16xf32> to vector<8xf32>
    %281 = vector.shape_cast %280 : vector<8xf32> to vector<8x1xf32>
    %282 = tpu.reciprocal %281 {approx = true} : vector<8x1xf32> -> vector<8x1xf32>
    %283 = vector.broadcast %282 : vector<8x1xf32> to vector<8x16xf32>
    %284 = arith.mulf %279, %283 : vector<8x16xf32>
    %cst_123 = arith.constant 0.000000e+00 : f32
    %285 = vector.shape_cast %198 : vector<1x16xi1> to vector<1x16xi1>
    %286 = vector.broadcast %285 : vector<1x16xi1> to vector<8x16xi1>
    %287 = vector.broadcast %cst_123 : f32 to vector<8x16xf32>
    %288 = arith.select %286, %287, %284 : vector<8x16xi1>, vector<8x16xf32>
    %289 = arith.truncf %288 : vector<8x16xf32> to vector<8x16xbf16>
    %290 = vector.extract_strided_slice %202 {offsets = [0, 16], sizes = [16, 8], strides = [1, 1]} : vector<16x32xbf16> to vector<16x8xbf16>
    %cst_124 = arith.constant dense<0.000000e+00> : vector<8x8xf32>
    %291 = tpu.matmul %289, %290, %cst_124 {dimension_numbers = #tpu.dot_dimension_numbers<[1], [0], [0], [1], [0, 0, 1, 1], [], []>} : vector<8x16xbf16>, vector<16x8xbf16>, vector<8x8xf32> -> vector<8x8xf32>
    %292 = arith.truncf %291 : vector<8x8xf32> to vector<8x8xbf16>
    %293 = vector.extract_strided_slice %192 {offsets = [16, 0], sizes = [8, 32], strides = [1, 1]} : vector<32x32xbf16> to vector<8x32xbf16>
    %cst_125 = arith.constant dense<0.000000e+00> : vector<8x32xf32>
    %294 = tpu.matmul %292, %293, %cst_125 {dimension_numbers = #tpu.dot_dimension_numbers<[1], [0], [0], [1], [0, 0, 1, 1], [], []>} : vector<8x8xbf16>, vector<8x32xbf16>, vector<8x32xf32> -> vector<8x32xf32>
    %295 = arith.addf %265, %294 : vector<8x32xf32>
    %296 = vector.extract_strided_slice %179 {offsets = [0, 0, 24], sizes = [1, 8, 8], strides = [1, 1, 1]} : vector<2x8x32xf32> to vector<1x8x8xf32>
    %297 = vector.shape_cast %296 : vector<1x8x8xf32> to vector<8x8xf32>
    %298 = arith.truncf %297 : vector<8x8xf32> to vector<8x8xbf16>
    %299 = vector.extract_strided_slice %200 {offsets = [0, 24], sizes = [16, 8], strides = [1, 1]} : vector<16x32xbf16> to vector<16x8xbf16>
    %cst_126 = arith.constant dense<0.000000e+00> : vector<8x16xf32>
    %300 = tpu.matmul %298, %299, %cst_126 {dimension_numbers = #tpu.dot_dimension_numbers<[1], [1], [0], [0], [0, 0, 1, 0], [], []>} : vector<8x8xbf16>, vector<16x8xbf16>, vector<8x16xf32> -> vector<8x16xf32>
    %cst_127 = arith.constant -3.40282347E+38 : f32
    %301 = vector.shape_cast %198 : vector<1x16xi1> to vector<1x16xi1>
    %302 = vector.broadcast %301 : vector<1x16xi1> to vector<8x16xi1>
    %303 = vector.broadcast %cst_127 : f32 to vector<8x16xf32>
    %304 = arith.select %302, %303, %300 : vector<8x16xi1>, vector<8x16xf32>
    %cst_128 = arith.constant dense<0xFF800000> : vector<8xf32>
    %305 = vector.multi_reduction <maximumf>, %304, %cst_128 [1] : vector<8x16xf32> to vector<8xf32>
    %306 = vector.shape_cast %305 : vector<8xf32> to vector<8x1xf32>
    %307 = vector.broadcast %306 : vector<8x1xf32> to vector<8x16xf32>
    %308 = arith.subf %304, %307 : vector<8x16xf32>
    %309 = math.exp %308 : vector<8x16xf32>
    %cst_129 = arith.constant dense<0.000000e+00> : vector<8xf32>
    %310 = vector.multi_reduction <add>, %309, %cst_129 [1] : vector<8x16xf32> to vector<8xf32>
    %311 = vector.shape_cast %310 : vector<8xf32> to vector<8x1xf32>
    %312 = tpu.reciprocal %311 {approx = true} : vector<8x1xf32> -> vector<8x1xf32>
    %313 = vector.broadcast %312 : vector<8x1xf32> to vector<8x16xf32>
    %314 = arith.mulf %309, %313 : vector<8x16xf32>
    %cst_130 = arith.constant 0.000000e+00 : f32
    %315 = vector.shape_cast %198 : vector<1x16xi1> to vector<1x16xi1>
    %316 = vector.broadcast %315 : vector<1x16xi1> to vector<8x16xi1>
    %317 = vector.broadcast %cst_130 : f32 to vector<8x16xf32>
    %318 = arith.select %316, %317, %314 : vector<8x16xi1>, vector<8x16xf32>
    %319 = arith.truncf %318 : vector<8x16xf32> to vector<8x16xbf16>
    %320 = vector.extract_strided_slice %202 {offsets = [0, 24], sizes = [16, 8], strides = [1, 1]} : vector<16x32xbf16> to vector<16x8xbf16>
    %cst_131 = arith.constant dense<0.000000e+00> : vector<8x8xf32>
    %321 = tpu.matmul %319, %320, %cst_131 {dimension_numbers = #tpu.dot_dimension_numbers<[1], [0], [0], [1], [0, 0, 1, 1], [], []>} : vector<8x16xbf16>, vector<16x8xbf16>, vector<8x8xf32> -> vector<8x8xf32>
    %322 = arith.truncf %321 : vector<8x8xf32> to vector<8x8xbf16>
    %323 = vector.extract_strided_slice %192 {offsets = [24, 0], sizes = [8, 32], strides = [1, 1]} : vector<32x32xbf16> to vector<8x32xbf16>
    %cst_132 = arith.constant dense<0.000000e+00> : vector<8x32xf32>
    %324 = tpu.matmul %322, %323, %cst_132 {dimension_numbers = #tpu.dot_dimension_numbers<[1], [0], [0], [1], [0, 0, 1, 1], [], []>} : vector<8x8xbf16>, vector<8x32xbf16>, vector<8x32xf32> -> vector<8x32xf32>
    %325 = arith.addf %295, %324 : vector<8x32xf32>
    %326 = vector.extract_strided_slice %141 {offsets = [0, 0, 0], sizes = [1, 8, 32], strides = [1, 1, 1]} : vector<2x8x32xf32> to vector<1x8x32xf32>
    %327 = vector.shape_cast %326 : vector<1x8x32xf32> to vector<8x32xf32>
    %328 = arith.addf %327, %325 : vector<8x32xf32>
    %c0_133 = arith.constant 0 : index
    %c0_134 = arith.constant 0 : index
    %c0_135 = arith.constant 0 : index
    %329 = vector.load %arg24[%c0_133, %c0_134, %c0_135] : memref<2x8x32xf32, #tpu.memory_space<vmem>>, vector<1x8x32xf32>
    %330 = vector.shape_cast %329 : vector<1x8x32xf32> to vector<8x32xf32>
    %331 = vector.shape_cast %328 : vector<8x32xf32> to vector<1x8x32xf32>
    tpu.vector_store %arg24[%c0_133, %c0_134, %c0_135], %331 {strides = array<i32>} : memref<2x8x32xf32, #tpu.memory_space<vmem>>, vector<1x8x32xf32>,
    %c1 = arith.constant 1 : index
    %c0_136 = arith.constant 0 : index
    %c0_137 = arith.constant 0 : index
    %332 = vector.load %arg5[%c1, %c0_136, %c0_137] : memref<2x1x16xf32, #tpu.memory_space<vmem>>, vector<1x1x16xf32>
    %333 = vector.shape_cast %332 : vector<1x1x16xf32> to vector<1x16xf32>
    %cst_138 = arith.constant 0.000000e+00 : f32
    %334 = vector.broadcast %cst_138 : f32 to vector<1x16xf32>
    %335 = arith.cmpf oeq, %333, %334 : vector<1x16xf32>
    %336 = vector.extract_strided_slice %190 {offsets = [1, 0, 0], sizes = [1, 16, 32], strides = [1, 1, 1]} : vector<2x16x64xbf16> to vector<1x16x32xbf16>
    %337 = vector.shape_cast %336 : vector<1x16x32xbf16> to vector<16x32xbf16>
    %338 = vector.extract_strided_slice %190 {offsets = [1, 0, 32], sizes = [1, 16, 32], strides = [1, 1, 1]} : vector<2x16x64xbf16> to vector<1x16x32xbf16>
    %339 = vector.shape_cast %338 : vector<1x16x32xbf16> to vector<16x32xbf16>
    %cst_139 = arith.constant 0.000000e+00 : f32
    %340 = vector.broadcast %cst_139 : f32 to vector<8x32xf32>
    %341 = vector.broadcast %194 : vector<1x32xf32> to vector<8x32xf32>
    %342 = arith.addf %340, %341 : vector<8x32xf32>
    %343 = vector.extract_strided_slice %179 {offsets = [1, 0, 0], sizes = [1, 8, 8], strides = [1, 1, 1]} : vector<2x8x32xf32> to vector<1x8x8xf32>
    %344 = vector.shape_cast %343 : vector<1x8x8xf32> to vector<8x8xf32>
    %345 = arith.truncf %344 : vector<8x8xf32> to vector<8x8xbf16>
    %346 = vector.extract_strided_slice %337 {offsets = [0, 0], sizes = [16, 8], strides = [1, 1]} : vector<16x32xbf16> to vector<16x8xbf16>
    %cst_140 = arith.constant dense<0.000000e+00> : vector<8x16xf32>
    %347 = tpu.matmul %345, %346, %cst_140 {dimension_numbers = #tpu.dot_dimension_numbers<[1], [1], [0], [0], [0, 0, 1, 0], [], []>} : vector<8x8xbf16>, vector<16x8xbf16>, vector<8x16xf32> -> vector<8x16xf32>
    %cst_141 = arith.constant -3.40282347E+38 : f32
    %348 = vector.shape_cast %335 : vector<1x16xi1> to vector<1x16xi1>
    %349 = vector.broadcast %348 : vector<1x16xi1> to vector<8x16xi1>
    %350 = vector.broadcast %cst_141 : f32 to vector<8x16xf32>
    %351 = arith.select %349, %350, %347 : vector<8x16xi1>, vector<8x16xf32>
    %cst_142 = arith.constant dense<0xFF800000> : vector<8xf32>
    %352 = vector.multi_reduction <maximumf>, %351, %cst_142 [1] : vector<8x16xf32> to vector<8xf32>
    %353 = vector.shape_cast %352 : vector<8xf32> to vector<8x1xf32>
    %354 = vector.broadcast %353 : vector<8x1xf32> to vector<8x16xf32>
    %355 = arith.subf %351, %354 : vector<8x16xf32>
    %356 = math.exp %355 : vector<8x16xf32>
    %cst_143 = arith.constant dense<0.000000e+00> : vector<8xf32>
    %357 = vector.multi_reduction <add>, %356, %cst_143 [1] : vector<8x16xf32> to vector<8xf32>
    %358 = vector.shape_cast %357 : vector<8xf32> to vector<8x1xf32>
    %359 = tpu.reciprocal %358 {approx = true} : vector<8x1xf32> -> vector<8x1xf32>
    %360 = vector.broadcast %359 : vector<8x1xf32> to vector<8x16xf32>
    %361 = arith.mulf %356, %360 : vector<8x16xf32>
    %cst_144 = arith.constant 0.000000e+00 : f32
    %362 = vector.shape_cast %335 : vector<1x16xi1> to vector<1x16xi1>
    %363 = vector.broadcast %362 : vector<1x16xi1> to vector<8x16xi1>
    %364 = vector.broadcast %cst_144 : f32 to vector<8x16xf32>
    %365 = arith.select %363, %364, %361 : vector<8x16xi1>, vector<8x16xf32>
    %366 = arith.truncf %365 : vector<8x16xf32> to vector<8x16xbf16>
    %367 = vector.extract_strided_slice %339 {offsets = [0, 0], sizes = [16, 8], strides = [1, 1]} : vector<16x32xbf16> to vector<16x8xbf16>
    %cst_145 = arith.constant dense<0.000000e+00> : vector<8x8xf32>
    %368 = tpu.matmul %366, %367, %cst_145 {dimension_numbers = #tpu.dot_dimension_numbers<[1], [0], [0], [1], [0, 0, 1, 1], [], []>} : vector<8x16xbf16>, vector<16x8xbf16>, vector<8x8xf32> -> vector<8x8xf32>
    %369 = arith.truncf %368 : vector<8x8xf32> to vector<8x8xbf16>
    %370 = vector.extract_strided_slice %192 {offsets = [0, 0], sizes = [8, 32], strides = [1, 1]} : vector<32x32xbf16> to vector<8x32xbf16>
    %cst_146 = arith.constant dense<0.000000e+00> : vector<8x32xf32>
    %371 = tpu.matmul %369, %370, %cst_146 {dimension_numbers = #tpu.dot_dimension_numbers<[1], [0], [0], [1], [0, 0, 1, 1], [], []>} : vector<8x8xbf16>, vector<8x32xbf16>, vector<8x32xf32> -> vector<8x32xf32>
    %372 = arith.addf %342, %371 : vector<8x32xf32>
    %373 = vector.extract_strided_slice %179 {offsets = [1, 0, 8], sizes = [1, 8, 8], strides = [1, 1, 1]} : vector<2x8x32xf32> to vector<1x8x8xf32>
    %374 = vector.shape_cast %373 : vector<1x8x8xf32> to vector<8x8xf32>
    %375 = arith.truncf %374 : vector<8x8xf32> to vector<8x8xbf16>
    %376 = vector.extract_strided_slice %337 {offsets = [0, 8], sizes = [16, 8], strides = [1, 1]} : vector<16x32xbf16> to vector<16x8xbf16>
    %cst_147 = arith.constant dense<0.000000e+00> : vector<8x16xf32>
    %377 = tpu.matmul %375, %376, %cst_147 {dimension_numbers = #tpu.dot_dimension_numbers<[1], [1], [0], [0], [0, 0, 1, 0], [], []>} : vector<8x8xbf16>, vector<16x8xbf16>, vector<8x16xf32> -> vector<8x16xf32>
    %cst_148 = arith.constant -3.40282347E+38 : f32
    %378 = vector.shape_cast %335 : vector<1x16xi1> to vector<1x16xi1>
    %379 = vector.broadcast %378 : vector<1x16xi1> to vector<8x16xi1>
    %380 = vector.broadcast %cst_148 : f32 to vector<8x16xf32>
    %381 = arith.select %379, %380, %377 : vector<8x16xi1>, vector<8x16xf32>
    %cst_149 = arith.constant dense<0xFF800000> : vector<8xf32>
    %382 = vector.multi_reduction <maximumf>, %381, %cst_149 [1] : vector<8x16xf32> to vector<8xf32>
    %383 = vector.shape_cast %382 : vector<8xf32> to vector<8x1xf32>
    %384 = vector.broadcast %383 : vector<8x1xf32> to vector<8x16xf32>
    %385 = arith.subf %381, %384 : vector<8x16xf32>
    %386 = math.exp %385 : vector<8x16xf32>
    %cst_150 = arith.constant dense<0.000000e+00> : vector<8xf32>
    %387 = vector.multi_reduction <add>, %386, %cst_150 [1] : vector<8x16xf32> to vector<8xf32>
    %388 = vector.shape_cast %387 : vector<8xf32> to vector<8x1xf32>
    %389 = tpu.reciprocal %388 {approx = true} : vector<8x1xf32> -> vector<8x1xf32>
    %390 = vector.broadcast %389 : vector<8x1xf32> to vector<8x16xf32>
    %391 = arith.mulf %386, %390 : vector<8x16xf32>
    %cst_151 = arith.constant 0.000000e+00 : f32
    %392 = vector.shape_cast %335 : vector<1x16xi1> to vector<1x16xi1>
    %393 = vector.broadcast %392 : vector<1x16xi1> to vector<8x16xi1>
    %394 = vector.broadcast %cst_151 : f32 to vector<8x16xf32>
    %395 = arith.select %393, %394, %391 : vector<8x16xi1>, vector<8x16xf32>
    %396 = arith.truncf %395 : vector<8x16xf32> to vector<8x16xbf16>
    %397 = vector.extract_strided_slice %339 {offsets = [0, 8], sizes = [16, 8], strides = [1, 1]} : vector<16x32xbf16> to vector<16x8xbf16>
    %cst_152 = arith.constant dense<0.000000e+00> : vector<8x8xf32>
    %398 = tpu.matmul %396, %397, %cst_152 {dimension_numbers = #tpu.dot_dimension_numbers<[1], [0], [0], [1], [0, 0, 1, 1], [], []>} : vector<8x16xbf16>, vector<16x8xbf16>, vector<8x8xf32> -> vector<8x8xf32>
    %399 = arith.truncf %398 : vector<8x8xf32> to vector<8x8xbf16>
    %400 = vector.extract_strided_slice %192 {offsets = [8, 0], sizes = [8, 32], strides = [1, 1]} : vector<32x32xbf16> to vector<8x32xbf16>
    %cst_153 = arith.constant dense<0.000000e+00> : vector<8x32xf32>
    %401 = tpu.matmul %399, %400, %cst_153 {dimension_numbers = #tpu.dot_dimension_numbers<[1], [0], [0], [1], [0, 0, 1, 1], [], []>} : vector<8x8xbf16>, vector<8x32xbf16>, vector<8x32xf32> -> vector<8x32xf32>
    %402 = arith.addf %372, %401 : vector<8x32xf32>
    %403 = vector.extract_strided_slice %179 {offsets = [1, 0, 16], sizes = [1, 8, 8], strides = [1, 1, 1]} : vector<2x8x32xf32> to vector<1x8x8xf32>
    %404 = vector.shape_cast %403 : vector<1x8x8xf32> to vector<8x8xf32>
    %405 = arith.truncf %404 : vector<8x8xf32> to vector<8x8xbf16>
    %406 = vector.extract_strided_slice %337 {offsets = [0, 16], sizes = [16, 8], strides = [1, 1]} : vector<16x32xbf16> to vector<16x8xbf16>
    %cst_154 = arith.constant dense<0.000000e+00> : vector<8x16xf32>
    %407 = tpu.matmul %405, %406, %cst_154 {dimension_numbers = #tpu.dot_dimension_numbers<[1], [1], [0], [0], [0, 0, 1, 0], [], []>} : vector<8x8xbf16>, vector<16x8xbf16>, vector<8x16xf32> -> vector<8x16xf32>
    %cst_155 = arith.constant -3.40282347E+38 : f32
    %408 = vector.shape_cast %335 : vector<1x16xi1> to vector<1x16xi1>
    %409 = vector.broadcast %408 : vector<1x16xi1> to vector<8x16xi1>
    %410 = vector.broadcast %cst_155 : f32 to vector<8x16xf32>
    %411 = arith.select %409, %410, %407 : vector<8x16xi1>, vector<8x16xf32>
    %cst_156 = arith.constant dense<0xFF800000> : vector<8xf32>
    %412 = vector.multi_reduction <maximumf>, %411, %cst_156 [1] : vector<8x16xf32> to vector<8xf32>
    %413 = vector.shape_cast %412 : vector<8xf32> to vector<8x1xf32>
    %414 = vector.broadcast %413 : vector<8x1xf32> to vector<8x16xf32>
    %415 = arith.subf %411, %414 : vector<8x16xf32>
    %416 = math.exp %415 : vector<8x16xf32>
    %cst_157 = arith.constant dense<0.000000e+00> : vector<8xf32>
    %417 = vector.multi_reduction <add>, %416, %cst_157 [1] : vector<8x16xf32> to vector<8xf32>
    %418 = vector.shape_cast %417 : vector<8xf32> to vector<8x1xf32>
    %419 = tpu.reciprocal %418 {approx = true} : vector<8x1xf32> -> vector<8x1xf32>
    %420 = vector.broadcast %419 : vector<8x1xf32> to vector<8x16xf32>
    %421 = arith.mulf %416, %420 : vector<8x16xf32>
    %cst_158 = arith.constant 0.000000e+00 : f32
    %422 = vector.shape_cast %335 : vector<1x16xi1> to vector<1x16xi1>
    %423 = vector.broadcast %422 : vector<1x16xi1> to vector<8x16xi1>
    %424 = vector.broadcast %cst_158 : f32 to vector<8x16xf32>
    %425 = arith.select %423, %424, %421 : vector<8x16xi1>, vector<8x16xf32>
    %426 = arith.truncf %425 : vector<8x16xf32> to vector<8x16xbf16>
    %427 = vector.extract_strided_slice %339 {offsets = [0, 16], sizes = [16, 8], strides = [1, 1]} : vector<16x32xbf16> to vector<16x8xbf16>
    %cst_159 = arith.constant dense<0.000000e+00> : vector<8x8xf32>
    %428 = tpu.matmul %426, %427, %cst_159 {dimension_numbers = #tpu.dot_dimension_numbers<[1], [0], [0], [1], [0, 0, 1, 1], [], []>} : vector<8x16xbf16>, vector<16x8xbf16>, vector<8x8xf32> -> vector<8x8xf32>
    %429 = arith.truncf %428 : vector<8x8xf32> to vector<8x8xbf16>
    %430 = vector.extract_strided_slice %192 {offsets = [16, 0], sizes = [8, 32], strides = [1, 1]} : vector<32x32xbf16> to vector<8x32xbf16>
    %cst_160 = arith.constant dense<0.000000e+00> : vector<8x32xf32>
    %431 = tpu.matmul %429, %430, %cst_160 {dimension_numbers = #tpu.dot_dimension_numbers<[1], [0], [0], [1], [0, 0, 1, 1], [], []>} : vector<8x8xbf16>, vector<8x32xbf16>, vector<8x32xf32> -> vector<8x32xf32>
    %432 = arith.addf %402, %431 : vector<8x32xf32>
    %433 = vector.extract_strided_slice %179 {offsets = [1, 0, 24], sizes = [1, 8, 8], strides = [1, 1, 1]} : vector<2x8x32xf32> to vector<1x8x8xf32>
    %434 = vector.shape_cast %433 : vector<1x8x8xf32> to vector<8x8xf32>
    %435 = arith.truncf %434 : vector<8x8xf32> to vector<8x8xbf16>
    %436 = vector.extract_strided_slice %337 {offsets = [0, 24], sizes = [16, 8], strides = [1, 1]} : vector<16x32xbf16> to vector<16x8xbf16>
    %cst_161 = arith.constant dense<0.000000e+00> : vector<8x16xf32>
    %437 = tpu.matmul %435, %436, %cst_161 {dimension_numbers = #tpu.dot_dimension_numbers<[1], [1], [0], [0], [0, 0, 1, 0], [], []>} : vector<8x8xbf16>, vector<16x8xbf16>, vector<8x16xf32> -> vector<8x16xf32>
    %cst_162 = arith.constant -3.40282347E+38 : f32
    %438 = vector.shape_cast %335 : vector<1x16xi1> to vector<1x16xi1>
    %439 = vector.broadcast %438 : vector<1x16xi1> to vector<8x16xi1>
    %440 = vector.broadcast %cst_162 : f32 to vector<8x16xf32>
    %441 = arith.select %439, %440, %437 : vector<8x16xi1>, vector<8x16xf32>
    %cst_163 = arith.constant dense<0xFF800000> : vector<8xf32>
    %442 = vector.multi_reduction <maximumf>, %441, %cst_163 [1] : vector<8x16xf32> to vector<8xf32>
    %443 = vector.shape_cast %442 : vector<8xf32> to vector<8x1xf32>
    %444 = vector.broadcast %443 : vector<8x1xf32> to vector<8x16xf32>
    %445 = arith.subf %441, %444 : vector<8x16xf32>
    %446 = math.exp %445 : vector<8x16xf32>
    %cst_164 = arith.constant dense<0.000000e+00> : vector<8xf32>
    %447 = vector.multi_reduction <add>, %446, %cst_164 [1] : vector<8x16xf32> to vector<8xf32>
    %448 = vector.shape_cast %447 : vector<8xf32> to vector<8x1xf32>
    %449 = tpu.reciprocal %448 {approx = true} : vector<8x1xf32> -> vector<8x1xf32>
    %450 = vector.broadcast %449 : vector<8x1xf32> to vector<8x16xf32>
    %451 = arith.mulf %446, %450 : vector<8x16xf32>
    %cst_165 = arith.constant 0.000000e+00 : f32
    %452 = vector.shape_cast %335 : vector<1x16xi1> to vector<1x16xi1>
    %453 = vector.broadcast %452 : vector<1x16xi1> to vector<8x16xi1>
    %454 = vector.broadcast %cst_165 : f32 to vector<8x16xf32>
    %455 = arith.select %453, %454, %451 : vector<8x16xi1>, vector<8x16xf32>
    %456 = arith.truncf %455 : vector<8x16xf32> to vector<8x16xbf16>
    %457 = vector.extract_strided_slice %339 {offsets = [0, 24], sizes = [16, 8], strides = [1, 1]} : vector<16x32xbf16> to vector<16x8xbf16>
    %cst_166 = arith.constant dense<0.000000e+00> : vector<8x8xf32>
    %458 = tpu.matmul %456, %457, %cst_166 {dimension_numbers = #tpu.dot_dimension_numbers<[1], [0], [0], [1], [0, 0, 1, 1], [], []>} : vector<8x16xbf16>, vector<16x8xbf16>, vector<8x8xf32> -> vector<8x8xf32>
    %459 = arith.truncf %458 : vector<8x8xf32> to vector<8x8xbf16>
    %460 = vector.extract_strided_slice %192 {offsets = [24, 0], sizes = [8, 32], strides = [1, 1]} : vector<32x32xbf16> to vector<8x32xbf16>
    %cst_167 = arith.constant dense<0.000000e+00> : vector<8x32xf32>
    %461 = tpu.matmul %459, %460, %cst_167 {dimension_numbers = #tpu.dot_dimension_numbers<[1], [0], [0], [1], [0, 0, 1, 1], [], []>} : vector<8x8xbf16>, vector<8x32xbf16>, vector<8x32xf32> -> vector<8x32xf32>
    %462 = arith.addf %432, %461 : vector<8x32xf32>
    %463 = vector.extract_strided_slice %141 {offsets = [1, 0, 0], sizes = [1, 8, 32], strides = [1, 1, 1]} : vector<2x8x32xf32> to vector<1x8x32xf32>
    %464 = vector.shape_cast %463 : vector<1x8x32xf32> to vector<8x32xf32>
    %465 = arith.addf %464, %462 : vector<8x32xf32>
    %c1_168 = arith.constant 1 : index
    %c0_169 = arith.constant 0 : index
    %c0_170 = arith.constant 0 : index
    %466 = vector.load %arg24[%c1_168, %c0_169, %c0_170] : memref<2x8x32xf32, #tpu.memory_space<vmem>>, vector<1x8x32xf32>
    %467 = vector.shape_cast %466 : vector<1x8x32xf32> to vector<8x32xf32>
    %468 = vector.shape_cast %465 : vector<8x32xf32> to vector<1x8x32xf32>
    tpu.vector_store %arg24[%c1_168, %c0_169, %c0_170], %468 {strides = array<i32>} : memref<2x8x32xf32, #tpu.memory_space<vmem>>, vector<1x8x32xf32>,
    return
  }
  func.func @transform_0(%arg0: i32, %arg1: i32) -> (i32, i32, i32) {
    %c0_i32 = arith.constant 0 : i32
    %c0_i32_0 = arith.constant 0 : i32
    %c0_i32_1 = arith.constant 0 : i32
    return %arg0, %c0_i32, %c0_i32_0 : i32, i32, i32
  }
  func.func @transform_1(%arg0: i32, %arg1: i32) -> (i32, i32, i32) {
    %c0_i32 = arith.constant 0 : i32
    %c0_i32_0 = arith.constant 0 : i32
    %c0_i32_1 = arith.constant 0 : i32
    return %arg0, %c0_i32, %c0_i32_0 : i32, i32, i32
  }
  func.func @transform_2(%arg0: i32, %arg1: i32) -> (i32, i32, i32) {
    %c0_i32 = arith.constant 0 : i32
    %c0_i32_0 = arith.constant 0 : i32
    %c0_i32_1 = arith.constant 0 : i32
    return %arg0, %c0_i32, %c0_i32_0 : i32, i32, i32
  }
  func.func @transform_3(%arg0: i32, %arg1: i32) -> (i32, i32, i32) {
    %c0_i32 = arith.constant 0 : i32
    %c0_i32_0 = arith.constant 0 : i32
    %c0_i32_1 = arith.constant 0 : i32
    return %arg0, %c0_i32, %c0_i32_0 : i32, i32, i32
  }
  func.func @transform_4(%arg0: i32, %arg1: i32) -> (i32, i32, i32) {
    %c0_i32 = arith.constant 0 : i32
    %c0_i32_0 = arith.constant 0 : i32
    %c0_i32_1 = arith.constant 0 : i32
    return %arg1, %c0_i32, %c0_i32_0 : i32, i32, i32
  }
  func.func @transform_5(%arg0: i32, %arg1: i32) -> (i32, i32, i32) {
    %c0_i32 = arith.constant 0 : i32
    %c0_i32_0 = arith.constant 0 : i32
    %c0_i32_1 = arith.constant 0 : i32
    return %arg1, %c0_i32, %c0_i32_0 : i32, i32, i32
  }
  func.func @transform_6(%arg0: i32, %arg1: i32) -> (i32, i32, i32) {
    %c0_i32 = arith.constant 0 : i32
    %c0_i32_0 = arith.constant 0 : i32
    %c0_i32_1 = arith.constant 0 : i32
    return %arg1, %c0_i32, %c0_i32_0 : i32, i32, i32
  }
  func.func @transform_7(%arg0: i32, %arg1: i32) -> (i32, i32, i32) {
    %c0_i32 = arith.constant 0 : i32
    %c0_i32_0 = arith.constant 0 : i32
    %c0_i32_1 = arith.constant 0 : i32
    return %arg1, %c0_i32, %c0_i32_0 : i32, i32, i32
  }
  func.func @transform_8(%arg0: i32, %arg1: i32) -> (i32, i32, i32) {
    %c0_i32 = arith.constant 0 : i32
    %c0_i32_0 = arith.constant 0 : i32
    %c0_i32_1 = arith.constant 0 : i32
    return %arg1, %c0_i32, %c0_i32_0 : i32, i32, i32
  }
  func.func @transform_9(%arg0: i32, %arg1: i32) -> (i32, i32, i32) {
    %c0_i32 = arith.constant 0 : i32
    %c0_i32_0 = arith.constant 0 : i32
    %c0_i32_1 = arith.constant 0 : i32
    return %arg1, %c0_i32, %c0_i32_0 : i32, i32, i32
  }
  func.func @transform_10(%arg0: i32, %arg1: i32) -> (i32, i32, i32) {
    %c0_i32 = arith.constant 0 : i32
    %c0_i32_0 = arith.constant 0 : i32
    %c0_i32_1 = arith.constant 0 : i32
    return %arg1, %c0_i32, %c0_i32_0 : i32, i32, i32
  }
  func.func @transform_11(%arg0: i32, %arg1: i32) -> (i32, i32, i32) {
    %c0_i32 = arith.constant 0 : i32
    %c0_i32_0 = arith.constant 0 : i32
    %c0_i32_1 = arith.constant 0 : i32
    return %arg1, %c0_i32, %c0_i32_0 : i32, i32, i32
  }
  func.func @transform_12(%arg0: i32, %arg1: i32) -> (i32, i32, i32) {
    %c0_i32 = arith.constant 0 : i32
    %c0_i32_0 = arith.constant 0 : i32
    %c0_i32_1 = arith.constant 0 : i32
    return %arg1, %c0_i32, %c0_i32_0 : i32, i32, i32
  }
  func.func @transform_13(%arg0: i32, %arg1: i32) -> (i32, i32, i32) {
    %c0_i32 = arith.constant 0 : i32
    %c0_i32_0 = arith.constant 0 : i32
    %c0_i32_1 = arith.constant 0 : i32
    return %arg1, %c0_i32, %c0_i32_0 : i32, i32, i32
  }
  func.func @transform_14(%arg0: i32, %arg1: i32) -> (i32, i32, i32) {
    %c0_i32 = arith.constant 0 : i32
    %c0_i32_0 = arith.constant 0 : i32
    %c0_i32_1 = arith.constant 0 : i32
    return %arg1, %c0_i32, %c0_i32_0 : i32, i32, i32
  }
  func.func @transform_15(%arg0: i32, %arg1: i32) -> (i32, i32, i32) {
    %c0_i32 = arith.constant 0 : i32
    %c0_i32_0 = arith.constant 0 : i32
    %c0_i32_1 = arith.constant 0 : i32
    return %arg1, %c0_i32, %c0_i32_0 : i32, i32, i32
  }
  func.func @transform_16(%arg0: i32, %arg1: i32) -> (i32, i32, i32) {
    %c0_i32 = arith.constant 0 : i32
    %c0_i32_0 = arith.constant 0 : i32
    %c0_i32_1 = arith.constant 0 : i32
    return %arg1, %c0_i32, %c0_i32_0 : i32, i32, i32
  }
  func.func @transform_17(%arg0: i32, %arg1: i32) -> (i32, i32, i32) {
    %c0_i32 = arith.constant 0 : i32
    %c0_i32_0 = arith.constant 0 : i32
    %c0_i32_1 = arith.constant 0 : i32
    return %arg1, %c0_i32, %c0_i32_0 : i32, i32, i32
  }
  func.func @transform_18(%arg0: i32, %arg1: i32) -> (i32, i32, i32) {
    %c0_i32 = arith.constant 0 : i32
    %c0_i32_0 = arith.constant 0 : i32
    %c0_i32_1 = arith.constant 0 : i32
    return %arg1, %c0_i32, %c0_i32_0 : i32, i32, i32
  }
  func.func @transform_19(%arg0: i32, %arg1: i32) -> (i32, i32, i32) {
    %c0_i32 = arith.constant 0 : i32
    %c0_i32_0 = arith.constant 0 : i32
    %c0_i32_1 = arith.constant 0 : i32
    return %arg1, %c0_i32, %c0_i32_0 : i32, i32, i32
  }
  func.func @transform_20(%arg0: i32, %arg1: i32) -> (i32, i32, i32) {
    %c0_i32 = arith.constant 0 : i32
    %c0_i32_0 = arith.constant 0 : i32
    %c0_i32_1 = arith.constant 0 : i32
    return %arg1, %c0_i32, %c0_i32_0 : i32, i32, i32
  }
  func.func @transform_21(%arg0: i32, %arg1: i32) -> (i32, i32, i32) {
    %c0_i32 = arith.constant 0 : i32
    %c0_i32_0 = arith.constant 0 : i32
    %c0_i32_1 = arith.constant 0 : i32
    return %arg1, %c0_i32, %c0_i32_0 : i32, i32, i32
  }
  func.func @transform_22(%arg0: i32, %arg1: i32) -> (i32, i32, i32) {
    %c0_i32 = arith.constant 0 : i32
    %c0_i32_0 = arith.constant 0 : i32
    %c0_i32_1 = arith.constant 0 : i32
    return %arg0, %c0_i32, %c0_i32_0 : i32, i32, i32
  }
}

</mosaic_0001>

<llo_original>
// kernel: tpu_custom_call.1
$region0: #{tpu_custom_call.1}
  #allocation0 [shape = 'u32[]', space=smem, size = 0x4, offset = 0x4, fixed_abs, tag = 'smem constant byte address 0x4 - core index']
  #allocation1 [shape = 'u32[144,128]{1,0:T(1,128)}', space=vmem, size = 0x12000, scoped, tag = 'internal scratch']
  #allocation2 [shape = 'f32[2,12,32]{2,1,0:T(8,128)}', space=vmem, size = 0x4000, scoped, tag = 'scratch operand']
  %s0 = inlined_call_operand.hbm [shape: f32[2,8,32], index: 0, kind: input, shape index: {}]
  %s1 = inlined_call_operand.vmem [shape: f32[2,8,1], index: 1, kind: input, shape index: {}]
  %s2 = inlined_call_operand.hbm [shape: bf16[2,16,32], index: 2, kind: input, shape index: {}]
  %s3 = inlined_call_operand.hbm [shape: f32[2,1,16], index: 3, kind: input, shape index: {}]
  %s4 = inlined_call_operand.hbm [shape: f32[2,1,32], index: 4, kind: input, shape index: {}]
  %s5 = inlined_call_operand.hbm [shape: f32[2,1,32], index: 5, kind: input, shape index: {}]
  %s6 = inlined_call_operand.vmem [shape: bf16[2,32,64], index: 6, kind: input, shape index: {}]
  %s7 = inlined_call_operand.hbm [shape: f32[2,1,64], index: 7, kind: input, shape index: {}]
  %s8 = inlined_call_operand.hbm [shape: f32[2,1,64], index: 8, kind: input, shape index: {}]
  %s9 = inlined_call_operand.hbm [shape: f32[2,1,64], index: 9, kind: input, shape index: {}]
  %s10 = inlined_call_operand.vmem [shape: bf16[2,64,32], index: 10, kind: input, shape index: {}]
  %s11 = inlined_call_operand.hbm [shape: f32[2,1,32], index: 11, kind: input, shape index: {}]
  %s12 = inlined_call_operand.hbm [shape: f32[2,1,32], index: 12, kind: input, shape index: {}]
  %s13 = inlined_call_operand.vmem [shape: f32[2,5,32], index: 13, kind: input, shape index: {}]
  %s14 = inlined_call_operand.vmem [shape: f32[2,1,32], index: 14, kind: input, shape index: {}]
  %s15 = inlined_call_operand.vmem [shape: f32[2,1,32], index: 15, kind: input, shape index: {}]
  %s16 = inlined_call_operand.vmem [shape: bf16[2,32,32], index: 16, kind: input, shape index: {}]
  %s17 = inlined_call_operand.vmem [shape: f32[2,1,32], index: 17, kind: input, shape index: {}]
  %s18 = inlined_call_operand.vmem [shape: bf16[2,32,64], index: 18, kind: input, shape index: {}]
  %s19 = inlined_call_operand.vmem [shape: f32[2,1,64], index: 19, kind: input, shape index: {}]
  %s20 = inlined_call_operand.vmem [shape: bf16[2,32,32], index: 20, kind: input, shape index: {}]
  %s21 = inlined_call_operand.vmem [shape: f32[2,1,32], index: 21, kind: input, shape index: {}]
  %s22 = inlined_call_operand.hbm [shape: f32[2,8,32], index: 22, kind: output, shape index: {}]
  %s23 = sld [smem:[#allocation0]]
  $region165: #{tpu_custom_call.1} parent=0
    _
  %s25 = ssub.s32 1, %s23
  %s26 = scalar_select 0, %s25, %s23
  $region1: #{tpu_custom_call.1} parent=0
    #allocation3 [shape = 'u8[8192]{0}', space=vmem, size = 0x2000, scoped, tag = 'input window, operand 0, single buffered']
    #allocation4 [shape = 's32[2]{0}', space=sflag, size = 0x8, scoped, tag = 'scoped memory for tpu_custom_call.1']
    #allocation5 [shape = 's32[2]{0}', space=sflag, size = 0x8, scoped, tag = 'scoped memory for tpu_custom_call.1']
    #allocation6 [shape = 'u8[8192]{0}', space=vmem, size = 0x2000, scoped, tag = 'input window, operand 2, single buffered']
    #allocation7 [shape = 's32[1]{0}', space=sflag, size = 0x4, scoped, tag = 'scoped memory for tpu_custom_call.1']
    #allocation8 [shape = 'u8[1024]{0}', space=vmem, size = 0x400, scoped, tag = 'input window, operand 3, single buffered']
    #allocation9 [shape = 'u8[1024]{0}', space=vmem, size = 0x400, scoped, tag = 'input window, operand 4']
    #allocation10 [shape = 's32[2]{0}', space=sflag, size = 0x8, scoped, tag = 'scoped memory for tpu_custom_call.1']
    #allocation11 [shape = 'u8[1024]{0}', space=vmem, size = 0x400, scoped, tag = 'input window, operand 5']
    #allocation12 [shape = 'u8[1024]{0}', space=vmem, size = 0x400, scoped, tag = 'input window, operand 7']
    #allocation13 [shape = 's32[2]{0}', space=sflag, size = 0x8, scoped, tag = 'scoped memory for tpu_custom_call.1']
    #allocation14 [shape = 'u8[1024]{0}', space=vmem, size = 0x400, scoped, tag = 'input window, operand 8']
    #allocation15 [shape = 'u8[1024]{0}', space=vmem, size = 0x400, scoped, tag = 'input window, operand 9']
    #allocation16 [shape = 's32[2]{0}', space=sflag, size = 0x8, scoped, tag = 'scoped memory for tpu_custom_call.1']
    #allocation17 [shape = 'u8[1024]{0}', space=vmem, size = 0x400, scoped, tag = 'input window, operand 11']
    #allocation18 [shape = 'u8[1024]{0}', space=vmem, size = 0x400, scoped, tag = 'input window, operand 12']
    #allocation19 [shape = 's32[2]{0}', space=sflag, size = 0x8, scoped, tag = 'scoped memory for tpu_custom_call.1']
    #allocation20 [shape = 'u8[8192]{0}', space=vmem, size = 0x2000, scoped, tag = 'output window, operand 0, single buffered']
    %27 = vsyncpa [#allocation4], 0
    %28 = vsyncpa [#allocation7], 0
    %29 = vsyncpa [#allocation10], 0
    %s30 = scalar_lea.sflag [#allocation10], 1
    %31 = vsyncpa %s30, 0
    %32 = vsyncpa [#allocation13], 0
    %s33 = scalar_lea.sflag [#allocation13], 1
    %34 = vsyncpa %s33, 0
    %35 = vsyncpa [#allocation16], 0
    %s36 = scalar_lea.sflag [#allocation16], 1
    %37 = vsyncpa %s36, 0
    %38 = vsyncpa [#allocation19], 0
    %s39 = scalar_lea.sflag [#allocation19], 1
    %40 = vsyncpa %s39, 0
    %41 = vsyncpa [#allocation5], 0
    loop: start=0, step=1, limit=4
    $region2: #{tpu_custom_call.1} parent=1 // loop_pre_header
      _
    $region3: #{tpu_custom_call.1} parent=1 // loop_header
      %s43 = sphi 0, %s47
      %p44 = scmp.ge.s32.totalorder %s43, 4
      %s50 = sphi 0, %s62
      %s51 = sphi 0, %s58
      %s52 = sphi 0, %s50
      %s53 = sphi 0, %s51
      %s54 = sphi 0, %s52
      %s55 = sphi 0, %s53
      %s65 = sphi 0, %s67
      %s68 = sphi 0, %s65
      %s69 = sphi 0, %s68
      %s85 = sphi 0, %s69
      %s91 = sphi 0, %s93
      %s94 = sphi 0, %s91
      %s95 = sphi 0, %s94
      %s111 = sphi 0, %s95
      %s117 = sphi 0, %s119
      %s120 = sphi 0, %s117
      %s121 = sphi 0, %s120
      %s137 = sphi 0, %s121
      %s143 = sphi 0, %s145
      %s146 = sphi 0, %s143
      %s147 = sphi 0, %s146
      %s163 = sphi 0, %s147
      %s169 = sphi 0, %s171
      %s172 = sphi 0, %s169
      %s173 = sphi 0, %s172
      %s189 = sphi 0, %s173
      %s195 = sphi 0, %s197
      %s198 = sphi 0, %s195
      %s199 = sphi 0, %s198
      %s215 = sphi 0, %s199
      %s221 = sphi 0, %s223
      %s224 = sphi 0, %s221
      %s225 = sphi 0, %s224
      %s241 = sphi 0, %s225
      %s247 = sphi 0, %s249
      %s250 = sphi 0, %s247
      %s251 = sphi 0, %s250
      %s267 = sphi 0, %s251
      %s273 = sphi 0, %s275
      %s276 = sphi 0, %s273
      %s277 = sphi 0, %s276
      %s293 = sphi 0, %s277
      %s299 = sphi 0, %s301
      %s302 = sphi 0, %s299
      %s303 = sphi 0, %s302
      %s319 = sphi 0, %s303
      %s325 = sphi 0, %s327
      %s328 = sphi 0, %s325
      %s329 = sphi 0, %s328
      %s345 = sphi 0, %s329
      %s351 = sphi 0, %s353
      %s354 = sphi 0, %s351
      %s355 = sphi 0, %s354
      %s371 = sphi 0, %s355
      %s377 = sphi 0, %s379
      %s380 = sphi 0, %s377
      %s381 = sphi 0, %s380
      %s397 = sphi 0, %s381
      %s403 = sphi 0, %s405
      %s406 = sphi 0, %s403
      %s407 = sphi 0, %s406
      %s423 = sphi 0, %s407
      %s429 = sphi 0, %s431
      %s432 = sphi 0, %s429
      %s433 = sphi 0, %s432
      %s449 = sphi 0, %s433
      %s455 = sphi 0, %s457
      %s458 = sphi 0, %s455
      %s459 = sphi 0, %s458
      %s475 = sphi 0, %s459
      %s481 = sphi 0, %s483
      %s484 = sphi 0, %s481
      %s485 = sphi 0, %s484
      %s501 = sphi 0, %s485
      %s507 = sphi 0, %s509
      %s510 = sphi 0, %s507
      %s511 = sphi 0, %s510
      %s527 = sphi 0, %s511
      %s533 = sphi 0, %s535
      %s536 = sphi 0, %s533
      %s537 = sphi 0, %s536
      %s553 = sphi 0, %s537
      %s559 = sphi 0, %s561
      %s562 = sphi 0, %s559
      %s563 = sphi 0, %s562
      %s579 = sphi 0, %s563
      %s585 = sphi 0, %s587
      %s588 = sphi 0, %s585
      %s589 = sphi 0, %s588
      %s605 = sphi 0, %s589
      %s611 = sphi 0, %s613
      %s614 = sphi 0, %s611
      %s615 = sphi 0, %s614
      %s631 = sphi 0, %s615
      %s637 = sphi 0, %s639
      %s640 = sphi 0, %s637
      %s641 = sphi 0, %s640
      %s657 = sphi 0, %s641
    $region4: #{tpu_custom_call.1} parent=1 // loop_header_branch
      %46 = sbr.rel (%p44) target = $region8
    $region5: #{tpu_custom_call.1} parent=1 // loop_body
      %s48 = ssub.s32 %s43, 1
      %s49 = ssub.s32 %s43, 2
      %s56 = sadd.s32 1, %s51
      %p57 = scmp.ge.s32.totalorder %s56, 2
      %s58 = scalar_select %p57, 0, %s56
      %s59 = sadd.s32 1, %s50
      %s60 = scalar_select %p57, %s59, %s50
      %p61 = scmp.ge.s32.totalorder %s60, 1
      %s62 = scalar_select %p61, 0, %s60
      %s63 = ssub.s32 %s50, %s62
      %p64 = scmp.eq.s32.totalorder %s63, 0
      %s66 = sadd.s32 %s65, 1
      %s67 = scalar_select %p64, %s65, %s66
      %p70 = pneg %p64
      %p71 = scmp.eq.s32.totalorder %s43, 1
      %p72 = por %p70, %p71
      %p73 = scmp.ne.s32.totalorder %s65, %s68
      %p74 = scmp.eq.s32.totalorder %s43, 0
      %p75 = por %p73, %p74
      %p76 = scmp.ne.s32.totalorder %s65, %s68
      %p77 = scmp.eq.s32.totalorder %s48, 1
      %p78 = por %p76, %p77
      %p79 = scmp.ne.s32.totalorder %s68, %s69
      %p80 = scmp.eq.s32.totalorder %s48, 0
      %p81 = por %p79, %p80
      %p82 = scmp.ne.s32.totalorder %s68, %s69
      %p83 = scmp.eq.s32.totalorder %s49, 1
      %p84 = por %p82, %p83
      %p86 = scmp.ne.s32.totalorder %s69, %s85
      %p87 = scmp.eq.s32.totalorder %s49, 0
      %p88 = por %p86, %p87
      %s89 = ssub.s32 %s50, %s62
      %p90 = scmp.eq.s32.totalorder %s89, 0
      %s92 = sadd.s32 %s91, 1
      %s93 = scalar_select %p90, %s91, %s92
      %p96 = pneg %p90
      %p97 = scmp.eq.s32.totalorder %s43, 1
      %p98 = por %p96, %p97
      %p99 = scmp.ne.s32.totalorder %s91, %s94
      %p100 = scmp.eq.s32.totalorder %s43, 0
      %p101 = por %p99, %p100
      %p102 = scmp.ne.s32.totalorder %s91, %s94
      %p103 = scmp.eq.s32.totalorder %s48, 1
      %p104 = por %p102, %p103
      %p105 = scmp.ne.s32.totalorder %s94, %s95
      %p106 = scmp.eq.s32.totalorder %s48, 0
      %p107 = por %p105, %p106
      %p108 = scmp.ne.s32.totalorder %s94, %s95
      %p109 = scmp.eq.s32.totalorder %s49, 1
      %p110 = por %p108, %p109
      %p112 = scmp.ne.s32.totalorder %s95, %s111
      %p113 = scmp.eq.s32.totalorder %s49, 0
      %p114 = por %p112, %p113
      %s115 = ssub.s32 %s50, %s62
      %p116 = scmp.eq.s32.totalorder %s115, 0
      %s118 = sadd.s32 %s117, 1
      %s119 = scalar_select %p116, %s117, %s118
      %p122 = pneg %p116
      %p123 = scmp.eq.s32.totalorder %s43, 1
      %p124 = por %p122, %p123
      %p125 = scmp.ne.s32.totalorder %s117, %s120
      %p126 = scmp.eq.s32.totalorder %s43, 0
      %p127 = por %p125, %p126
      %p128 = scmp.ne.s32.totalorder %s117, %s120
      %p129 = scmp.eq.s32.totalorder %s48, 1
      %p130 = por %p128, %p129
      %p131 = scmp.ne.s32.totalorder %s120, %s121
      %p132 = scmp.eq.s32.totalorder %s48, 0
      %p133 = por %p131, %p132
      %p134 = scmp.ne.s32.totalorder %s120, %s121
      %p135 = scmp.eq.s32.totalorder %s49, 1
      %p136 = por %p134, %p135
      %p138 = scmp.ne.s32.totalorder %s121, %s137
      %p139 = scmp.eq.s32.totalorder %s49, 0
      %p140 = por %p138, %p139
      %s141 = ssub.s32 %s50, %s62
      %p142 = scmp.eq.s32.totalorder %s141, 0
      %s144 = sadd.s32 %s143, 1
      %s145 = scalar_select %p142, %s143, %s144
      %p148 = pneg %p142
      %p149 = scmp.eq.s32.totalorder %s43, 1
      %p150 = por %p148, %p149
      %p151 = scmp.ne.s32.totalorder %s143, %s146
      %p152 = scmp.eq.s32.totalorder %s43, 0
      %p153 = por %p151, %p152
      %p154 = scmp.ne.s32.totalorder %s143, %s146
      %p155 = scmp.eq.s32.totalorder %s48, 1
      %p156 = por %p154, %p155
      %p157 = scmp.ne.s32.totalorder %s146, %s147
      %p158 = scmp.eq.s32.totalorder %s48, 0
      %p159 = por %p157, %p158
      %p160 = scmp.ne.s32.totalorder %s146, %s147
      %p161 = scmp.eq.s32.totalorder %s49, 1
      %p162 = por %p160, %p161
      %p164 = scmp.ne.s32.totalorder %s147, %s163
      %p165 = scmp.eq.s32.totalorder %s49, 0
      %p166 = por %p164, %p165
      %s167 = ssub.s32 %s51, %s58
      %p168 = scmp.eq.s32.totalorder %s167, 0
      %s170 = sadd.s32 %s169, 1
      %s171 = scalar_select %p168, %s169, %s170
      %p174 = pneg %p168
      %p175 = scmp.eq.s32.totalorder %s43, 1
      %p176 = por %p174, %p175
      %p177 = scmp.ne.s32.totalorder %s169, %s172
      %p178 = scmp.eq.s32.totalorder %s43, 0
      %p179 = por %p177, %p178
      %p180 = scmp.ne.s32.totalorder %s169, %s172
      %p181 = scmp.eq.s32.totalorder %s48, 1
      %p182 = por %p180, %p181
      %p183 = scmp.ne.s32.totalorder %s172, %s173
      %p184 = scmp.eq.s32.totalorder %s48, 0
      %p185 = por %p183, %p184
      %p186 = scmp.ne.s32.totalorder %s172, %s173
      %p187 = scmp.eq.s32.totalorder %s49, 1
      %p188 = por %p186, %p187
      %p190 = scmp.ne.s32.totalorder %s173, %s189
      %p191 = scmp.eq.s32.totalorder %s49, 0
      %p192 = por %p190, %p191
      %s193 = ssub.s32 %s51, %s58
      %p194 = scmp.eq.s32.totalorder %s193, 0
      %s196 = sadd.s32 %s195, 1
      %s197 = scalar_select %p194, %s195, %s196
      %p200 = pneg %p194
      %p201 = scmp.eq.s32.totalorder %s43, 1
      %p202 = por %p200, %p201
      %p203 = scmp.ne.s32.totalorder %s195, %s198
      %p204 = scmp.eq.s32.totalorder %s43, 0
      %p205 = por %p203, %p204
      %p206 = scmp.ne.s32.totalorder %s195, %s198
      %p207 = scmp.eq.s32.totalorder %s48, 1
      %p208 = por %p206, %p207
      %p209 = scmp.ne.s32.totalorder %s198, %s199
      %p210 = scmp.eq.s32.totalorder %s48, 0
      %p211 = por %p209, %p210
      %p212 = scmp.ne.s32.totalorder %s198, %s199
      %p213 = scmp.eq.s32.totalorder %s49, 1
      %p214 = por %p212, %p213
      %p216 = scmp.ne.s32.totalorder %s199, %s215
      %p217 = scmp.eq.s32.totalorder %s49, 0
      %p218 = por %p216, %p217
      %s219 = ssub.s32 %s51, %s58
      %p220 = scmp.eq.s32.totalorder %s219, 0
      %s222 = sadd.s32 %s221, 1
      %s223 = scalar_select %p220, %s221, %s222
      %p226 = pneg %p220
      %p227 = scmp.eq.s32.totalorder %s43, 1
      %p228 = por %p226, %p227
      %p229 = scmp.ne.s32.totalorder %s221, %s224
      %p230 = scmp.eq.s32.totalorder %s43, 0
      %p231 = por %p229, %p230
      %p232 = scmp.ne.s32.totalorder %s221, %s224
      %p233 = scmp.eq.s32.totalorder %s48, 1
      %p234 = por %p232, %p233
      %p235 = scmp.ne.s32.totalorder %s224, %s225
      %p236 = scmp.eq.s32.totalorder %s48, 0
      %p237 = por %p235, %p236
      %p238 = scmp.ne.s32.totalorder %s224, %s225
      %p239 = scmp.eq.s32.totalorder %s49, 1
      %p240 = por %p238, %p239
      %p242 = scmp.ne.s32.totalorder %s225, %s241
      %p243 = scmp.eq.s32.totalorder %s49, 0
      %p244 = por %p242, %p243
      %s245 = ssub.s32 %s51, %s58
      %p246 = scmp.eq.s32.totalorder %s245, 0
      %s248 = sadd.s32 %s247, 1
      %s249 = scalar_select %p246, %s247, %s248
      %p252 = pneg %p246
      %p253 = scmp.eq.s32.totalorder %s43, 1
      %p254 = por %p252, %p253
      %p255 = scmp.ne.s32.totalorder %s247, %s250
      %p256 = scmp.eq.s32.totalorder %s43, 0
      %p257 = por %p255, %p256
      %p258 = scmp.ne.s32.totalorder %s247, %s250
      %p259 = scmp.eq.s32.totalorder %s48, 1
      %p260 = por %p258, %p259
      %p261 = scmp.ne.s32.totalorder %s250, %s251
      %p262 = scmp.eq.s32.totalorder %s48, 0
      %p263 = por %p261, %p262
      %p264 = scmp.ne.s32.totalorder %s250, %s251
      %p265 = scmp.eq.s32.totalorder %s49, 1
      %p266 = por %p264, %p265
      %p268 = scmp.ne.s32.totalorder %s251, %s267
      %p269 = scmp.eq.s32.totalorder %s49, 0
      %p270 = por %p268, %p269
      %s271 = ssub.s32 %s51, %s58
      %p272 = scmp.eq.s32.totalorder %s271, 0
      %s274 = sadd.s32 %s273, 1
      %s275 = scalar_select %p272, %s273, %s274
      %p278 = pneg %p272
      %p279 = scmp.eq.s32.totalorder %s43, 1
      %p280 = por %p278, %p279
      %p281 = scmp.ne.s32.totalorder %s273, %s276
      %p282 = scmp.eq.s32.totalorder %s43, 0
      %p283 = por %p281, %p282
      %p284 = scmp.ne.s32.totalorder %s273, %s276
      %p285 = scmp.eq.s32.totalorder %s48, 1
      %p286 = por %p284, %p285
      %p287 = scmp.ne.s32.totalorder %s276, %s277
      %p288 = scmp.eq.s32.totalorder %s48, 0
      %p289 = por %p287, %p288
      %p290 = scmp.ne.s32.totalorder %s276, %s277
      %p291 = scmp.eq.s32.totalorder %s49, 1
      %p292 = por %p290, %p291
      %p294 = scmp.ne.s32.totalorder %s277, %s293
      %p295 = scmp.eq.s32.totalorder %s49, 0
      %p296 = por %p294, %p295
      %s297 = ssub.s32 %s51, %s58
      %p298 = scmp.eq.s32.totalorder %s297, 0
      %s300 = sadd.s32 %s299, 1
      %s301 = scalar_select %p298, %s299, %s300
      %p304 = pneg %p298
      %p305 = scmp.eq.s32.totalorder %s43, 1
      %p306 = por %p304, %p305
      %p307 = scmp.ne.s32.totalorder %s299, %s302
      %p308 = scmp.eq.s32.totalorder %s43, 0
      %p309 = por %p307, %p308
      %p310 = scmp.ne.s32.totalorder %s299, %s302
      %p311 = scmp.eq.s32.totalorder %s48, 1
      %p312 = por %p310, %p311
      %p313 = scmp.ne.s32.totalorder %s302, %s303
      %p314 = scmp.eq.s32.totalorder %s48, 0
      %p315 = por %p313, %p314
      %p316 = scmp.ne.s32.totalorder %s302, %s303
      %p317 = scmp.eq.s32.totalorder %s49, 1
      %p318 = por %p316, %p317
      %p320 = scmp.ne.s32.totalorder %s303, %s319
      %p321 = scmp.eq.s32.totalorder %s49, 0
      %p322 = por %p320, %p321
      %s323 = ssub.s32 %s51, %s58
      %p324 = scmp.eq.s32.totalorder %s323, 0
      %s326 = sadd.s32 %s325, 1
      %s327 = scalar_select %p324, %s325, %s326
      %p330 = pneg %p324
      %p331 = scmp.eq.s32.totalorder %s43, 1
      %p332 = por %p330, %p331
      %p333 = scmp.ne.s32.totalorder %s325, %s328
      %p334 = scmp.eq.s32.totalorder %s43, 0
      %p335 = por %p333, %p334
      %p336 = scmp.ne.s32.totalorder %s325, %s328
      %p337 = scmp.eq.s32.totalorder %s48, 1
      %p338 = por %p336, %p337
      %p339 = scmp.ne.s32.totalorder %s328, %s329
      %p340 = scmp.eq.s32.totalorder %s48, 0
      %p341 = por %p339, %p340
      %p342 = scmp.ne.s32.totalorder %s328, %s329
      %p343 = scmp.eq.s32.totalorder %s49, 1
      %p344 = por %p342, %p343
      %p346 = scmp.ne.s32.totalorder %s329, %s345
      %p347 = scmp.eq.s32.totalorder %s49, 0
      %p348 = por %p346, %p347
      %s349 = ssub.s32 %s51, %s58
      %p350 = scmp.eq.s32.totalorder %s349, 0
      %s352 = sadd.s32 %s351, 1
      %s353 = scalar_select %p350, %s351, %s352
      %p356 = pneg %p350
      %p357 = scmp.eq.s32.totalorder %s43, 1
      %p358 = por %p356, %p357
      %p359 = scmp.ne.s32.totalorder %s351, %s354
      %p360 = scmp.eq.s32.totalorder %s43, 0
      %p361 = por %p359, %p360
      %p362 = scmp.ne.s32.totalorder %s351, %s354
      %p363 = scmp.eq.s32.totalorder %s48, 1
      %p364 = por %p362, %p363
      %p365 = scmp.ne.s32.totalorder %s354, %s355
      %p366 = scmp.eq.s32.totalorder %s48, 0
      %p367 = por %p365, %p366
      %p368 = scmp.ne.s32.totalorder %s354, %s355
      %p369 = scmp.eq.s32.totalorder %s49, 1
      %p370 = por %p368, %p369
      %p372 = scmp.ne.s32.totalorder %s355, %s371
      %p373 = scmp.eq.s32.totalorder %s49, 0
      %p374 = por %p372, %p373
      %s375 = ssub.s32 %s51, %s58
      %p376 = scmp.eq.s32.totalorder %s375, 0
      %s378 = sadd.s32 %s377, 1
      %s379 = scalar_select %p376, %s377, %s378
      %p382 = pneg %p376
      %p383 = scmp.eq.s32.totalorder %s43, 1
      %p384 = por %p382, %p383
      %p385 = scmp.ne.s32.totalorder %s377, %s380
      %p386 = scmp.eq.s32.totalorder %s43, 0
      %p387 = por %p385, %p386
      %p388 = scmp.ne.s32.totalorder %s377, %s380
      %p389 = scmp.eq.s32.totalorder %s48, 1
      %p390 = por %p388, %p389
      %p391 = scmp.ne.s32.totalorder %s380, %s381
      %p392 = scmp.eq.s32.totalorder %s48, 0
      %p393 = por %p391, %p392
      %p394 = scmp.ne.s32.totalorder %s380, %s381
      %p395 = scmp.eq.s32.totalorder %s49, 1
      %p396 = por %p394, %p395
      %p398 = scmp.ne.s32.totalorder %s381, %s397
      %p399 = scmp.eq.s32.totalorder %s49, 0
      %p400 = por %p398, %p399
      %s401 = ssub.s32 %s51, %s58
      %p402 = scmp.eq.s32.totalorder %s401, 0
      %s404 = sadd.s32 %s403, 1
      %s405 = scalar_select %p402, %s403, %s404
      %p408 = pneg %p402
      %p409 = scmp.eq.s32.totalorder %s43, 1
      %p410 = por %p408, %p409
      %p411 = scmp.ne.s32.totalorder %s403, %s406
      %p412 = scmp.eq.s32.totalorder %s43, 0
      %p413 = por %p411, %p412
      %p414 = scmp.ne.s32.totalorder %s403, %s406
      %p415 = scmp.eq.s32.totalorder %s48, 1
      %p416 = por %p414, %p415
      %p417 = scmp.ne.s32.totalorder %s406, %s407
      %p418 = scmp.eq.s32.totalorder %s48, 0
      %p419 = por %p417, %p418
      %p420 = scmp.ne.s32.totalorder %s406, %s407
      %p421 = scmp.eq.s32.totalorder %s49, 1
      %p422 = por %p420, %p421
      %p424 = scmp.ne.s32.totalorder %s407, %s423
      %p425 = scmp.eq.s32.totalorder %s49, 0
      %p426 = por %p424, %p425
      %s427 = ssub.s32 %s51, %s58
      %p428 = scmp.eq.s32.totalorder %s427, 0
      %s430 = sadd.s32 %s429, 1
      %s431 = scalar_select %p428, %s429, %s430
      %p434 = pneg %p428
      %p435 = scmp.eq.s32.totalorder %s43, 1
      %p436 = por %p434, %p435
      %p437 = scmp.ne.s32.totalorder %s429, %s432
      %p438 = scmp.eq.s32.totalorder %s43, 0
      %p439 = por %p437, %p438
      %p440 = scmp.ne.s32.totalorder %s429, %s432
      %p441 = scmp.eq.s32.totalorder %s48, 1
      %p442 = por %p440, %p441
      %p443 = scmp.ne.s32.totalorder %s432, %s433
      %p444 = scmp.eq.s32.totalorder %s48, 0
      %p445 = por %p443, %p444
      %p446 = scmp.ne.s32.totalorder %s432, %s433
      %p447 = scmp.eq.s32.totalorder %s49, 1
      %p448 = por %p446, %p447
      %p450 = scmp.ne.s32.totalorder %s433, %s449
      %p451 = scmp.eq.s32.totalorder %s49, 0
      %p452 = por %p450, %p451
      %s453 = ssub.s32 %s51, %s58
      %p454 = scmp.eq.s32.totalorder %s453, 0
      %s456 = sadd.s32 %s455, 1
      %s457 = scalar_select %p454, %s455, %s456
      %p460 = pneg %p454
      %p461 = scmp.eq.s32.totalorder %s43, 1
      %p462 = por %p460, %p461
      %p463 = scmp.ne.s32.totalorder %s455, %s458
      %p464 = scmp.eq.s32.totalorder %s43, 0
      %p465 = por %p463, %p464
      %p466 = scmp.ne.s32.totalorder %s455, %s458
      %p467 = scmp.eq.s32.totalorder %s48, 1
      %p468 = por %p466, %p467
      %p469 = scmp.ne.s32.totalorder %s458, %s459
      %p470 = scmp.eq.s32.totalorder %s48, 0
      %p471 = por %p469, %p470
      %p472 = scmp.ne.s32.totalorder %s458, %s459
      %p473 = scmp.eq.s32.totalorder %s49, 1
      %p474 = por %p472, %p473
      %p476 = scmp.ne.s32.totalorder %s459, %s475
      %p477 = scmp.eq.s32.totalorder %s49, 0
      %p478 = por %p476, %p477
      %s479 = ssub.s32 %s51, %s58
      %p480 = scmp.eq.s32.totalorder %s479, 0
      %s482 = sadd.s32 %s481, 1
      %s483 = scalar_select %p480, %s481, %s482
      %p486 = pneg %p480
      %p487 = scmp.eq.s32.totalorder %s43, 1
      %p488 = por %p486, %p487
      %p489 = scmp.ne.s32.totalorder %s481, %s484
      %p490 = scmp.eq.s32.totalorder %s43, 0
      %p491 = por %p489, %p490
      %p492 = scmp.ne.s32.totalorder %s481, %s484
      %p493 = scmp.eq.s32.totalorder %s48, 1
      %p494 = por %p492, %p493
      %p495 = scmp.ne.s32.totalorder %s484, %s485
      %p496 = scmp.eq.s32.totalorder %s48, 0
      %p497 = por %p495, %p496
      %p498 = scmp.ne.s32.totalorder %s484, %s485
      %p499 = scmp.eq.s32.totalorder %s49, 1
      %p500 = por %p498, %p499
      %p502 = scmp.ne.s32.totalorder %s485, %s501
      %p503 = scmp.eq.s32.totalorder %s49, 0
      %p504 = por %p502, %p503
      %s505 = ssub.s32 %s51, %s58
      %p506 = scmp.eq.s32.totalorder %s505, 0
      %s508 = sadd.s32 %s507, 1
      %s509 = scalar_select %p506, %s507, %s508
      %p512 = pneg %p506
      %p513 = scmp.eq.s32.totalorder %s43, 1
      %p514 = por %p512, %p513
      %p515 = scmp.ne.s32.totalorder %s507, %s510
      %p516 = scmp.eq.s32.totalorder %s43, 0
      %p517 = por %p515, %p516
      %p518 = scmp.ne.s32.totalorder %s507, %s510
      %p519 = scmp.eq.s32.totalorder %s48, 1
      %p520 = por %p518, %p519
      %p521 = scmp.ne.s32.totalorder %s510, %s511
      %p522 = scmp.eq.s32.totalorder %s48, 0
      %p523 = por %p521, %p522
      %p524 = scmp.ne.s32.totalorder %s510, %s511
      %p525 = scmp.eq.s32.totalorder %s49, 1
      %p526 = por %p524, %p525
      %p528 = scmp.ne.s32.totalorder %s511, %s527
      %p529 = scmp.eq.s32.totalorder %s49, 0
      %p530 = por %p528, %p529
      %s531 = ssub.s32 %s51, %s58
      %p532 = scmp.eq.s32.totalorder %s531, 0
      %s534 = sadd.s32 %s533, 1
      %s535 = scalar_select %p532, %s533, %s534
      %p538 = pneg %p532
      %p539 = scmp.eq.s32.totalorder %s43, 1
      %p540 = por %p538, %p539
      %p541 = scmp.ne.s32.totalorder %s533, %s536
      %p542 = scmp.eq.s32.totalorder %s43, 0
      %p543 = por %p541, %p542
      %p544 = scmp.ne.s32.totalorder %s533, %s536
      %p545 = scmp.eq.s32.totalorder %s48, 1
      %p546 = por %p544, %p545
      %p547 = scmp.ne.s32.totalorder %s536, %s537
      %p548 = scmp.eq.s32.totalorder %s48, 0
      %p549 = por %p547, %p548
      %p550 = scmp.ne.s32.totalorder %s536, %s537
      %p551 = scmp.eq.s32.totalorder %s49, 1
      %p552 = por %p550, %p551
      %p554 = scmp.ne.s32.totalorder %s537, %s553
      %p555 = scmp.eq.s32.totalorder %s49, 0
      %p556 = por %p554, %p555
      %s557 = ssub.s32 %s51, %s58
      %p558 = scmp.eq.s32.totalorder %s557, 0
      %s560 = sadd.s32 %s559, 1
      %s561 = scalar_select %p558, %s559, %s560
      %p564 = pneg %p558
      %p565 = scmp.eq.s32.totalorder %s43, 1
      %p566 = por %p564, %p565
      %p567 = scmp.ne.s32.totalorder %s559, %s562
      %p568 = scmp.eq.s32.totalorder %s43, 0
      %p569 = por %p567, %p568
      %p570 = scmp.ne.s32.totalorder %s559, %s562
      %p571 = scmp.eq.s32.totalorder %s48, 1
      %p572 = por %p570, %p571
      %p573 = scmp.ne.s32.totalorder %s562, %s563
      %p574 = scmp.eq.s32.totalorder %s48, 0
      %p575 = por %p573, %p574
      %p576 = scmp.ne.s32.totalorder %s562, %s563
      %p577 = scmp.eq.s32.totalorder %s49, 1
      %p578 = por %p576, %p577
      %p580 = scmp.ne.s32.totalorder %s563, %s579
      %p581 = scmp.eq.s32.totalorder %s49, 0
      %p582 = por %p580, %p581
      %s583 = ssub.s32 %s51, %s58
      %p584 = scmp.eq.s32.totalorder %s583, 0
      %s586 = sadd.s32 %s585, 1
      %s587 = scalar_select %p584, %s585, %s586
      %p590 = pneg %p584
      %p591 = scmp.eq.s32.totalorder %s43, 1
      %p592 = por %p590, %p591
      %p593 = scmp.ne.s32.totalorder %s585, %s588
      %p594 = scmp.eq.s32.totalorder %s43, 0
      %p595 = por %p593, %p594
      %p596 = scmp.ne.s32.totalorder %s585, %s588
      %p597 = scmp.eq.s32.totalorder %s48, 1
      %p598 = por %p596, %p597
      %p599 = scmp.ne.s32.totalorder %s588, %s589
      %p600 = scmp.eq.s32.totalorder %s48, 0
      %p601 = por %p599, %p600
      %p602 = scmp.ne.s32.totalorder %s588, %s589
      %p603 = scmp.eq.s32.totalorder %s49, 1
      %p604 = por %p602, %p603
      %p606 = scmp.ne.s32.totalorder %s589, %s605
      %p607 = scmp.eq.s32.totalorder %s49, 0
      %p608 = por %p606, %p607
      %s609 = ssub.s32 %s51, %s58
      %p610 = scmp.eq.s32.totalorder %s609, 0
      %s612 = sadd.s32 %s611, 1
      %s613 = scalar_select %p610, %s611, %s612
      %p616 = pneg %p610
      %p617 = scmp.eq.s32.totalorder %s43, 1
      %p618 = por %p616, %p617
      %p619 = scmp.ne.s32.totalorder %s611, %s614
      %p620 = scmp.eq.s32.totalorder %s43, 0
      %p621 = por %p619, %p620
      %p622 = scmp.ne.s32.totalorder %s611, %s614
      %p623 = scmp.eq.s32.totalorder %s48, 1
      %p624 = por %p622, %p623
      %p625 = scmp.ne.s32.totalorder %s614, %s615
      %p626 = scmp.eq.s32.totalorder %s48, 0
      %p627 = por %p625, %p626
      %p628 = scmp.ne.s32.totalorder %s614, %s615
      %p629 = scmp.eq.s32.totalorder %s49, 1
      %p630 = por %p628, %p629
      %p632 = scmp.ne.s32.totalorder %s615, %s631
      %p633 = scmp.eq.s32.totalorder %s49, 0
      %p634 = por %p632, %p633
      %s635 = ssub.s32 %s50, %s62
      %p636 = scmp.eq.s32.totalorder %s635, 0
      %s638 = sadd.s32 %s637, 1
      %s639 = scalar_select %p636, %s637, %s638
      %p642 = pneg %p636
      %p643 = scmp.eq.s32.totalorder %s43, 1
      %p644 = por %p642, %p643
      %p645 = scmp.ne.s32.totalorder %s637, %s640
      %p646 = scmp.eq.s32.totalorder %s43, 0
      %p647 = por %p645, %p646
      %p648 = scmp.ne.s32.totalorder %s637, %s640
      %p649 = scmp.eq.s32.totalorder %s48, 1
      %p650 = por %p648, %p649
      %p651 = scmp.ne.s32.totalorder %s640, %s641
      %p652 = scmp.eq.s32.totalorder %s48, 0
      %p653 = por %p651, %p652
      %p654 = scmp.ne.s32.totalorder %s640, %s641
      %p655 = scmp.eq.s32.totalorder %s49, 1
      %p656 = por %p654, %p655
      %p658 = scmp.ne.s32.totalorder %s641, %s657
      %p659 = scmp.eq.s32.totalorder %s49, 0
      %p660 = por %p658, %p659
      %p661 = scmp.le.s32.totalorder 1, %s43
      %p662 = scmp.lt.s32.totalorder %s43, 3
      %p663 = pnand %p661, %p662
      %p664 = pneg %p663
      // Predicated region
      $region9: #{tpu_custom_call.1} parent=5 // pred_check
        _
      $region10: #{tpu_custom_call.1} parent=5 // pred_check_branch
        %666 = sbr.rel (%p663) target = $region12
      $region11: #{tpu_custom_call.1} parent=5 // pred_region
        %s667 = ssub.s32 %s43, 1
        // Predicated region
        $region13: #{tpu_custom_call.1} parent=11 // pred_check
          %p668 = pneg %p81
        $region14: #{tpu_custom_call.1} parent=11 // pred_check_branch
          %670 = sbr.rel (%p668) target = $region16
        $region15: #{tpu_custom_call.1} parent=11 // pred_region
          %s671 = smul.u32 2, %s52
          %s673 = ssub.s32 256, 256
          %674 = vsyncadd [#allocation4], %s673
          %s675 = smul.addr %s671, 128
          %s676 = scalar_lea.hbm %s0, %s675
          %s677 = sshll.u32 [#allocation3], 4
          %s678 = int_to_ptr.vmem [resolvable:$true] %s677
          %683 = dma.hbm_to_vmem [thread:$0]  %s676, 256, %s678, [#allocation4], 128, 128, 8
        $region16: #{tpu_custom_call.1} parent=11 // pred_fallthru
          _
        // Predicated region
        $region17: #{tpu_custom_call.1} parent=11 // pred_check
          %p684 = pneg %p107
        $region18: #{tpu_custom_call.1} parent=11 // pred_check_branch
          %686 = sbr.rel (%p684) target = $region20
        $region19: #{tpu_custom_call.1} parent=11 // pred_region
          %s687 = smul.u32 2, %s52
          %p688 = scmp.lt.s32.totalorder %s687, 1
          %s689 = scalar_select %p688, %s687, 1
          %s690 = smul.addr %s689, 8
          %s691 = scalar_lea.vmem %s1, %s690
          %s692 = smul.u32 2, %s52
        $region20: #{tpu_custom_call.1} parent=11 // pred_fallthru
          _
        // Predicated region
        $region21: #{tpu_custom_call.1} parent=11 // pred_check
          %p693 = pneg %p133
        $region22: #{tpu_custom_call.1} parent=11 // pred_check_branch
          %695 = sbr.rel (%p693) target = $region24
        $region23: #{tpu_custom_call.1} parent=11 // pred_region
          %s696 = smul.u32 2, %s52
          %s698 = ssub.s32 256, 256
          %699 = vsyncadd [#allocation7], %s698
          %s700 = smul.addr %s696, 2
          %s701 = smul.addr %s700, 64
          %s702 = scalar_lea.hbm %s2, %s701
          %s703 = sshll.u32 [#allocation6], 4
          %s704 = int_to_ptr.vmem [resolvable:$true] %s703
          %709 = dma.hbm_to_vmem [thread:$0]  %s702, 256, %s704, [#allocation7], 64, 64, 4
        $region24: #{tpu_custom_call.1} parent=11 // pred_fallthru
          _
        // Predicated region
        $region25: #{tpu_custom_call.1} parent=11 // pred_check
          %p710 = pneg %p159
        $region26: #{tpu_custom_call.1} parent=11 // pred_check_branch
          %712 = sbr.rel (%p710) target = $region28
        $region27: #{tpu_custom_call.1} parent=11 // pred_region
          %s713 = smul.u32 2, %s52
          %s715 = ssub.s32 32, 32
          %716 = vsyncadd [#allocation7], %s715
          %s717 = smul.addr %s713, 16
          %s718 = scalar_lea.hbm %s3, %s717
          %s719 = sshll.u32 [#allocation8], 4
          %s720 = int_to_ptr.vmem [resolvable:$true] %s719
          %725 = dma.hbm_to_vmem [thread:$0]  %s718, 32, %s720, [#allocation7], 16, 16, 1
        $region28: #{tpu_custom_call.1} parent=11 // pred_fallthru
          _
      $region12: #{tpu_custom_call.1} parent=5 // pred_fallthru
        _
      %p726 = scmp.lt.s32.totalorder %s43, 2
      // Predicated region
      $region29: #{tpu_custom_call.1} parent=5 // pred_check
        %p727 = pneg %p726
      $region30: #{tpu_custom_call.1} parent=5 // pred_check_branch
        %729 = sbr.rel (%p727) target = $region32
      $region31: #{tpu_custom_call.1} parent=5 // pred_region
        // Predicated region
        $region33: #{tpu_custom_call.1} parent=31 // pred_check
          %p730 = pneg %p179
        $region34: #{tpu_custom_call.1} parent=31 // pred_check_branch
          %732 = sbr.rel (%p730) target = $region36
        $region35: #{tpu_custom_call.1} parent=31 // pred_region
          %s733 = sand.u32 %s43, 1
          %s734 = scalar_lea.sflag [#allocation10], %s733
          %s735 = sand.u32 %s169, 1
          %s736 = scalar_lea.vmem [#allocation9], %s735
          %s738 = ssub.s32 16, 16
          %739 = vsyncadd %s734, %s738
          %s740 = smul.addr %s51, 16
          %s741 = scalar_lea.hbm %s4, %s740
          %s743 = sshll.u32 %s736, 4
          %s744 = int_to_ptr.vmem [resolvable:$true] %s743
          %746 = dma.hbm_to_vmem [thread:$0]  %s741, 16, %s744, %s734
        $region36: #{tpu_custom_call.1} parent=31 // pred_fallthru
          _
        // Predicated region
        $region37: #{tpu_custom_call.1} parent=31 // pred_check
          %p747 = pneg %p205
        $region38: #{tpu_custom_call.1} parent=31 // pred_check_branch
          %749 = sbr.rel (%p747) target = $region40
        $region39: #{tpu_custom_call.1} parent=31 // pred_region
          %s750 = sand.u32 %s43, 1
          %s751 = scalar_lea.sflag [#allocation10], %s750
          %s752 = sand.u32 %s195, 1
          %s753 = scalar_lea.vmem [#allocation11], %s752
          %s755 = ssub.s32 16, 16
          %756 = vsyncadd %s751, %s755
          %s757 = smul.addr %s51, 16
          %s758 = scalar_lea.hbm %s5, %s757
          %s760 = sshll.u32 %s753, 4
          %s761 = int_to_ptr.vmem [resolvable:$true] %s760
          %763 = dma.hbm_to_vmem [thread:$0]  %s758, 16, %s761, %s751
        $region40: #{tpu_custom_call.1} parent=31 // pred_fallthru
          _
        // Predicated region
        $region41: #{tpu_custom_call.1} parent=31 // pred_check
          %p764 = pneg %p231
        $region42: #{tpu_custom_call.1} parent=31 // pred_check_branch
          %766 = sbr.rel (%p764) target = $region44
        $region43: #{tpu_custom_call.1} parent=31 // pred_region
          %p767 = scmp.lt.s32.totalorder %s51, 1
          %s768 = scalar_select %p767, %s51, 1
          %s769 = smul.addr %s768, 4
          %s770 = smul.addr %s769, 4
          %s771 = scalar_lea.vmem %s6, %s770
        $region44: #{tpu_custom_call.1} parent=31 // pred_fallthru
          _
        // Predicated region
        $region45: #{tpu_custom_call.1} parent=31 // pred_check
          %p772 = pneg %p257
        $region46: #{tpu_custom_call.1} parent=31 // pred_check_branch
          %774 = sbr.rel (%p772) target = $region48
        $region47: #{tpu_custom_call.1} parent=31 // pred_region
          %s775 = sand.u32 %s43, 1
          %s776 = scalar_lea.sflag [#allocation13], %s775
          %s777 = sand.u32 %s247, 1
          %s778 = scalar_lea.vmem [#allocation12], %s777
          %s780 = ssub.s32 16, 16
          %781 = vsyncadd %s776, %s780
          %s782 = smul.addr %s51, 16
          %s783 = scalar_lea.hbm %s7, %s782
          %s785 = sshll.u32 %s778, 4
          %s786 = int_to_ptr.vmem [resolvable:$true] %s785
          %788 = dma.hbm_to_vmem [thread:$0]  %s783, 16, %s786, %s776
        $region48: #{tpu_custom_call.1} parent=31 // pred_fallthru
          _
        // Predicated region
        $region49: #{tpu_custom_call.1} parent=31 // pred_check
          %p789 = pneg %p283
        $region50: #{tpu_custom_call.1} parent=31 // pred_check_branch
          %791 = sbr.rel (%p789) target = $region52
        $region51: #{tpu_custom_call.1} parent=31 // pred_region
          %s792 = sand.u32 %s43, 1
          %s793 = scalar_lea.sflag [#allocation13], %s792
          %s794 = sand.u32 %s273, 1
          %s795 = scalar_lea.vmem [#allocation14], %s794
          %s797 = ssub.s32 16, 16
          %798 = vsyncadd %s793, %s797
          %s799 = smul.addr %s51, 16
          %s800 = scalar_lea.hbm %s8, %s799
          %s802 = sshll.u32 %s795, 4
          %s803 = int_to_ptr.vmem [resolvable:$true] %s802
          %805 = dma.hbm_to_vmem [thread:$0]  %s800, 16, %s803, %s793
        $region52: #{tpu_custom_call.1} parent=31 // pred_fallthru
          _
        // Predicated region
        $region53: #{tpu_custom_call.1} parent=31 // pred_check
          %p806 = pneg %p309
        $region54: #{tpu_custom_call.1} parent=31 // pred_check_branch
          %808 = sbr.rel (%p806) target = $region56
        $region55: #{tpu_custom_call.1} parent=31 // pred_region
          %s809 = sand.u32 %s43, 1
          %s810 = scalar_lea.sflag [#allocation16], %s809
          %s811 = sand.u32 %s299, 1
          %s812 = scalar_lea.vmem [#allocation15], %s811
          %s814 = ssub.s32 16, 16
          %815 = vsyncadd %s810, %s814
          %s816 = smul.addr %s51, 16
          %s817 = scalar_lea.hbm %s9, %s816
          %s819 = sshll.u32 %s812, 4
          %s820 = int_to_ptr.vmem [resolvable:$true] %s819
          %822 = dma.hbm_to_vmem [thread:$0]  %s817, 16, %s820, %s810
        $region56: #{tpu_custom_call.1} parent=31 // pred_fallthru
          _
        // Predicated region
        $region57: #{tpu_custom_call.1} parent=31 // pred_check
          %p823 = pneg %p335
        $region58: #{tpu_custom_call.1} parent=31 // pred_check_branch
          %825 = sbr.rel (%p823) target = $region60
        $region59: #{tpu_custom_call.1} parent=31 // pred_region
          %p826 = scmp.lt.s32.totalorder %s51, 1
          %s827 = scalar_select %p826, %s51, 1
          %s828 = smul.addr %s827, 8
          %s829 = smul.addr %s828, 4
          %s830 = scalar_lea.vmem %s10, %s829
        $region60: #{tpu_custom_call.1} parent=31 // pred_fallthru
          _
        // Predicated region
        $region61: #{tpu_custom_call.1} parent=31 // pred_check
          %p831 = pneg %p361
        $region62: #{tpu_custom_call.1} parent=31 // pred_check_branch
          %833 = sbr.rel (%p831) target = $region64
        $region63: #{tpu_custom_call.1} parent=31 // pred_region
          %s834 = sand.u32 %s43, 1
          %s835 = scalar_lea.sflag [#allocation16], %s834
          %s836 = sand.u32 %s351, 1
          %s837 = scalar_lea.vmem [#allocation17], %s836
          %s839 = ssub.s32 16, 16
          %840 = vsyncadd %s835, %s839
          %s841 = smul.addr %s51, 16
          %s842 = scalar_lea.hbm %s11, %s841
          %s844 = sshll.u32 %s837, 4
          %s845 = int_to_ptr.vmem [resolvable:$true] %s844
          %847 = dma.hbm_to_vmem [thread:$0]  %s842, 16, %s845, %s835
        $region64: #{tpu_custom_call.1} parent=31 // pred_fallthru
          _
        // Predicated region
        $region65: #{tpu_custom_call.1} parent=31 // pred_check
          %p848 = pneg %p387
        $region66: #{tpu_custom_call.1} parent=31 // pred_check_branch
          %850 = sbr.rel (%p848) target = $region68
        $region67: #{tpu_custom_call.1} parent=31 // pred_region
          %s851 = sand.u32 %s377, 1
          %s852 = scalar_lea.sflag [#allocation19], %s851
          %s853 = sand.u32 %s377, 1
          %s854 = scalar_lea.vmem [#allocation18], %s853
          %s856 = ssub.s32 16, 16
          %857 = vsyncadd %s852, %s856
          %s858 = smul.addr %s51, 16
          %s859 = scalar_lea.hbm %s12, %s858
          %s861 = sshll.u32 %s854, 4
          %s862 = int_to_ptr.vmem [resolvable:$true] %s861
          %864 = dma.hbm_to_vmem [thread:$0]  %s859, 16, %s862, %s852
        $region68: #{tpu_custom_call.1} parent=31 // pred_fallthru
          _
        // Predicated region
        $region69: #{tpu_custom_call.1} parent=31 // pred_check
          %p865 = pneg %p413
        $region70: #{tpu_custom_call.1} parent=31 // pred_check_branch
          %867 = sbr.rel (%p865) target = $region72
        $region71: #{tpu_custom_call.1} parent=31 // pred_region
          %p868 = scmp.lt.s32.totalorder %s51, 1
          %s869 = scalar_select %p868, %s51, 1
          %s870 = smul.addr %s869, 8
          %s871 = scalar_lea.vmem %s13, %s870
        $region72: #{tpu_custom_call.1} parent=31 // pred_fallthru
          _
        // Predicated region
        $region73: #{tpu_custom_call.1} parent=31 // pred_check
          %p872 = pneg %p439
        $region74: #{tpu_custom_call.1} parent=31 // pred_check_branch
          %874 = sbr.rel (%p872) target = $region76
        $region75: #{tpu_custom_call.1} parent=31 // pred_region
          %p875 = scmp.lt.s32.totalorder %s51, 1
          %s876 = scalar_select %p875, %s51, 1
          %s877 = scalar_lea.vmem %s14, %s876
        $region76: #{tpu_custom_call.1} parent=31 // pred_fallthru
          _
        // Predicated region
        $region77: #{tpu_custom_call.1} parent=31 // pred_check
          %p878 = pneg %p465
        $region78: #{tpu_custom_call.1} parent=31 // pred_check_branch
          %880 = sbr.rel (%p878) target = $region80
        $region79: #{tpu_custom_call.1} parent=31 // pred_region
          %p881 = scmp.lt.s32.totalorder %s51, 1
          %s882 = scalar_select %p881, %s51, 1
          %s883 = scalar_lea.vmem %s15, %s882
        $region80: #{tpu_custom_call.1} parent=31 // pred_fallthru
          _
        // Predicated region
        $region81: #{tpu_custom_call.1} parent=31 // pred_check
          %p884 = pneg %p491
        $region82: #{tpu_custom_call.1} parent=31 // pred_check_branch
          %886 = sbr.rel (%p884) target = $region84
        $region83: #{tpu_custom_call.1} parent=31 // pred_region
          %p887 = scmp.lt.s32.totalorder %s51, 1
          %s888 = scalar_select %p887, %s51, 1
          %s889 = smul.addr %s888, 4
          %s890 = smul.addr %s889, 4
          %s891 = scalar_lea.vmem %s16, %s890
        $region84: #{tpu_custom_call.1} parent=31 // pred_fallthru
          _
        // Predicated region
        $region85: #{tpu_custom_call.1} parent=31 // pred_check
          %p892 = pneg %p517
        $region86: #{tpu_custom_call.1} parent=31 // pred_check_branch
          %894 = sbr.rel (%p892) target = $region88
        $region87: #{tpu_custom_call.1} parent=31 // pred_region
          %p895 = scmp.lt.s32.totalorder %s51, 1
          %s896 = scalar_select %p895, %s51, 1
          %s897 = scalar_lea.vmem %s17, %s896
        $region88: #{tpu_custom_call.1} parent=31 // pred_fallthru
          _
        // Predicated region
        $region89: #{tpu_custom_call.1} parent=31 // pred_check
          %p898 = pneg %p543
        $region90: #{tpu_custom_call.1} parent=31 // pred_check_branch
          %900 = sbr.rel (%p898) target = $region92
        $region91: #{tpu_custom_call.1} parent=31 // pred_region
          %p901 = scmp.lt.s32.totalorder %s51, 1
          %s902 = scalar_select %p901, %s51, 1
          %s903 = smul.addr %s902, 4
          %s904 = smul.addr %s903, 4
          %s905 = scalar_lea.vmem %s18, %s904
        $region92: #{tpu_custom_call.1} parent=31 // pred_fallthru
          _
        // Predicated region
        $region93: #{tpu_custom_call.1} parent=31 // pred_check
          %p906 = pneg %p569
        $region94: #{tpu_custom_call.1} parent=31 // pred_check_branch
          %908 = sbr.rel (%p906) target = $region96
        $region95: #{tpu_custom_call.1} parent=31 // pred_region
          %p909 = scmp.lt.s32.totalorder %s51, 1
          %s910 = scalar_select %p909, %s51, 1
          %s911 = scalar_lea.vmem %s19, %s910
        $region96: #{tpu_custom_call.1} parent=31 // pred_fallthru
          _
        // Predicated region
        $region97: #{tpu_custom_call.1} parent=31 // pred_check
          %p912 = pneg %p595
        $region98: #{tpu_custom_call.1} parent=31 // pred_check_branch
          %914 = sbr.rel (%p912) target = $region100
        $region99: #{tpu_custom_call.1} parent=31 // pred_region
          %p915 = scmp.lt.s32.totalorder %s51, 1
          %s916 = scalar_select %p915, %s51, 1
          %s917 = smul.addr %s916, 4
          %s918 = smul.addr %s917, 4
          %s919 = scalar_lea.vmem %s20, %s918
        $region100: #{tpu_custom_call.1} parent=31 // pred_fallthru
          _
        // Predicated region
        $region101: #{tpu_custom_call.1} parent=31 // pred_check
          %p920 = pneg %p621
        $region102: #{tpu_custom_call.1} parent=31 // pred_check_branch
          %922 = sbr.rel (%p920) target = $region104
        $region103: #{tpu_custom_call.1} parent=31 // pred_region
          %p923 = scmp.lt.s32.totalorder %s51, 1
          %s924 = scalar_select %p923, %s51, 1
          %s925 = scalar_lea.vmem %s21, %s924
        $region104: #{tpu_custom_call.1} parent=31 // pred_fallthru
          _
      $region32: #{tpu_custom_call.1} parent=5 // pred_fallthru
        _
      %p926 = scmp.le.s32.totalorder 1, %s43
      %p927 = scmp.lt.s32.totalorder %s43, 3
      %p928 = pnand %p926, %p927
      %p929 = pneg %p928
      // Predicated region
      $region105: #{tpu_custom_call.1} parent=5 // pred_check
        _
      $region106: #{tpu_custom_call.1} parent=5 // pred_check_branch
        %931 = sbr.rel (%p928) target = $region108
      $region107: #{tpu_custom_call.1} parent=5 // pred_region
        %s932 = ssub.s32 %s43, 1
        // Predicated region
        $region109: #{tpu_custom_call.1} parent=107 // pred_check
          %p933 = pneg %p81
        $region110: #{tpu_custom_call.1} parent=107 // pred_check_branch
          %935 = sbr.rel (%p933) target = $region112
        $region111: #{tpu_custom_call.1} parent=107 // pred_region
          %936 = dma.done [#allocation4], 256
        $region112: #{tpu_custom_call.1} parent=107 // pred_fallthru
          _
        // Predicated region
        $region113: #{tpu_custom_call.1} parent=107 // pred_check
          %p937 = pneg %p133
        $region114: #{tpu_custom_call.1} parent=107 // pred_check_branch
          %939 = sbr.rel (%p937) target = $region116
        $region115: #{tpu_custom_call.1} parent=107 // pred_region
          %940 = dma.done [#allocation7], 256
        $region116: #{tpu_custom_call.1} parent=107 // pred_fallthru
          _
        // Predicated region
        $region117: #{tpu_custom_call.1} parent=107 // pred_check
          %p941 = pneg %p159
        $region118: #{tpu_custom_call.1} parent=107 // pred_check_branch
          %943 = sbr.rel (%p941) target = $region120
        $region119: #{tpu_custom_call.1} parent=107 // pred_region
          %944 = dma.done [#allocation7], 32
        $region120: #{tpu_custom_call.1} parent=107 // pred_fallthru
          _
        %s945 = sand.u32 %s48, 1
        %s946 = scalar_lea.sflag [#allocation10], %s945
        %s947 = sand.u32 %s172, 1
        %s948 = scalar_lea.vmem [#allocation9], %s947
        // Predicated region
        $region121: #{tpu_custom_call.1} parent=107 // pred_check
          %p949 = pneg %p185
        $region122: #{tpu_custom_call.1} parent=107 // pred_check_branch
          %951 = sbr.rel (%p949) target = $region124
        $region123: #{tpu_custom_call.1} parent=107 // pred_region
          %952 = dma.done %s946, 16
        $region124: #{tpu_custom_call.1} parent=107 // pred_fallthru
          _
        %s953 = sand.u32 %s48, 1
        %s954 = scalar_lea.sflag [#allocation10], %s953
        %s955 = sand.u32 %s198, 1
        %s956 = scalar_lea.vmem [#allocation11], %s955
        // Predicated region
        $region125: #{tpu_custom_call.1} parent=107 // pred_check
          %p957 = pneg %p211
        $region126: #{tpu_custom_call.1} parent=107 // pred_check_branch
          %959 = sbr.rel (%p957) target = $region128
        $region127: #{tpu_custom_call.1} parent=107 // pred_region
          %960 = dma.done %s954, 16
        $region128: #{tpu_custom_call.1} parent=107 // pred_fallthru
          _
        %s961 = sand.u32 %s48, 1
        %s962 = scalar_lea.sflag [#allocation13], %s961
        %s963 = sand.u32 %s250, 1
        %s964 = scalar_lea.vmem [#allocation12], %s963
        // Predicated region
        $region129: #{tpu_custom_call.1} parent=107 // pred_check
          %p965 = pneg %p263
        $region130: #{tpu_custom_call.1} parent=107 // pred_check_branch
          %967 = sbr.rel (%p965) target = $region132
        $region131: #{tpu_custom_call.1} parent=107 // pred_region
          %968 = dma.done %s962, 16
        $region132: #{tpu_custom_call.1} parent=107 // pred_fallthru
          _
        %s969 = sand.u32 %s48, 1
        %s970 = scalar_lea.sflag [#allocation13], %s969
        %s971 = sand.u32 %s276, 1
        %s972 = scalar_lea.vmem [#allocation14], %s971
        // Predicated region
        $region133: #{tpu_custom_call.1} parent=107 // pred_check
          %p973 = pneg %p289
        $region134: #{tpu_custom_call.1} parent=107 // pred_check_branch
          %975 = sbr.rel (%p973) target = $region136
        $region135: #{tpu_custom_call.1} parent=107 // pred_region
          %976 = dma.done %s970, 16
        $region136: #{tpu_custom_call.1} parent=107 // pred_fallthru
          _
        %s977 = sand.u32 %s48, 1
        %s978 = scalar_lea.sflag [#allocation16], %s977
        %s979 = sand.u32 %s302, 1
        %s980 = scalar_lea.vmem [#allocation15], %s979
        // Predicated region
        $region137: #{tpu_custom_call.1} parent=107 // pred_check
          %p981 = pneg %p315
        $region138: #{tpu_custom_call.1} parent=107 // pred_check_branch
          %983 = sbr.rel (%p981) target = $region140
        $region139: #{tpu_custom_call.1} parent=107 // pred_region
          %984 = dma.done %s978, 16
        $region140: #{tpu_custom_call.1} parent=107 // pred_fallthru
          _
        %s985 = sand.u32 %s48, 1
        %s986 = scalar_lea.sflag [#allocation16], %s985
        %s987 = sand.u32 %s354, 1
        %s988 = scalar_lea.vmem [#allocation17], %s987
        // Predicated region
        $region141: #{tpu_custom_call.1} parent=107 // pred_check
          %p989 = pneg %p367
        $region142: #{tpu_custom_call.1} parent=107 // pred_check_branch
          %991 = sbr.rel (%p989) target = $region144
        $region143: #{tpu_custom_call.1} parent=107 // pred_region
          %992 = dma.done %s986, 16
        $region144: #{tpu_custom_call.1} parent=107 // pred_fallthru
          _
        %s993 = sand.u32 %s380, 1
        %s994 = scalar_lea.sflag [#allocation19], %s993
        %s995 = sand.u32 %s380, 1
        %s996 = scalar_lea.vmem [#allocation18], %s995
        // Predicated region
        $region145: #{tpu_custom_call.1} parent=107 // pred_check
          %p997 = pneg %p393
        $region146: #{tpu_custom_call.1} parent=107 // pred_check_branch
          %999 = sbr.rel (%p997) target = $region148
        $region147: #{tpu_custom_call.1} parent=107 // pred_region
          %1000 = dma.done %s994, 16
        $region148: #{tpu_custom_call.1} parent=107 // pred_fallthru
          _
        %p1001 = pneg %p81
        %p1002 = pneg %p78
        %s1003 = smul.u32 2, %s52
        %p1004 = scmp.lt.s32.totalorder %s1003, 1
        %s1005 = scalar_select %p1004, %s1003, 1
        %s1006 = smul.addr %s1005, 8
        %s1007 = scalar_lea.vmem %s1, %s1006
        %p1008 = pneg %p107
        %p1009 = pneg %p104
        %p1010 = pneg %p133
        %p1011 = pneg %p130
        %p1012 = pneg %p159
        %p1013 = pneg %p156
        %s1014 = sand.u32 %s48, 1
        %s1015 = scalar_lea.sflag [#allocation10], %s1014
        %s1016 = sand.u32 %s172, 1
        %s1017 = scalar_lea.vmem [#allocation9], %s1016
        %p1018 = pneg %p185
        %p1019 = pneg %p182
        %s1020 = sand.u32 %s48, 1
        %s1021 = scalar_lea.sflag [#allocation10], %s1020
        %s1022 = sand.u32 %s198, 1
        %s1023 = scalar_lea.vmem [#allocation11], %s1022
        %p1024 = pneg %p211
        %p1025 = pneg %p208
        %p1026 = scmp.lt.s32.totalorder %s53, 1
        %s1027 = scalar_select %p1026, %s53, 1
        %s1028 = smul.addr %s1027, 4
        %s1029 = smul.addr %s1028, 4
        %s1030 = scalar_lea.vmem %s6, %s1029
        %p1031 = pneg %p237
        %p1032 = pneg %p234
        %s1033 = sand.u32 %s48, 1
        %s1034 = scalar_lea.sflag [#allocation13], %s1033
        %s1035 = sand.u32 %s250, 1
        %s1036 = scalar_lea.vmem [#allocation12], %s1035
        %p1037 = pneg %p263
        %p1038 = pneg %p260
        %s1039 = sand.u32 %s48, 1
        %s1040 = scalar_lea.sflag [#allocation13], %s1039
        %s1041 = sand.u32 %s276, 1
        %s1042 = scalar_lea.vmem [#allocation14], %s1041
        %p1043 = pneg %p289
        %p1044 = pneg %p286
        %s1045 = sand.u32 %s48, 1
        %s1046 = scalar_lea.sflag [#allocation16], %s1045
        %s1047 = sand.u32 %s302, 1
        %s1048 = scalar_lea.vmem [#allocation15], %s1047
        %p1049 = pneg %p315
        %p1050 = pneg %p312
        %p1051 = scmp.lt.s32.totalorder %s53, 1
        %s1052 = scalar_select %p1051, %s53, 1
        %s1053 = smul.addr %s1052, 8
        %s1054 = smul.addr %s1053, 4
        %s1055 = scalar_lea.vmem %s10, %s1054
        %p1056 = pneg %p341
        %p1057 = pneg %p338
        %s1058 = sand.u32 %s48, 1
        %s1059 = scalar_lea.sflag [#allocation16], %s1058
        %s1060 = sand.u32 %s354, 1
        %s1061 = scalar_lea.vmem [#allocation17], %s1060
        %p1062 = pneg %p367
        %p1063 = pneg %p364
        %s1064 = sand.u32 %s380, 1
        %s1065 = scalar_lea.sflag [#allocation19], %s1064
        %s1066 = sand.u32 %s380, 1
        %s1067 = scalar_lea.vmem [#allocation18], %s1066
        %p1068 = pneg %p393
        %p1069 = pneg %p390
        %p1070 = scmp.lt.s32.totalorder %s53, 1
        %s1071 = scalar_select %p1070, %s53, 1
        %s1072 = smul.addr %s1071, 8
        %s1073 = scalar_lea.vmem %s13, %s1072
        %p1074 = pneg %p419
        %p1075 = pneg %p416
        %p1076 = scmp.lt.s32.totalorder %s53, 1
        %s1077 = scalar_select %p1076, %s53, 1
        %s1078 = scalar_lea.vmem %s14, %s1077
        %p1079 = pneg %p445
        %p1080 = pneg %p442
        %p1081 = scmp.lt.s32.totalorder %s53, 1
        %s1082 = scalar_select %p1081, %s53, 1
        %s1083 = scalar_lea.vmem %s15, %s1082
        %p1084 = pneg %p471
        %p1085 = pneg %p468
        %p1086 = scmp.lt.s32.totalorder %s53, 1
        %s1087 = scalar_select %p1086, %s53, 1
        %s1088 = smul.addr %s1087, 4
        %s1089 = smul.addr %s1088, 4
        %s1090 = scalar_lea.vmem %s16, %s1089
        %p1091 = pneg %p497
        %p1092 = pneg %p494
        %p1093 = scmp.lt.s32.totalorder %s53, 1
        %s1094 = scalar_select %p1093, %s53, 1
        %s1095 = scalar_lea.vmem %s17, %s1094
        %p1096 = pneg %p523
        %p1097 = pneg %p520
        %p1098 = scmp.lt.s32.totalorder %s53, 1
        %s1099 = scalar_select %p1098, %s53, 1
        %s1100 = smul.addr %s1099, 4
        %s1101 = smul.addr %s1100, 4
        %s1102 = scalar_lea.vmem %s18, %s1101
        %p1103 = pneg %p549
        %p1104 = pneg %p546
        %p1105 = scmp.lt.s32.totalorder %s53, 1
        %s1106 = scalar_select %p1105, %s53, 1
        %s1107 = scalar_lea.vmem %s19, %s1106
        %p1108 = pneg %p575
        %p1109 = pneg %p572
        %p1110 = scmp.lt.s32.totalorder %s53, 1
        %s1111 = scalar_select %p1110, %s53, 1
        %s1112 = smul.addr %s1111, 4
        %s1113 = smul.addr %s1112, 4
        %s1114 = scalar_lea.vmem %s20, %s1113
        %p1115 = pneg %p601
        %p1116 = pneg %p598
        %p1117 = scmp.lt.s32.totalorder %s53, 1
        %s1118 = scalar_select %p1117, %s53, 1
        %s1119 = scalar_lea.vmem %s21, %s1118
        %p1120 = pneg %p627
        %p1121 = pneg %p624
        %p1122 = pneg %p653
        %p1123 = pneg %p650
        %s1124 = smul.u32 2, %s52
        %s1125 = smul.u32 2, %s52
        %p1126 = scmp.lt.s32.totalorder %s1125, 1
        %s1127 = scalar_select %p1126, %s1125, 1
        %s1128 = smul.addr %s1127, 8
        %s1129 = scalar_lea.vmem %s1, %s1128
        %s1130 = smul.u32 2, %s52
        %s1131 = smul.u32 2, %s52
        %s1132 = smul.u32 2, %s52
        %p1133 = scmp.lt.s32.totalorder %s53, 1
        %s1134 = scalar_select %p1133, %s53, 1
        %s1135 = smul.addr %s1134, 4
        %s1136 = smul.addr %s1135, 4
        %s1137 = scalar_lea.vmem %s6, %s1136
        %p1138 = scmp.lt.s32.totalorder %s53, 1
        %s1139 = scalar_select %p1138, %s53, 1
        %s1140 = smul.addr %s1139, 8
        %s1141 = smul.addr %s1140, 4
        %s1142 = scalar_lea.vmem %s10, %s1141
        %p1143 = scmp.lt.s32.totalorder %s53, 1
        %s1144 = scalar_select %p1143, %s53, 1
        %s1145 = smul.addr %s1144, 8
        %s1146 = scalar_lea.vmem %s13, %s1145
        %p1147 = scmp.lt.s32.totalorder %s53, 1
        %s1148 = scalar_select %p1147, %s53, 1
        %s1149 = scalar_lea.vmem %s14, %s1148
        %p1150 = scmp.lt.s32.totalorder %s53, 1
        %s1151 = scalar_select %p1150, %s53, 1
        %s1152 = scalar_lea.vmem %s15, %s1151
        %p1153 = scmp.lt.s32.totalorder %s53, 1
        %s1154 = scalar_select %p1153, %s53, 1
        %s1155 = smul.addr %s1154, 4
        %s1156 = smul.addr %s1155, 4
        %s1157 = scalar_lea.vmem %s16, %s1156
        %p1158 = scmp.lt.s32.totalorder %s53, 1
        %s1159 = scalar_select %p1158, %s53, 1
        %s1160 = scalar_lea.vmem %s17, %s1159
        %p1161 = scmp.lt.s32.totalorder %s53, 1
        %s1162 = scalar_select %p1161, %s53, 1
        %s1163 = smul.addr %s1162, 4
        %s1164 = smul.addr %s1163, 4
        %s1165 = scalar_lea.vmem %s18, %s1164
        %p1166 = scmp.lt.s32.totalorder %s53, 1
        %s1167 = scalar_select %p1166, %s53, 1
        %s1168 = scalar_lea.vmem %s19, %s1167
        %p1169 = scmp.lt.s32.totalorder %s53, 1
        %s1170 = scalar_select %p1169, %s53, 1
        %s1171 = smul.addr %s1170, 4
        %s1172 = smul.addr %s1171, 4
        %s1173 = scalar_lea.vmem %s20, %s1172
        %p1174 = scmp.lt.s32.totalorder %s53, 1
        %s1175 = scalar_select %p1174, %s53, 1
        %s1176 = scalar_lea.vmem %s21, %s1175
        %s1177 = smul.u32 2, %s52
        %p1179 = scmp.eq.s32.totalorder %s53, 0
        // Predicated region
        $region149: #{tpu_custom_call.1} parent=107 // pred_check
          %p1180 = pneg %p1179
        $region150: #{tpu_custom_call.1} parent=107 // pred_check_branch
          %1182 = sbr.rel (%p1180) target = $region152
        $region151: #{tpu_custom_call.1} parent=107 // pred_region
          %v1183 = vld [vmem:[#allocation3] sm:$0xff]
          %v1184 = vld [vmem:[#allocation3 + $0x8] sm:$0xff]
          %vm1185 = vcmask 261120
          %1186 = vst.msk [vmem:[#allocation20] sm:$0xff] %vm1185, %v1183
          %1187 = vst.msk [vmem:[#allocation20 + $0x8] sm:$0xff] %vm1185, %v1184
        $region152: #{tpu_custom_call.1} parent=107 // pred_fallthru
          _
        %v1188 = vld [vmem:[#allocation20] sm:$0xff]
        %v1189 = vld [vmem:[#allocation20 + $0x8] sm:$0xff]
        %v1190 = vld [vmem:[%s1129] sm:$0xff]
        %v1191 = vld [vmem:[%s1129 + $0x8] sm:$0xff]
        %v1192 = vld [vmem:[%s948] sm:$0x1]
        %v1193 = vld [vmem:[%s956] sm:$0x1]
        %v1194 = vld [vmem:[%s1137] sm:$0xf]
        %v1195 = vld [vmem:[%s1137 + $0x4] sm:$0xf]
        %v1196 = vld [vmem:[%s1137 + $0x8] sm:$0xf]
        %v1197 = vld [vmem:[%s1137 + $0xc] sm:$0xf]
        %v1198 = vld [vmem:[%s964] sm:$0x1]
        %v1199 = vld [vmem:[%s972] sm:$0x1]
        %v1200 = vld [vmem:[%s980] sm:$0x1]
        %v1201 = vld [vmem:[%s1142] sm:$0xf]
        %v1202 = vld [vmem:[%s1142 + $0x4] sm:$0xf]
        %v1203 = vld [vmem:[%s1142 + $0x8] sm:$0xf]
        %v1204 = vld [vmem:[%s1142 + $0xc] sm:$0xf]
        %v1205 = vld [vmem:[%s1142 + $0x10] sm:$0xf]
        %v1206 = vld [vmem:[%s1142 + $0x14] sm:$0xf]
        %v1207 = vld [vmem:[%s1142 + $0x18] sm:$0xf]
        %v1208 = vld [vmem:[%s1142 + $0x1c] sm:$0xf]
        %vm1209 = vcmask 261120
        %v1210 = vsel %vm1209, %v1188, 0.0
        %1211 = vadd.xlane.f32.xlu0 %v1210
        %v1212 = vpop.xlane.xlu0 %1211
        %v1213 = vsel %vm1209, %v1189, 0.0
        %1214 = vadd.xlane.f32.xlu0 %v1213
        %v1215 = vpop.xlane.xlu0 %1214
        %v1216 = vrcp.pop 32.0
        %v1217 = vmul.f32 %v1212, %v1216
        %v1218 = vmul.f32 %v1215, %v1216
        %v1219 = vsub.f32 %v1188, %v1217
        %v1220 = vsub.f32 %v1189, %v1218
        %v1221 = vmul.f32 %v1219, %v1219
        %v1222 = vmul.f32 %v1220, %v1220
        %v1223 = vsel %vm1209, %v1221, 0.0
        %1224 = vadd.xlane.f32.xlu0 %v1223
        %v1225 = vpop.xlane.xlu0 %1224
        %v1226 = vsel %vm1209, %v1222, 0.0
        %1227 = vadd.xlane.f32.xlu0 %v1226
        %v1228 = vpop.xlane.xlu0 %1227
        %v1229 = vmul.f32 %v1225, %v1216
        %v1230 = vmul.f32 %v1228, %v1216
        %v1231 = vadd.f32 %v1229, 1e-12
        %v1232 = vadd.f32 %v1230, 1e-12
        %v1233 = vrsqrt.pop %v1231
        %v1234 = vrsqrt.pop %v1232
        %v1235 = vmul.f32 %v1219, %v1233
        %v1236 = vmul.f32 %v1220, %v1234
        %v1238 = vlaneseq
        %v1239 = vshrl.u32 %v1238, 7
        %v1240 = vsub.s32 0, %v1239
        %v1241 = vrot.slane %v1192, %v1240
        %v1243 = vmul.f32 %v1235, %v1241
        %v1244 = vmul.f32 %v1236, %v1241
        %v1246 = vlaneseq
        %v1247 = vshrl.u32 %v1246, 7
        %v1248 = vsub.s32 0, %v1247
        %v1249 = vrot.slane %v1193, %v1248
        %v1251 = vadd.f32 %v1243, %v1249
        %v1252 = vadd.f32 %v1244, %v1249
        %v1253 = vpack.c.bf16 %v1252, %v1251
        %v1255 = vlaneseq
        %v1256 = vshrl.u32 %v1255, 7
        %v1257 = vsub.s32 0, %v1256
        %v1258 = vrot.slane %v1198, %v1257
        %v1264 = vunpack.c.l.b16 %v1194
        %v1265 = vunpack.c.l.b16 %v1195
        %v1266 = vunpack.c.l.b16 %v1196
        %v1267 = vunpack.c.l.b16 %v1197
        %v1268 = vpack.c.b16 %v1265, %v1264
        %v1269 = vpack.c.b16 %v1267, %v1266
        %v1273 = vsel %vm1209, %v1253, 0
        %1275 = vmatprep.subr.bf16.mxu0 0
        %1276 = vmatpush1.bf16.msra.mxu0 0
        %1277 = vmatprep.subr.bf16.mxu0 0
        %1278 = vmatpush1.bf16.msra.mxu0 0
        %1279 = vmatprep.subr.bf16.mxu0 0
        %1280 = vmatpush1.bf16.msra.mxu0 0
        %1281 = vmatprep.subr.bf16.mxu0 0
        %1282 = vmatpush1.bf16.msra.mxu0 0
        %1283 = vmatprep.subr.bf16.mxu0 0
        %1284 = vmatpush1.bf16.msra.mxu0 0
        %1285 = vmatprep.subr.bf16.mxu0 0
        %1286 = vmatpush1.bf16.msra.mxu0 0
        %1287 = vmatprep.subr.bf16.mxu0 0
        %1288 = vmatpush1.bf16.msra.mxu0 %v1269
        %1289 = vmatprep.subr.bf16.mxu0 0
        %1290 = vmatpush1.bf16.msra.mxu0 %v1268
        %1291 = vmatprep.subr.bf16.mxu0 0
        %1292 = vmatpush2.bf16.msra.mxu0 0
        %1293 = vmatprep.subr.bf16.mxu0 0
        %1294 = vmatpush2.bf16.msra.mxu0 0
        %1295 = vmatprep.subr.bf16.mxu0 0
        %1296 = vmatpush2.bf16.msra.mxu0 0
        %1297 = vmatprep.subr.bf16.mxu0 0
        %1298 = vmatpush2.bf16.msra.mxu0 0
        %1299 = vmatprep.subr.bf16.mxu0 0
        %1300 = vmatpush2.bf16.msra.mxu0 0
        %1301 = vmatprep.subr.bf16.mxu0 0
        %1302 = vmatpush2.bf16.msra.mxu0 0
        %1303 = vmatprep.subr.bf16.mxu0 0
        %1304 = vmatpush2.bf16.msra.mxu0 0
        %1305 = vmatprep.subr.bf16.mxu0 0
        %1306 = vmatpush2.bf16.msra.mxu0 0
        %1307 = vmatprep.mubr.bf16.mxu0 0
        %1308 = vmatmul.mubr.bf16.gmra.mxu0 %v1273
        %v1309 = vpop.f32.mrf.mxu0
        %v1310 = vadd.f32 %v1258, %v1309
        %v1311 = vpop.f32.mrf.mxu0
        %v1312 = vpop.f32.mrf.mxu0
        %v1313 = vadd.f32 %v1258, %v1312
        %v1314 = vpop.f32.mrf.mxu0
        %1315 = vdwg.mxu0
        %v1316 = vmax.f32 %v1310, 0.0
        %v1317 = vmax.f32 %v1313, 0.0
        %vm1318 = vcmask 523264
        %v1319 = vsel %vm1318, %v1316, 0.0
        %1320 = vadd.xlane.f32.xlu0 %v1319
        %v1321 = vpop.xlane.xlu0 %1320
        %v1322 = vsel %vm1318, %v1317, 0.0
        %1323 = vadd.xlane.f32.xlu0 %v1322
        %v1324 = vpop.xlane.xlu0 %1323
        %v1325 = vrcp.pop 64.0
        %v1326 = vmul.f32 %v1321, %v1325
        %v1327 = vmul.f32 %v1324, %v1325
        %v1328 = vsub.f32 %v1316, %v1326
        %v1329 = vsub.f32 %v1317, %v1327
        %v1330 = vmul.f32 %v1328, %v1328
        %v1331 = vmul.f32 %v1329, %v1329
        %v1332 = vsel %vm1318, %v1330, 0.0
        %1333 = vadd.xlane.f32.xlu0 %v1332
        %v1334 = vpop.xlane.xlu0 %1333
        %v1335 = vsel %vm1318, %v1331, 0.0
        %1336 = vadd.xlane.f32.xlu0 %v1335
        %v1337 = vpop.xlane.xlu0 %1336
        %v1338 = vmul.f32 %v1334, %v1325
        %v1339 = vmul.f32 %v1337, %v1325
        %v1340 = vadd.f32 %v1338, 1e-12
        %v1341 = vadd.f32 %v1339, 1e-12
        %v1342 = vrsqrt.pop %v1340
        %v1343 = vrsqrt.pop %v1341
        %v1344 = vmul.f32 %v1328, %v1342
        %v1345 = vmul.f32 %v1329, %v1343
        %v1347 = vlaneseq
        %v1348 = vshrl.u32 %v1347, 7
        %v1349 = vsub.s32 0, %v1348
        %v1350 = vrot.slane %v1199, %v1349
        %v1352 = vmul.f32 %v1344, %v1350
        %v1353 = vmul.f32 %v1345, %v1350
        %v1355 = vlaneseq
        %v1356 = vshrl.u32 %v1355, 7
        %v1357 = vsub.s32 0, %v1356
        %v1358 = vrot.slane %v1200, %v1357
        %v1360 = vadd.f32 %v1352, %v1358
        %v1361 = vadd.f32 %v1353, %v1358
        %v1362 = vpack.c.bf16 %v1361, %v1360
        %v1371 = vunpack.c.l.b16 %v1201
        %v1372 = vunpack.c.l.b16 %v1202
        %v1373 = vunpack.c.l.b16 %v1203
        %v1374 = vunpack.c.l.b16 %v1204
        %v1375 = vunpack.c.l.b16 %v1205
        %v1376 = vunpack.c.l.b16 %v1206
        %v1377 = vunpack.c.l.b16 %v1207
        %v1378 = vunpack.c.l.b16 %v1208
        %v1379 = vpack.c.b16 %v1372, %v1371
        %v1380 = vpack.c.b16 %v1374, %v1373
        %v1381 = vpack.c.b16 %v1376, %v1375
        %v1382 = vpack.c.b16 %v1378, %v1377
        %v1388 = vsel %vm1318, %v1362, 0
        %1390 = vmatprep.subr.bf16.mxu0 0
        %1391 = vmatpush1.bf16.msra.mxu0 0
        %1392 = vmatprep.subr.bf16.mxu0 0
        %1393 = vmatpush1.bf16.msra.mxu0 0
        %1394 = vmatprep.subr.bf16.mxu0 0
        %1395 = vmatpush1.bf16.msra.mxu0 0
        %1396 = vmatprep.subr.bf16.mxu0 0
        %1397 = vmatpush1.bf16.msra.mxu0 0
        %1398 = vmatprep.subr.bf16.mxu0 0
        %1399 = vmatpush1.bf16.msra.mxu0 %v1382
        %1400 = vmatprep.subr.bf16.mxu0 0
        %1401 = vmatpush1.bf16.msra.mxu0 %v1381
        %1402 = vmatprep.subr.bf16.mxu0 0
        %1403 = vmatpush1.bf16.msra.mxu0 %v1380
        %1404 = vmatprep.subr.bf16.mxu0 0
        %1405 = vmatpush1.bf16.msra.mxu0 %v1379
        %1406 = vmatprep.subr.bf16.mxu0 0
        %1407 = vmatpush2.bf16.msra.mxu0 0
        %1408 = vmatprep.subr.bf16.mxu0 0
        %1409 = vmatpush2.bf16.msra.mxu0 0
        %1410 = vmatprep.subr.bf16.mxu0 0
        %1411 = vmatpush2.bf16.msra.mxu0 0
        %1412 = vmatprep.subr.bf16.mxu0 0
        %1413 = vmatpush2.bf16.msra.mxu0 0
        %1414 = vmatprep.subr.bf16.mxu0 0
        %1415 = vmatpush2.bf16.msra.mxu0 0
        %1416 = vmatprep.subr.bf16.mxu0 0
        %1417 = vmatpush2.bf16.msra.mxu0 0
        %1418 = vmatprep.subr.bf16.mxu0 0
        %1419 = vmatpush2.bf16.msra.mxu0 0
        %1420 = vmatprep.subr.bf16.mxu0 0
        %1421 = vmatpush2.bf16.msra.mxu0 0
        %1422 = vmatprep.mubr.bf16.mxu0 0
        %1423 = vmatmul.mubr.bf16.gmra.mxu0 %v1388
        %v1424 = vpop.f32.mrf.mxu0
        %v1425 = vadd.f32 0.0, %v1424
        %v1426 = vpop.f32.mrf.mxu0
        %v1427 = vpop.f32.mrf.mxu0
        %v1428 = vadd.f32 0.0, %v1427
        %v1429 = vpop.f32.mrf.mxu0
        %1430 = vdwg.mxu0
        %v1431 = vld [vmem:[%s988] sm:$0x1]
        %v1432 = vld [vmem:[%s996] sm:$0x1]
        %v1433 = vsel %vm1209, %v1425, 0.0
        %1434 = vadd.xlane.f32.xlu0 %v1433
        %v1435 = vpop.xlane.xlu0 %1434
        %v1436 = vsel %vm1209, %v1428, 0.0
        %1437 = vadd.xlane.f32.xlu0 %v1436
        %v1438 = vpop.xlane.xlu0 %1437
        %v1439 = vmul.f32 %v1435, %v1216
        %v1440 = vmul.f32 %v1438, %v1216
        %v1441 = vsub.f32 %v1425, %v1439
        %v1442 = vsub.f32 %v1428, %v1440
        %v1443 = vmul.f32 %v1441, %v1441
        %v1444 = vmul.f32 %v1442, %v1442
        %v1445 = vsel %vm1209, %v1443, 0.0
        %1446 = vadd.xlane.f32.xlu0 %v1445
        %v1447 = vpop.xlane.xlu0 %1446
        %v1448 = vsel %vm1209, %v1444, 0.0
        %1449 = vadd.xlane.f32.xlu0 %v1448
        %v1450 = vpop.xlane.xlu0 %1449
        %v1451 = vmul.f32 %v1447, %v1216
        %v1452 = vmul.f32 %v1450, %v1216
        %v1453 = vadd.f32 %v1451, 1e-12
        %v1454 = vadd.f32 %v1452, 1e-12
        %v1455 = vrsqrt.pop %v1453
        %v1456 = vrsqrt.pop %v1454
        %v1457 = vmul.f32 %v1441, %v1455
        %v1458 = vmul.f32 %v1442, %v1456
        %v1460 = vlaneseq
        %v1461 = vshrl.u32 %v1460, 7
        %v1462 = vsub.s32 0, %v1461
        %v1463 = vrot.slane %v1431, %v1462
        %v1465 = vmul.f32 %v1457, %v1463
        %v1466 = vmul.f32 %v1458, %v1463
        %v1468 = vlaneseq
        %v1469 = vshrl.u32 %v1468, 7
        %v1470 = vsub.s32 0, %v1469
        %v1471 = vrot.slane %v1432, %v1470
        %v1473 = vadd.f32 %v1465, %v1471
        %v1474 = vadd.f32 %v1466, %v1471
        %1476 = vset.pattern.permute.xlu0 0
        %1477 = vperm.xlu0 %1476, %v1190
        %v1478 = vpop.permute.xlu0 %1477
        %1481 = vset.pattern.permute.xlu0 0
        %1482 = vperm.xlu0 %1481, %v1191
        %v1483 = vpop.permute.xlu0 %1482
        %v1485 = vmul.f32 %v1473, %v1478
        %v1486 = vmul.f32 %v1474, %v1483
        %vm1487 = vcmask 254976
        %1488 = vst.msk [vmem:[#allocation2] sm:$0x3] %vm1487, 0.0
        %1489 = vst.msk [vmem:[#allocation2 + $0x10] sm:$0x3] %vm1487, 0.0
        %1490 = vst.msk [vmem:[#allocation2 + $0xa] sm:$0x3] %vm1487, 0.0
        %1491 = vst.msk [vmem:[#allocation2 + $0x1a] sm:$0x3] %vm1487, 0.0
        %1492 = vst.msk [vmem:[#allocation2 + $0x2] sm:$0xff] %vm1209, %v1485
        %1493 = vst.msk [vmem:[#allocation2 + $0x12] sm:$0xff] %vm1209, %v1486
        %v1494 = vld [vmem:[#allocation2] sm:$0xff]
        %v1495 = vld [vmem:[#allocation2 + $0x8] sm:$0xf]
        %v1496 = vld [vmem:[#allocation2 + $0x10] sm:$0xff]
        %v1497 = vld [vmem:[#allocation2 + $0x18] sm:$0xf]
        %v1498 = vld [vmem:[%s1146] sm:$0x1f]
        %v1499 = vlaneseq
        %v1500 = vshrl.u32 %v1499, 7
        %v1501 = vsub.s32 0, %v1500
        %v1502 = vrot.slane %v1498, %v1501
        %v1503 = vmul.f32 %v1494, %v1502
        %v1504 = vmul.f32 %v1496, %v1502
        %v1505 = vadd.f32 %v1485, %v1503
        %v1506 = vadd.f32 %v1486, %v1504
        %v1507 = vlaneseq
        %v1508 = vshrl.u32 %v1507, 7
        %v1509 = vsub.s32 1, %v1508
        %v1510 = vrot.slane %v1498, %v1509
        %v1511 = vmul.f32 %v1494, %v1510
        %v1512 = vmul.f32 %v1495, %v1510
        %v1513 = vmul.f32 %v1496, %v1510
        %v1514 = vmul.f32 %v1497, %v1510
        %vm1519 = vcmask 1046528
        %v1520 = vrot.slane %v1511, 1
        %v1521 = vrot.slane %v1512, 1
        %v1522 = vsel %vm1519, %v1520, %v1521
        %v1523 = vrot.slane %v1513, 1
        %v1524 = vrot.slane %v1514, 1
        %v1525 = vsel %vm1519, %v1523, %v1524
        %v1528 = vadd.f32 %v1505, %v1522
        %v1529 = vadd.f32 %v1506, %v1525
        %v1530 = vlaneseq
        %v1531 = vshrl.u32 %v1530, 7
        %v1532 = vsub.s32 2, %v1531
        %v1533 = vrot.slane %v1498, %v1532
        %v1534 = vmul.f32 %v1494, %v1533
        %v1535 = vmul.f32 %v1495, %v1533
        %v1536 = vmul.f32 %v1496, %v1533
        %v1537 = vmul.f32 %v1497, %v1533
        %vm1542 = vcmask 1045504
        %v1543 = vrot.slane %v1534, 2
        %v1544 = vrot.slane %v1535, 2
        %v1545 = vsel %vm1542, %v1543, %v1544
        %v1546 = vrot.slane %v1536, 2
        %v1547 = vrot.slane %v1537, 2
        %v1548 = vsel %vm1542, %v1546, %v1547
        %v1551 = vadd.f32 %v1528, %v1545
        %v1552 = vadd.f32 %v1529, %v1548
        %v1553 = vlaneseq
        %v1554 = vshrl.u32 %v1553, 7
        %v1555 = vsub.s32 3, %v1554
        %v1556 = vrot.slane %v1498, %v1555
        %v1557 = vmul.f32 %v1494, %v1556
        %v1558 = vmul.f32 %v1495, %v1556
        %v1559 = vmul.f32 %v1496, %v1556
        %v1560 = vmul.f32 %v1497, %v1556
        %vm1565 = vcmask 1044480
        %v1566 = vrot.slane %v1557, 3
        %v1567 = vrot.slane %v1558, 3
        %v1568 = vsel %vm1565, %v1566, %v1567
        %v1569 = vrot.slane %v1559, 3
        %v1570 = vrot.slane %v1560, 3
        %v1571 = vsel %vm1565, %v1569, %v1570
        %v1574 = vadd.f32 %v1551, %v1568
        %v1575 = vadd.f32 %v1552, %v1571
        %v1576 = vlaneseq
        %v1577 = vshrl.u32 %v1576, 7
        %v1578 = vsub.s32 4, %v1577
        %v1579 = vrot.slane %v1498, %v1578
        %v1580 = vmul.f32 %v1494, %v1579
        %v1581 = vmul.f32 %v1495, %v1579
        %v1582 = vmul.f32 %v1496, %v1579
        %v1583 = vmul.f32 %v1497, %v1579
        %vm1588 = vcmask 1043456
        %v1589 = vrot.slane %v1580, 4
        %v1590 = vrot.slane %v1581, 4
        %v1591 = vsel %vm1588, %v1589, %v1590
        %v1592 = vrot.slane %v1582, 4
        %v1593 = vrot.slane %v1583, 4
        %v1594 = vsel %vm1588, %v1592, %v1593
        %v1597 = vadd.f32 %v1574, %v1591
        %v1598 = vadd.f32 %v1575, %v1594
        %v1599 = vmul.f32 %v1597, %v1478
        %v1600 = vmul.f32 %v1598, %v1483
        %v1601 = vadd.f32 %v1188, %v1599
        %v1602 = vadd.f32 %v1189, %v1600
        %v1603 = vld [vmem:[%s1149] sm:$0x1]
        %v1604 = vld [vmem:[%s1152] sm:$0x1]
        %v1605 = vsel %vm1209, %v1601, 0.0
        %1606 = vadd.xlane.f32.xlu0 %v1605
        %v1607 = vpop.xlane.xlu0 %1606
        %v1608 = vsel %vm1209, %v1602, 0.0
        %1609 = vadd.xlane.f32.xlu0 %v1608
        %v1610 = vpop.xlane.xlu0 %1609
        %v1611 = vmul.f32 %v1607, %v1216
        %v1612 = vmul.f32 %v1610, %v1216
        %v1613 = vsub.f32 %v1601, %v1611
        %v1614 = vsub.f32 %v1602, %v1612
        %v1615 = vmul.f32 %v1613, %v1613
        %v1616 = vmul.f32 %v1614, %v1614
        %v1617 = vsel %vm1209, %v1615, 0.0
        %1618 = vadd.xlane.f32.xlu0 %v1617
        %v1619 = vpop.xlane.xlu0 %1618
        %v1620 = vsel %vm1209, %v1616, 0.0
        %1621 = vadd.xlane.f32.xlu0 %v1620
        %v1622 = vpop.xlane.xlu0 %1621
        %v1623 = vmul.f32 %v1619, %v1216
        %v1624 = vmul.f32 %v1622, %v1216
        %v1625 = vadd.f32 %v1623, 1e-12
        %v1626 = vadd.f32 %v1624, 1e-12
        %v1627 = vrsqrt.pop %v1625
        %v1628 = vrsqrt.pop %v1626
        %v1629 = vmul.f32 %v1613, %v1627
        %v1630 = vmul.f32 %v1614, %v1628
        %v1632 = vlaneseq
        %v1633 = vshrl.u32 %v1632, 7
        %v1634 = vsub.s32 0, %v1633
        %v1635 = vrot.slane %v1603, %v1634
        %v1637 = vmul.f32 %v1629, %v1635
        %v1638 = vmul.f32 %v1630, %v1635
        %v1640 = vlaneseq
        %v1641 = vshrl.u32 %v1640, 7
        %v1642 = vsub.s32 0, %v1641
        %v1643 = vrot.slane %v1604, %v1642
        %v1645 = vadd.f32 %v1637, %v1643
        %v1646 = vadd.f32 %v1638, %v1643
        %v1647 = vpack.c.bf16 %v1646, %v1645
        %v1648 = vld [vmem:[%s1157] sm:$0xf]
        %v1649 = vld [vmem:[%s1157 + $0x4] sm:$0xf]
        %v1650 = vld [vmem:[%s1157 + $0x8] sm:$0xf]
        %v1651 = vld [vmem:[%s1157 + $0xc] sm:$0xf]
        %v1652 = vld [vmem:[%s1160] sm:$0x1]
        %v1654 = vlaneseq
        %v1655 = vshrl.u32 %v1654, 7
        %v1656 = vsub.s32 0, %v1655
        %v1657 = vrot.slane %v1652, %v1656
        %v1663 = vunpack.c.l.b16 %v1648
        %v1664 = vunpack.c.l.b16 %v1649
        %v1665 = vunpack.c.l.b16 %v1650
        %v1666 = vunpack.c.l.b16 %v1651
        %v1667 = vpack.c.b16 %v1664, %v1663
        %v1668 = vpack.c.b16 %v1666, %v1665
        %v1672 = vsel %vm1209, %v1647, 0
        %1674 = vmatprep.subr.bf16.mxu0 0
        %1675 = vmatpush1.bf16.msra.mxu0 0
        %1676 = vmatprep.subr.bf16.mxu0 0
        %1677 = vmatpush1.bf16.msra.mxu0 0
        %1678 = vmatprep.subr.bf16.mxu0 0
        %1679 = vmatpush1.bf16.msra.mxu0 0
        %1680 = vmatprep.subr.bf16.mxu0 0
        %1681 = vmatpush1.bf16.msra.mxu0 0
        %1682 = vmatprep.subr.bf16.mxu0 0
        %1683 = vmatpush1.bf16.msra.mxu0 0
        %1684 = vmatprep.subr.bf16.mxu0 0
        %1685 = vmatpush1.bf16.msra.mxu0 0
        %1686 = vmatprep.subr.bf16.mxu0 0
        %1687 = vmatpush1.bf16.msra.mxu0 %v1668
        %1688 = vmatprep.subr.bf16.mxu0 0
        %1689 = vmatpush1.bf16.msra.mxu0 %v1667
        %1690 = vmatprep.subr.bf16.mxu0 0
        %1691 = vmatpush2.bf16.msra.mxu0 0
        %1692 = vmatprep.subr.bf16.mxu0 0
        %1693 = vmatpush2.bf16.msra.mxu0 0
        %1694 = vmatprep.subr.bf16.mxu0 0
        %1695 = vmatpush2.bf16.msra.mxu0 0
        %1696 = vmatprep.subr.bf16.mxu0 0
        %1697 = vmatpush2.bf16.msra.mxu0 0
        %1698 = vmatprep.subr.bf16.mxu0 0
        %1699 = vmatpush2.bf16.msra.mxu0 0
        %1700 = vmatprep.subr.bf16.mxu0 0
        %1701 = vmatpush2.bf16.msra.mxu0 0
        %1702 = vmatprep.subr.bf16.mxu0 0
        %1703 = vmatpush2.bf16.msra.mxu0 0
        %1704 = vmatprep.subr.bf16.mxu0 0
        %1705 = vmatpush2.bf16.msra.mxu0 0
        %1706 = vmatprep.mubr.bf16.mxu0 0
        %1707 = vmatmul.mubr.bf16.gmra.mxu0 %v1672
        %v1708 = vpop.f32.mrf.mxu0
        %v1709 = vadd.f32 %v1657, %v1708
        %v1710 = vpop.f32.mrf.mxu0
        %v1711 = vpop.f32.mrf.mxu0
        %v1712 = vadd.f32 %v1657, %v1711
        %v1713 = vpop.f32.mrf.mxu0
        %1714 = vdwg.mxu0
        %v1715 = vmul.f32 %v1709, 0.35355338
        %v1716 = vmul.f32 %v1712, 0.35355338
        %v1717 = vld [vmem:[#allocation6] sm:$0xf]
        %v1718 = vld [vmem:[#allocation6 + $0x4] sm:$0xf]
        %v1719 = vld [vmem:[#allocation6 + $0x8] sm:$0xf]
        %v1720 = vld [vmem:[#allocation6 + $0xc] sm:$0xf]
        %v1721 = vld [vmem:[%s1165] sm:$0xf]
        %v1722 = vld [vmem:[%s1165 + $0x4] sm:$0xf]
        %v1723 = vld [vmem:[%s1165 + $0x8] sm:$0xf]
        %v1724 = vld [vmem:[%s1165 + $0xc] sm:$0xf]
        %v1725 = vld [vmem:[%s1168] sm:$0x1]
        %v1727 = vlaneseq
        %v1728 = vshrl.u32 %v1727, 7
        %v1729 = vsub.s32 0, %v1728
        %v1730 = vrot.slane %v1725, %v1729
        %v1736 = vunpack.c.l.b16 %v1717
        %v1737 = vunpack.c.l.b16 %v1718
        %v1738 = vunpack.c.l.b16 %v1719
        %v1739 = vunpack.c.l.b16 %v1720
        %v1740 = vpack.c.b16 %v1737, %v1736
        %v1741 = vpack.c.b16 %v1739, %v1738
        %v1746 = vunpack.c.l.b16 %v1721
        %v1747 = vunpack.c.l.b16 %v1722
        %v1748 = vunpack.c.l.b16 %v1723
        %v1749 = vunpack.c.l.b16 %v1724
        %v1750 = vpack.c.b16 %v1747, %v1746
        %v1751 = vpack.c.b16 %v1749, %v1748
        %v1755 = vsel %vm1209, %v1740, 0
        %v1758 = vsel %vm1209, %v1741, 0
        %1760 = vmatprep.subr.bf16.mxu0 0
        %1761 = vmatpush1.bf16.msra.mxu0 0
        %1762 = vmatprep.subr.bf16.mxu0 0
        %1763 = vmatpush1.bf16.msra.mxu0 0
        %1764 = vmatprep.subr.bf16.mxu0 0
        %1765 = vmatpush1.bf16.msra.mxu0 0
        %1766 = vmatprep.subr.bf16.mxu0 0
        %1767 = vmatpush1.bf16.msra.mxu0 0
        %1768 = vmatprep.subr.bf16.mxu0 0
        %1769 = vmatpush1.bf16.msra.mxu0 0
        %1770 = vmatprep.subr.bf16.mxu0 0
        %1771 = vmatpush1.bf16.msra.mxu0 0
        %1772 = vmatprep.subr.bf16.mxu0 0
        %1773 = vmatpush1.bf16.msra.mxu0 %v1751
        %1774 = vmatprep.subr.bf16.mxu0 0
        %1775 = vmatpush1.bf16.msra.mxu0 %v1750
        %1776 = vmatprep.subr.bf16.mxu0 0
        %1777 = vmatpush2.bf16.msra.mxu0 0
        %1778 = vmatprep.subr.bf16.mxu0 0
        %1779 = vmatpush2.bf16.msra.mxu0 0
        %1780 = vmatprep.subr.bf16.mxu0 0
        %1781 = vmatpush2.bf16.msra.mxu0 0
        %1782 = vmatprep.subr.bf16.mxu0 0
        %1783 = vmatpush2.bf16.msra.mxu0 0
        %1784 = vmatprep.subr.bf16.mxu0 0
        %1785 = vmatpush2.bf16.msra.mxu0 0
        %1786 = vmatprep.subr.bf16.mxu0 0
        %1787 = vmatpush2.bf16.msra.mxu0 0
        %1788 = vmatprep.subr.bf16.mxu0 0
        %1789 = vmatpush2.bf16.msra.mxu0 0
        %1790 = vmatprep.subr.bf16.mxu0 0
        %1791 = vmatpush2.bf16.msra.mxu0 0
        %1792 = vmatprep.mubr.bf16.mxu0 0
        %1793 = vmatmul.mubr.bf16.gmra.mxu0 %v1755
        %v1794 = vpop.f32.mrf.mxu0
        %v1795 = vadd.f32 %v1730, %v1794
        %v1796 = vpop.f32.mrf.mxu0
        %v1797 = vpop.f32.mrf.mxu0
        %v1798 = vadd.f32 %v1730, %v1797
        %v1799 = vpop.f32.mrf.mxu0
        %1800 = vmatprep.mubr.bf16.mxu0 0
        %1801 = vmatmul.mubr.bf16.gmra.mxu0 %v1758
        %v1802 = vpop.f32.mrf.mxu0
        %v1803 = vadd.f32 %v1730, %v1802
        %v1804 = vpop.f32.mrf.mxu0
        %v1805 = vpop.f32.mrf.mxu0
        %v1806 = vadd.f32 %v1730, %v1805
        %v1807 = vpop.f32.mrf.mxu0
        %1808 = vdwg.mxu0
        %v1809 = vpack.c.bf16 %v1798, %v1795
        %v1810 = vpack.c.bf16 %v1806, %v1803
        %v1811 = vld [vmem:[%s1173] sm:$0xf]
        %v1812 = vld [vmem:[%s1173 + $0x4] sm:$0xf]
        %v1813 = vld [vmem:[%s1173 + $0x8] sm:$0xf]
        %v1814 = vld [vmem:[%s1173 + $0xc] sm:$0xf]
        %v1815 = vld [vmem:[%s1176] sm:$0x1]
        %v1816 = vld [vmem:[#allocation8] sm:$0x1]
        %vm1817 = vcmp.eq.f32.partialorder %v1816, 0.0
        %v1819 = vlaneseq
        %v1820 = vshrl.u32 %v1819, 7
        %v1821 = vsub.s32 0, %v1820
        %v1822 = vrot.slane %v1815, %v1821
        %v1824 = vadd.f32 %v1822, 0.0
        %v1825 = vpack.c.bf16 %v1715, %v1715
        %vm1826 = vcmask 64512
        %v1828 = vsel %vm1826, %v1825, 0
        %v1831 = vsel %vm1826, %v1809, 0
        %1833 = vmatprep.subr.bf16.mxu0 0
        %1834 = vmatpush1.bf16.xpose.msra.mxu0 0
        %1835 = vmatprep.subr.bf16.mxu0 0
        %1836 = vmatpush1.bf16.xpose.msra.mxu0 0
        %1837 = vmatprep.subr.bf16.mxu0 0
        %1838 = vmatpush1.bf16.xpose.msra.mxu0 0
        %1839 = vmatprep.subr.bf16.mxu0 0
        %1840 = vmatpush1.bf16.xpose.msra.mxu0 0
        %1841 = vmatprep.subr.bf16.mxu0 0
        %1842 = vmatpush1.bf16.xpose.msra.mxu0 0
        %1843 = vmatprep.subr.bf16.mxu0 0
        %1844 = vmatpush1.bf16.xpose.msra.mxu0 0
        %1845 = vmatprep.subr.bf16.mxu0 0
        %1846 = vmatpush1.bf16.xpose.msra.mxu0 0
        %1847 = vmatprep.subr.bf16.mxu0 0
        %1848 = vmatpush1.bf16.xpose.msra.mxu0 %v1831
        %1849 = vmatprep.subr.bf16.mxu0 0
        %1850 = vmatpush2.bf16.xpose.msra.mxu0 0
        %1851 = vmatprep.subr.bf16.mxu0 0
        %1852 = vmatpush2.bf16.xpose.msra.mxu0 0
        %1853 = vmatprep.subr.bf16.mxu0 0
        %1854 = vmatpush2.bf16.xpose.msra.mxu0 0
        %1855 = vmatprep.subr.bf16.mxu0 0
        %1856 = vmatpush2.bf16.xpose.msra.mxu0 0
        %1857 = vmatprep.subr.bf16.mxu0 0
        %1858 = vmatpush2.bf16.xpose.msra.mxu0 0
        %1859 = vmatprep.subr.bf16.mxu0 0
        %1860 = vmatpush2.bf16.xpose.msra.mxu0 0
        %1861 = vmatprep.subr.bf16.mxu0 0
        %1862 = vmatpush2.bf16.xpose.msra.mxu0 0
        %1863 = vmatprep.subr.bf16.mxu0 0
        %1864 = vmatpush2.bf16.xpose.msra.mxu0 0
        %1865 = vmatprep.mubr.bf16.mxu0 0
        %1866 = vmatmul.mubr.bf16.gmra.mxu0 %v1828
        %v1867 = vpop.f32.mrf.mxu0
        %v1868 = vadd.f32 0.0, %v1867
        %v1869 = vpop.f32.mrf.mxu0
        %v1870 = vpop.f32.mrf.mxu0
        %v1871 = vpop.f32.mrf.mxu0
        %1872 = vdwg.mxu0
        %v1873 = vsel %vm1817, 1, 0
        %v1874 = vlaneseq
        %v1875 = vshrl.u32 %v1874, 7
        %v1876 = vsub.s32 0, %v1875
        %v1877 = vrot.slane %v1873, %v1876
        %vm1878 = vcmp.eq.s32.totalorder %v1877, 1
        %v1879 = vsel %vm1878, -3.4028235e+38, %v1868
        %vm1880 = vcmask 130048
        %v1881 = vsel %vm1880, %v1879, -inf
        %1882 = vmax.xlane.f32.xlu0 %v1881
        %v1883 = vpop.xlane.xlu0 %1882
        %v1884 = vsub.f32 %v1879, %v1883
        %v1885 = vmul.f32 %v1884, 1.442695
        %v1886 = vpow.pop %v1885
        %v1887 = vsel %vm1880, %v1886, 0.0
        %1888 = vadd.xlane.f32.xlu0 %v1887
        %v1889 = vpop.xlane.xlu0 %1888
        %v1890 = vrcp.pop %v1889
        %v1891 = vmul.f32 %v1886, %v1890
        %v1892 = vsel %vm1878, 0.0, %v1891
        %v1893 = vpack.c.bf16 %v1892, %v1892
        %1895 = vrot.lane.b32.xlu0 %v1809, 96
        %v1896 = vpop.permute.xlu0 %1895
        %v1899 = vsel %vm1880, %v1893, 0
        %1901 = vmatprep.subr.bf16.mxu0 0
        %1902 = vmatpush1.bf16.msra.mxu0 0
        %1903 = vmatprep.subr.bf16.mxu0 0
        %1904 = vmatpush1.bf16.msra.mxu0 0
        %1905 = vmatprep.subr.bf16.mxu0 0
        %1906 = vmatpush1.bf16.msra.mxu0 0
        %1907 = vmatprep.subr.bf16.mxu0 0
        %1908 = vmatpush1.bf16.msra.mxu0 0
        %1909 = vmatprep.subr.bf16.mxu0 0
        %1910 = vmatpush1.bf16.msra.mxu0 0
        %1911 = vmatprep.subr.bf16.mxu0 0
        %1912 = vmatpush1.bf16.msra.mxu0 0
        %1913 = vmatprep.subr.bf16.mxu0 0
        %1914 = vmatpush1.bf16.msra.mxu0 0
        %1915 = vmatprep.subr.bf16.mxu0 0
        %1916 = vmatpush1.bf16.msra.mxu0 %v1896
        %1917 = vmatprep.subr.bf16.mxu0 0
        %1918 = vmatpush2.bf16.msra.mxu0 0
        %1919 = vmatprep.subr.bf16.mxu0 0
        %1920 = vmatpush2.bf16.msra.mxu0 0
        %1921 = vmatprep.subr.bf16.mxu0 0
        %1922 = vmatpush2.bf16.msra.mxu0 0
        %1923 = vmatprep.subr.bf16.mxu0 0
        %1924 = vmatpush2.bf16.msra.mxu0 0
        %1925 = vmatprep.subr.bf16.mxu0 0
        %1926 = vmatpush2.bf16.msra.mxu0 0
        %1927 = vmatprep.subr.bf16.mxu0 0
        %1928 = vmatpush2.bf16.msra.mxu0 0
        %1929 = vmatprep.subr.bf16.mxu0 0
        %1930 = vmatpush2.bf16.msra.mxu0 0
        %1931 = vmatprep.subr.bf16.mxu0 0
        %1932 = vmatpush2.bf16.msra.mxu0 0
        %1933 = vmatprep.mubr.bf16.mxu0 0
        %1934 = vmatmul.mubr.bf16.gmra.mxu0 %v1899
        %v1935 = vpop.f32.mrf.mxu0
        %v1936 = vadd.f32 0.0, %v1935
        %v1937 = vpop.f32.mrf.mxu0
        %v1938 = vpop.f32.mrf.mxu0
        %v1939 = vpop.f32.mrf.mxu0
        %1940 = vdwg.mxu0
        %v1941 = vpack.c.bf16 %v1936, %v1936
        %v1943 = vsel %vm1826, %v1941, 0
        %v1946 = vsel %vm1588, %v1811, 0
        %1948 = vmatprep.subr.bf16.mxu0 0
        %1949 = vmatpush1.bf16.msra.mxu0 0
        %1950 = vmatprep.subr.bf16.mxu0 0
        %1951 = vmatpush1.bf16.msra.mxu0 0
        %1952 = vmatprep.subr.bf16.mxu0 0
        %1953 = vmatpush1.bf16.msra.mxu0 0
        %1954 = vmatprep.subr.bf16.mxu0 0
        %1955 = vmatpush1.bf16.msra.mxu0 0
        %1956 = vmatprep.subr.bf16.mxu0 0
        %1957 = vmatpush1.bf16.msra.mxu0 0
        %1958 = vmatprep.subr.bf16.mxu0 0
        %1959 = vmatpush1.bf16.msra.mxu0 0
        %1960 = vmatprep.subr.bf16.mxu0 0
        %1961 = vmatpush1.bf16.msra.mxu0 0
        %1962 = vmatprep.subr.bf16.mxu0 0
        %1963 = vmatpush1.bf16.msra.mxu0 %v1946
        %1964 = vmatprep.subr.bf16.mxu0 0
        %1965 = vmatpush2.bf16.msra.mxu0 0
        %1966 = vmatprep.subr.bf16.mxu0 0
        %1967 = vmatpush2.bf16.msra.mxu0 0
        %1968 = vmatprep.subr.bf16.mxu0 0
        %1969 = vmatpush2.bf16.msra.mxu0 0
        %1970 = vmatprep.subr.bf16.mxu0 0
        %1971 = vmatpush2.bf16.msra.mxu0 0
        %1972 = vmatprep.subr.bf16.mxu0 0
        %1973 = vmatpush2.bf16.msra.mxu0 0
        %1974 = vmatprep.subr.bf16.mxu0 0
        %1975 = vmatpush2.bf16.msra.mxu0 0
        %1976 = vmatprep.subr.bf16.mxu0 0
        %1977 = vmatpush2.bf16.msra.mxu0 0
        %1978 = vmatprep.subr.bf16.mxu0 0
        %1979 = vmatpush2.bf16.msra.mxu0 0
        %1980 = vmatprep.mubr.bf16.mxu0 0
        %1981 = vmatmul.mubr.bf16.gmra.mxu0 %v1943
        %v1982 = vpop.f32.mrf.mxu0
        %v1983 = vadd.f32 0.0, %v1982
        %v1984 = vpop.f32.mrf.mxu0
        %v1985 = vpop.f32.mrf.mxu0
        %v1986 = vpop.f32.mrf.mxu0
        %1987 = vdwg.mxu0
        %v1988 = vadd.f32 %v1824, %v1983
        %1990 = vrot.lane.b32.xlu0 %v1825, 120
        %v1991 = vpop.permute.xlu0 %1990
        %1992 = vrot.lane.b32.xlu0 %v1809, 120
        %v1993 = vpop.permute.xlu0 %1992
        %v1995 = vsel %vm1826, %v1991, 0
        %v1998 = vsel %vm1826, %v1993, 0
        %2000 = vmatprep.subr.bf16.mxu0 0
        %2001 = vmatpush1.bf16.xpose.msra.mxu0 0
        %2002 = vmatprep.subr.bf16.mxu0 0
        %2003 = vmatpush1.bf16.xpose.msra.mxu0 0
        %2004 = vmatprep.subr.bf16.mxu0 0
        %2005 = vmatpush1.bf16.xpose.msra.mxu0 0
        %2006 = vmatprep.subr.bf16.mxu0 0
        %2007 = vmatpush1.bf16.xpose.msra.mxu0 0
        %2008 = vmatprep.subr.bf16.mxu0 0
        %2009 = vmatpush1.bf16.xpose.msra.mxu0 0
        %2010 = vmatprep.subr.bf16.mxu0 0
        %2011 = vmatpush1.bf16.xpose.msra.mxu0 0
        %2012 = vmatprep.subr.bf16.mxu0 0
        %2013 = vmatpush1.bf16.xpose.msra.mxu0 0
        %2014 = vmatprep.subr.bf16.mxu0 0
        %2015 = vmatpush1.bf16.xpose.msra.mxu0 %v1998
        %2016 = vmatprep.subr.bf16.mxu0 0
        %2017 = vmatpush2.bf16.xpose.msra.mxu0 0
        %2018 = vmatprep.subr.bf16.mxu0 0
        %2019 = vmatpush2.bf16.xpose.msra.mxu0 0
        %2020 = vmatprep.subr.bf16.mxu0 0
        %2021 = vmatpush2.bf16.xpose.msra.mxu0 0
        %2022 = vmatprep.subr.bf16.mxu0 0
        %2023 = vmatpush2.bf16.xpose.msra.mxu0 0
        %2024 = vmatprep.subr.bf16.mxu0 0
        %2025 = vmatpush2.bf16.xpose.msra.mxu0 0
        %2026 = vmatprep.subr.bf16.mxu0 0
        %2027 = vmatpush2.bf16.xpose.msra.mxu0 0
        %2028 = vmatprep.subr.bf16.mxu0 0
        %2029 = vmatpush2.bf16.xpose.msra.mxu0 0
        %2030 = vmatprep.subr.bf16.mxu0 0
        %2031 = vmatpush2.bf16.xpose.msra.mxu0 0
        %2032 = vmatprep.mubr.bf16.mxu0 0
        %2033 = vmatmul.mubr.bf16.gmra.mxu0 %v1995
        %v2034 = vpop.f32.mrf.mxu0
        %v2035 = vadd.f32 0.0, %v2034
        %v2036 = vpop.f32.mrf.mxu0
        %v2037 = vpop.f32.mrf.mxu0
        %v2038 = vpop.f32.mrf.mxu0
        %2039 = vdwg.mxu0
        %v2040 = vsel %vm1878, -3.4028235e+38, %v2035
        %v2041 = vsel %vm1880, %v2040, -inf
        %2042 = vmax.xlane.f32.xlu0 %v2041
        %v2043 = vpop.xlane.xlu0 %2042
        %v2044 = vsub.f32 %v2040, %v2043
        %v2045 = vmul.f32 %v2044, 1.442695
        %v2046 = vpow.pop %v2045
        %v2047 = vsel %vm1880, %v2046, 0.0
        %2048 = vadd.xlane.f32.xlu0 %v2047
        %v2049 = vpop.xlane.xlu0 %2048
        %v2050 = vrcp.pop %v2049
        %v2051 = vmul.f32 %v2046, %v2050
        %v2052 = vsel %vm1878, 0.0, %v2051
        %v2053 = vpack.c.bf16 %v2052, %v2052
        %2054 = vrot.lane.b32.xlu0 %v1809, 88
        %v2055 = vpop.permute.xlu0 %2054
        %v2058 = vsel %vm1880, %v2053, 0
        %2060 = vmatprep.subr.bf16.mxu0 0
        %2061 = vmatpush1.bf16.msra.mxu0 0
        %2062 = vmatprep.subr.bf16.mxu0 0
        %2063 = vmatpush1.bf16.msra.mxu0 0
        %2064 = vmatprep.subr.bf16.mxu0 0
        %2065 = vmatpush1.bf16.msra.mxu0 0
        %2066 = vmatprep.subr.bf16.mxu0 0
        %2067 = vmatpush1.bf16.msra.mxu0 0
        %2068 = vmatprep.subr.bf16.mxu0 0
        %2069 = vmatpush1.bf16.msra.mxu0 0
        %2070 = vmatprep.subr.bf16.mxu0 0
        %2071 = vmatpush1.bf16.msra.mxu0 0
        %2072 = vmatprep.subr.bf16.mxu0 0
        %2073 = vmatpush1.bf16.msra.mxu0 0
        %2074 = vmatprep.subr.bf16.mxu0 0
        %2075 = vmatpush1.bf16.msra.mxu0 %v2055
        %2076 = vmatprep.subr.bf16.mxu0 0
        %2077 = vmatpush2.bf16.msra.mxu0 0
        %2078 = vmatprep.subr.bf16.mxu0 0
        %2079 = vmatpush2.bf16.msra.mxu0 0
        %2080 = vmatprep.subr.bf16.mxu0 0
        %2081 = vmatpush2.bf16.msra.mxu0 0
        %2082 = vmatprep.subr.bf16.mxu0 0
        %2083 = vmatpush2.bf16.msra.mxu0 0
        %2084 = vmatprep.subr.bf16.mxu0 0
        %2085 = vmatpush2.bf16.msra.mxu0 0
        %2086 = vmatprep.subr.bf16.mxu0 0
        %2087 = vmatpush2.bf16.msra.mxu0 0
        %2088 = vmatprep.subr.bf16.mxu0 0
        %2089 = vmatpush2.bf16.msra.mxu0 0
        %2090 = vmatprep.subr.bf16.mxu0 0
        %2091 = vmatpush2.bf16.msra.mxu0 0
        %2092 = vmatprep.mubr.bf16.mxu0 0
        %2093 = vmatmul.mubr.bf16.gmra.mxu0 %v2058
        %v2094 = vpop.f32.mrf.mxu0
        %v2095 = vadd.f32 0.0, %v2094
        %v2096 = vpop.f32.mrf.mxu0
        %v2097 = vpop.f32.mrf.mxu0
        %v2098 = vpop.f32.mrf.mxu0
        %2099 = vdwg.mxu0
        %v2100 = vpack.c.bf16 %v2095, %v2095
        %v2102 = vsel %vm1826, %v2100, 0
        %v2105 = vsel %vm1588, %v1812, 0
        %2107 = vmatprep.subr.bf16.mxu0 0
        %2108 = vmatpush1.bf16.msra.mxu0 0
        %2109 = vmatprep.subr.bf16.mxu0 0
        %2110 = vmatpush1.bf16.msra.mxu0 0
        %2111 = vmatprep.subr.bf16.mxu0 0
        %2112 = vmatpush1.bf16.msra.mxu0 0
        %2113 = vmatprep.subr.bf16.mxu0 0
        %2114 = vmatpush1.bf16.msra.mxu0 0
        %2115 = vmatprep.subr.bf16.mxu0 0
        %2116 = vmatpush1.bf16.msra.mxu0 0
        %2117 = vmatprep.subr.bf16.mxu0 0
        %2118 = vmatpush1.bf16.msra.mxu0 0
        %2119 = vmatprep.subr.bf16.mxu0 0
        %2120 = vmatpush1.bf16.msra.mxu0 0
        %2121 = vmatprep.subr.bf16.mxu0 0
        %2122 = vmatpush1.bf16.msra.mxu0 %v2105
        %2123 = vmatprep.subr.bf16.mxu0 0
        %2124 = vmatpush2.bf16.msra.mxu0 0
        %2125 = vmatprep.subr.bf16.mxu0 0
        %2126 = vmatpush2.bf16.msra.mxu0 0
        %2127 = vmatprep.subr.bf16.mxu0 0
        %2128 = vmatpush2.bf16.msra.mxu0 0
        %2129 = vmatprep.subr.bf16.mxu0 0
        %2130 = vmatpush2.bf16.msra.mxu0 0
        %2131 = vmatprep.subr.bf16.mxu0 0
        %2132 = vmatpush2.bf16.msra.mxu0 0
        %2133 = vmatprep.subr.bf16.mxu0 0
        %2134 = vmatpush2.bf16.msra.mxu0 0
        %2135 = vmatprep.subr.bf16.mxu0 0
        %2136 = vmatpush2.bf16.msra.mxu0 0
        %2137 = vmatprep.subr.bf16.mxu0 0
        %2138 = vmatpush2.bf16.msra.mxu0 0
        %2139 = vmatprep.mubr.bf16.mxu0 0
        %2140 = vmatmul.mubr.bf16.gmra.mxu0 %v2102
        %v2141 = vpop.f32.mrf.mxu0
        %v2142 = vadd.f32 0.0, %v2141
        %v2143 = vpop.f32.mrf.mxu0
        %v2144 = vpop.f32.mrf.mxu0
        %v2145 = vpop.f32.mrf.mxu0
        %2146 = vdwg.mxu0
        %v2147 = vadd.f32 %v1988, %v2142
        %2148 = vrot.lane.b32.xlu0 %v1825, 112
        %v2149 = vpop.permute.xlu0 %2148
        %2150 = vrot.lane.b32.xlu0 %v1809, 112
        %v2151 = vpop.permute.xlu0 %2150
        %v2153 = vsel %vm1826, %v2149, 0
        %v2156 = vsel %vm1826, %v2151, 0
        %2158 = vmatprep.subr.bf16.mxu0 0
        %2159 = vmatpush1.bf16.xpose.msra.mxu0 0
        %2160 = vmatprep.subr.bf16.mxu0 0
        %2161 = vmatpush1.bf16.xpose.msra.mxu0 0
        %2162 = vmatprep.subr.bf16.mxu0 0
        %2163 = vmatpush1.bf16.xpose.msra.mxu0 0
        %2164 = vmatprep.subr.bf16.mxu0 0
        %2165 = vmatpush1.bf16.xpose.msra.mxu0 0
        %2166 = vmatprep.subr.bf16.mxu0 0
        %2167 = vmatpush1.bf16.xpose.msra.mxu0 0
        %2168 = vmatprep.subr.bf16.mxu0 0
        %2169 = vmatpush1.bf16.xpose.msra.mxu0 0
        %2170 = vmatprep.subr.bf16.mxu0 0
        %2171 = vmatpush1.bf16.xpose.msra.mxu0 0
        %2172 = vmatprep.subr.bf16.mxu0 0
        %2173 = vmatpush1.bf16.xpose.msra.mxu0 %v2156
        %2174 = vmatprep.subr.bf16.mxu0 0
        %2175 = vmatpush2.bf16.xpose.msra.mxu0 0
        %2176 = vmatprep.subr.bf16.mxu0 0
        %2177 = vmatpush2.bf16.xpose.msra.mxu0 0
        %2178 = vmatprep.subr.bf16.mxu0 0
        %2179 = vmatpush2.bf16.xpose.msra.mxu0 0
        %2180 = vmatprep.subr.bf16.mxu0 0
        %2181 = vmatpush2.bf16.xpose.msra.mxu0 0
        %2182 = vmatprep.subr.bf16.mxu0 0
        %2183 = vmatpush2.bf16.xpose.msra.mxu0 0
        %2184 = vmatprep.subr.bf16.mxu0 0
        %2185 = vmatpush2.bf16.xpose.msra.mxu0 0
        %2186 = vmatprep.subr.bf16.mxu0 0
        %2187 = vmatpush2.bf16.xpose.msra.mxu0 0
        %2188 = vmatprep.subr.bf16.mxu0 0
        %2189 = vmatpush2.bf16.xpose.msra.mxu0 0
        %2190 = vmatprep.mubr.bf16.mxu0 0
        %2191 = vmatmul.mubr.bf16.gmra.mxu0 %v2153
        %v2192 = vpop.f32.mrf.mxu0
        %v2193 = vadd.f32 0.0, %v2192
        %v2194 = vpop.f32.mrf.mxu0
        %v2195 = vpop.f32.mrf.mxu0
        %v2196 = vpop.f32.mrf.mxu0
        %2197 = vdwg.mxu0
        %v2198 = vsel %vm1878, -3.4028235e+38, %v2193
        %v2199 = vsel %vm1880, %v2198, -inf
        %2200 = vmax.xlane.f32.xlu0 %v2199
        %v2201 = vpop.xlane.xlu0 %2200
        %v2202 = vsub.f32 %v2198, %v2201
        %v2203 = vmul.f32 %v2202, 1.442695
        %v2204 = vpow.pop %v2203
        %v2205 = vsel %vm1880, %v2204, 0.0
        %2206 = vadd.xlane.f32.xlu0 %v2205
        %v2207 = vpop.xlane.xlu0 %2206
        %v2208 = vrcp.pop %v2207
        %v2209 = vmul.f32 %v2204, %v2208
        %v2210 = vsel %vm1878, 0.0, %v2209
        %v2211 = vpack.c.bf16 %v2210, %v2210
        %2212 = vrot.lane.b32.xlu0 %v1809, 80
        %v2213 = vpop.permute.xlu0 %2212
        %v2216 = vsel %vm1880, %v2211, 0
        %2218 = vmatprep.subr.bf16.mxu0 0
        %2219 = vmatpush1.bf16.msra.mxu0 0
        %2220 = vmatprep.subr.bf16.mxu0 0
        %2221 = vmatpush1.bf16.msra.mxu0 0
        %2222 = vmatprep.subr.bf16.mxu0 0
        %2223 = vmatpush1.bf16.msra.mxu0 0
        %2224 = vmatprep.subr.bf16.mxu0 0
        %2225 = vmatpush1.bf16.msra.mxu0 0
        %2226 = vmatprep.subr.bf16.mxu0 0
        %2227 = vmatpush1.bf16.msra.mxu0 0
        %2228 = vmatprep.subr.bf16.mxu0 0
        %2229 = vmatpush1.bf16.msra.mxu0 0
        %2230 = vmatprep.subr.bf16.mxu0 0
        %2231 = vmatpush1.bf16.msra.mxu0 0
        %2232 = vmatprep.subr.bf16.mxu0 0
        %2233 = vmatpush1.bf16.msra.mxu0 %v2213
        %2234 = vmatprep.subr.bf16.mxu0 0
        %2235 = vmatpush2.bf16.msra.mxu0 0
        %2236 = vmatprep.subr.bf16.mxu0 0
        %2237 = vmatpush2.bf16.msra.mxu0 0
        %2238 = vmatprep.subr.bf16.mxu0 0
        %2239 = vmatpush2.bf16.msra.mxu0 0
        %2240 = vmatprep.subr.bf16.mxu0 0
        %2241 = vmatpush2.bf16.msra.mxu0 0
        %2242 = vmatprep.subr.bf16.mxu0 0
        %2243 = vmatpush2.bf16.msra.mxu0 0
        %2244 = vmatprep.subr.bf16.mxu0 0
        %2245 = vmatpush2.bf16.msra.mxu0 0
        %2246 = vmatprep.subr.bf16.mxu0 0
        %2247 = vmatpush2.bf16.msra.mxu0 0
        %2248 = vmatprep.subr.bf16.mxu0 0
        %2249 = vmatpush2.bf16.msra.mxu0 0
        %2250 = vmatprep.mubr.bf16.mxu0 0
        %2251 = vmatmul.mubr.bf16.gmra.mxu0 %v2216
        %v2252 = vpop.f32.mrf.mxu0
        %v2253 = vadd.f32 0.0, %v2252
        %v2254 = vpop.f32.mrf.mxu0
        %v2255 = vpop.f32.mrf.mxu0
        %v2256 = vpop.f32.mrf.mxu0
        %2257 = vdwg.mxu0
        %v2258 = vpack.c.bf16 %v2253, %v2253
        %v2260 = vsel %vm1826, %v2258, 0
        %v2263 = vsel %vm1588, %v1813, 0
        %2265 = vmatprep.subr.bf16.mxu0 0
        %2266 = vmatpush1.bf16.msra.mxu0 0
        %2267 = vmatprep.subr.bf16.mxu0 0
        %2268 = vmatpush1.bf16.msra.mxu0 0
        %2269 = vmatprep.subr.bf16.mxu0 0
        %2270 = vmatpush1.bf16.msra.mxu0 0
        %2271 = vmatprep.subr.bf16.mxu0 0
        %2272 = vmatpush1.bf16.msra.mxu0 0
        %2273 = vmatprep.subr.bf16.mxu0 0
        %2274 = vmatpush1.bf16.msra.mxu0 0
        %2275 = vmatprep.subr.bf16.mxu0 0
        %2276 = vmatpush1.bf16.msra.mxu0 0
        %2277 = vmatprep.subr.bf16.mxu0 0
        %2278 = vmatpush1.bf16.msra.mxu0 0
        %2279 = vmatprep.subr.bf16.mxu0 0
        %2280 = vmatpush1.bf16.msra.mxu0 %v2263
        %2281 = vmatprep.subr.bf16.mxu0 0
        %2282 = vmatpush2.bf16.msra.mxu0 0
        %2283 = vmatprep.subr.bf16.mxu0 0
        %2284 = vmatpush2.bf16.msra.mxu0 0
        %2285 = vmatprep.subr.bf16.mxu0 0
        %2286 = vmatpush2.bf16.msra.mxu0 0
        %2287 = vmatprep.subr.bf16.mxu0 0
        %2288 = vmatpush2.bf16.msra.mxu0 0
        %2289 = vmatprep.subr.bf16.mxu0 0
        %2290 = vmatpush2.bf16.msra.mxu0 0
        %2291 = vmatprep.subr.bf16.mxu0 0
        %2292 = vmatpush2.bf16.msra.mxu0 0
        %2293 = vmatprep.subr.bf16.mxu0 0
        %2294 = vmatpush2.bf16.msra.mxu0 0
        %2295 = vmatprep.subr.bf16.mxu0 0
        %2296 = vmatpush2.bf16.msra.mxu0 0
        %2297 = vmatprep.mubr.bf16.mxu0 0
        %2298 = vmatmul.mubr.bf16.gmra.mxu0 %v2260
        %v2299 = vpop.f32.mrf.mxu0
        %v2300 = vadd.f32 0.0, %v2299
        %v2301 = vpop.f32.mrf.mxu0
        %v2302 = vpop.f32.mrf.mxu0
        %v2303 = vpop.f32.mrf.mxu0
        %2304 = vdwg.mxu0
        %v2305 = vadd.f32 %v2147, %v2300
        %2306 = vrot.lane.b32.xlu0 %v1825, 104
        %v2307 = vpop.permute.xlu0 %2306
        %2308 = vrot.lane.b32.xlu0 %v1809, 104
        %v2309 = vpop.permute.xlu0 %2308
        %v2311 = vsel %vm1826, %v2307, 0
        %v2314 = vsel %vm1826, %v2309, 0
        %2316 = vmatprep.subr.bf16.mxu0 0
        %2317 = vmatpush1.bf16.xpose.msra.mxu0 0
        %2318 = vmatprep.subr.bf16.mxu0 0
        %2319 = vmatpush1.bf16.xpose.msra.mxu0 0
        %2320 = vmatprep.subr.bf16.mxu0 0
        %2321 = vmatpush1.bf16.xpose.msra.mxu0 0
        %2322 = vmatprep.subr.bf16.mxu0 0
        %2323 = vmatpush1.bf16.xpose.msra.mxu0 0
        %2324 = vmatprep.subr.bf16.mxu0 0
        %2325 = vmatpush1.bf16.xpose.msra.mxu0 0
        %2326 = vmatprep.subr.bf16.mxu0 0
        %2327 = vmatpush1.bf16.xpose.msra.mxu0 0
        %2328 = vmatprep.subr.bf16.mxu0 0
        %2329 = vmatpush1.bf16.xpose.msra.mxu0 0
        %2330 = vmatprep.subr.bf16.mxu0 0
        %2331 = vmatpush1.bf16.xpose.msra.mxu0 %v2314
        %2332 = vmatprep.subr.bf16.mxu0 0
        %2333 = vmatpush2.bf16.xpose.msra.mxu0 0
        %2334 = vmatprep.subr.bf16.mxu0 0
        %2335 = vmatpush2.bf16.xpose.msra.mxu0 0
        %2336 = vmatprep.subr.bf16.mxu0 0
        %2337 = vmatpush2.bf16.xpose.msra.mxu0 0
        %2338 = vmatprep.subr.bf16.mxu0 0
        %2339 = vmatpush2.bf16.xpose.msra.mxu0 0
        %2340 = vmatprep.subr.bf16.mxu0 0
        %2341 = vmatpush2.bf16.xpose.msra.mxu0 0
        %2342 = vmatprep.subr.bf16.mxu0 0
        %2343 = vmatpush2.bf16.xpose.msra.mxu0 0
        %2344 = vmatprep.subr.bf16.mxu0 0
        %2345 = vmatpush2.bf16.xpose.msra.mxu0 0
        %2346 = vmatprep.subr.bf16.mxu0 0
        %2347 = vmatpush2.bf16.xpose.msra.mxu0 0
        %2348 = vmatprep.mubr.bf16.mxu0 0
        %2349 = vmatmul.mubr.bf16.gmra.mxu0 %v2311
        %v2350 = vpop.f32.mrf.mxu0
        %v2351 = vadd.f32 0.0, %v2350
        %v2352 = vpop.f32.mrf.mxu0
        %v2353 = vpop.f32.mrf.mxu0
        %v2354 = vpop.f32.mrf.mxu0
        %2355 = vdwg.mxu0
        %v2356 = vsel %vm1878, -3.4028235e+38, %v2351
        %v2357 = vsel %vm1880, %v2356, -inf
        %2358 = vmax.xlane.f32.xlu0 %v2357
        %v2359 = vpop.xlane.xlu0 %2358
        %v2360 = vsub.f32 %v2356, %v2359
        %v2361 = vmul.f32 %v2360, 1.442695
        %v2362 = vpow.pop %v2361
        %v2363 = vsel %vm1880, %v2362, 0.0
        %2364 = vadd.xlane.f32.xlu0 %v2363
        %v2365 = vpop.xlane.xlu0 %2364
        %v2366 = vrcp.pop %v2365
        %v2367 = vmul.f32 %v2362, %v2366
        %v2368 = vsel %vm1878, 0.0, %v2367
        %v2369 = vpack.c.bf16 %v2368, %v2368
        %2370 = vrot.lane.b32.xlu0 %v1809, 72
        %v2371 = vpop.permute.xlu0 %2370
        %v2374 = vsel %vm1880, %v2369, 0
        %2376 = vmatprep.subr.bf16.mxu0 0
        %2377 = vmatpush1.bf16.msra.mxu0 0
        %2378 = vmatprep.subr.bf16.mxu0 0
        %2379 = vmatpush1.bf16.msra.mxu0 0
        %2380 = vmatprep.subr.bf16.mxu0 0
        %2381 = vmatpush1.bf16.msra.mxu0 0
        %2382 = vmatprep.subr.bf16.mxu0 0
        %2383 = vmatpush1.bf16.msra.mxu0 0
        %2384 = vmatprep.subr.bf16.mxu0 0
        %2385 = vmatpush1.bf16.msra.mxu0 0
        %2386 = vmatprep.subr.bf16.mxu0 0
        %2387 = vmatpush1.bf16.msra.mxu0 0
        %2388 = vmatprep.subr.bf16.mxu0 0
        %2389 = vmatpush1.bf16.msra.mxu0 0
        %2390 = vmatprep.subr.bf16.mxu0 0
        %2391 = vmatpush1.bf16.msra.mxu0 %v2371
        %2392 = vmatprep.subr.bf16.mxu0 0
        %2393 = vmatpush2.bf16.msra.mxu0 0
        %2394 = vmatprep.subr.bf16.mxu0 0
        %2395 = vmatpush2.bf16.msra.mxu0 0
        %2396 = vmatprep.subr.bf16.mxu0 0
        %2397 = vmatpush2.bf16.msra.mxu0 0
        %2398 = vmatprep.subr.bf16.mxu0 0
        %2399 = vmatpush2.bf16.msra.mxu0 0
        %2400 = vmatprep.subr.bf16.mxu0 0
        %2401 = vmatpush2.bf16.msra.mxu0 0
        %2402 = vmatprep.subr.bf16.mxu0 0
        %2403 = vmatpush2.bf16.msra.mxu0 0
        %2404 = vmatprep.subr.bf16.mxu0 0
        %2405 = vmatpush2.bf16.msra.mxu0 0
        %2406 = vmatprep.subr.bf16.mxu0 0
        %2407 = vmatpush2.bf16.msra.mxu0 0
        %2408 = vmatprep.mubr.bf16.mxu0 0
        %2409 = vmatmul.mubr.bf16.gmra.mxu0 %v2374
        %v2410 = vpop.f32.mrf.mxu0
        %v2411 = vadd.f32 0.0, %v2410
        %v2412 = vpop.f32.mrf.mxu0
        %v2413 = vpop.f32.mrf.mxu0
        %v2414 = vpop.f32.mrf.mxu0
        %2415 = vdwg.mxu0
        %v2416 = vpack.c.bf16 %v2411, %v2411
        %v2418 = vsel %vm1826, %v2416, 0
        %v2421 = vsel %vm1588, %v1814, 0
        %2423 = vmatprep.subr.bf16.mxu0 0
        %2424 = vmatpush1.bf16.msra.mxu0 0
        %2425 = vmatprep.subr.bf16.mxu0 0
        %2426 = vmatpush1.bf16.msra.mxu0 0
        %2427 = vmatprep.subr.bf16.mxu0 0
        %2428 = vmatpush1.bf16.msra.mxu0 0
        %2429 = vmatprep.subr.bf16.mxu0 0
        %2430 = vmatpush1.bf16.msra.mxu0 0
        %2431 = vmatprep.subr.bf16.mxu0 0
        %2432 = vmatpush1.bf16.msra.mxu0 0
        %2433 = vmatprep.subr.bf16.mxu0 0
        %2434 = vmatpush1.bf16.msra.mxu0 0
        %2435 = vmatprep.subr.bf16.mxu0 0
        %2436 = vmatpush1.bf16.msra.mxu0 0
        %2437 = vmatprep.subr.bf16.mxu0 0
        %2438 = vmatpush1.bf16.msra.mxu0 %v2421
        %2439 = vmatprep.subr.bf16.mxu0 0
        %2440 = vmatpush2.bf16.msra.mxu0 0
        %2441 = vmatprep.subr.bf16.mxu0 0
        %2442 = vmatpush2.bf16.msra.mxu0 0
        %2443 = vmatprep.subr.bf16.mxu0 0
        %2444 = vmatpush2.bf16.msra.mxu0 0
        %2445 = vmatprep.subr.bf16.mxu0 0
        %2446 = vmatpush2.bf16.msra.mxu0 0
        %2447 = vmatprep.subr.bf16.mxu0 0
        %2448 = vmatpush2.bf16.msra.mxu0 0
        %2449 = vmatprep.subr.bf16.mxu0 0
        %2450 = vmatpush2.bf16.msra.mxu0 0
        %2451 = vmatprep.subr.bf16.mxu0 0
        %2452 = vmatpush2.bf16.msra.mxu0 0
        %2453 = vmatprep.subr.bf16.mxu0 0
        %2454 = vmatpush2.bf16.msra.mxu0 0
        %2455 = vmatprep.mubr.bf16.mxu0 0
        %2456 = vmatmul.mubr.bf16.gmra.mxu0 %v2418
        %v2457 = vpop.f32.mrf.mxu0
        %v2458 = vadd.f32 0.0, %v2457
        %v2459 = vpop.f32.mrf.mxu0
        %v2460 = vpop.f32.mrf.mxu0
        %v2461 = vpop.f32.mrf.mxu0
        %2462 = vdwg.mxu0
        %v2463 = vadd.f32 %v2305, %v2458
        %v2464 = vadd.f32 %v1601, %v2463
        %2465 = vst.msk [vmem:[#allocation20] sm:$0xff] %vm1209, %v2464
        %s2466 = scalar_lea.vmem [#allocation8], 1
        %v2467 = vld [vmem:[%s2466] sm:$0x1]
        %vm2468 = vcmp.eq.f32.partialorder %v2467, 0.0
        %v2469 = vpack.c.bf16 %v1716, %v1716
        %v2471 = vsel %vm1826, %v2469, 0
        %v2474 = vsel %vm1826, %v1810, 0
        %2476 = vmatprep.subr.bf16.mxu0 0
        %2477 = vmatpush1.bf16.xpose.msra.mxu0 0
        %2478 = vmatprep.subr.bf16.mxu0 0
        %2479 = vmatpush1.bf16.xpose.msra.mxu0 0
        %2480 = vmatprep.subr.bf16.mxu0 0
        %2481 = vmatpush1.bf16.xpose.msra.mxu0 0
        %2482 = vmatprep.subr.bf16.mxu0 0
        %2483 = vmatpush1.bf16.xpose.msra.mxu0 0
        %2484 = vmatprep.subr.bf16.mxu0 0
        %2485 = vmatpush1.bf16.xpose.msra.mxu0 0
        %2486 = vmatprep.subr.bf16.mxu0 0
        %2487 = vmatpush1.bf16.xpose.msra.mxu0 0
        %2488 = vmatprep.subr.bf16.mxu0 0
        %2489 = vmatpush1.bf16.xpose.msra.mxu0 0
        %2490 = vmatprep.subr.bf16.mxu0 0
        %2491 = vmatpush1.bf16.xpose.msra.mxu0 %v2474
        %2492 = vmatprep.subr.bf16.mxu0 0
        %2493 = vmatpush2.bf16.xpose.msra.mxu0 0
        %2494 = vmatprep.subr.bf16.mxu0 0
        %2495 = vmatpush2.bf16.xpose.msra.mxu0 0
        %2496 = vmatprep.subr.bf16.mxu0 0
        %2497 = vmatpush2.bf16.xpose.msra.mxu0 0
        %2498 = vmatprep.subr.bf16.mxu0 0
        %2499 = vmatpush2.bf16.xpose.msra.mxu0 0
        %2500 = vmatprep.subr.bf16.mxu0 0
        %2501 = vmatpush2.bf16.xpose.msra.mxu0 0
        %2502 = vmatprep.subr.bf16.mxu0 0
        %2503 = vmatpush2.bf16.xpose.msra.mxu0 0
        %2504 = vmatprep.subr.bf16.mxu0 0
        %2505 = vmatpush2.bf16.xpose.msra.mxu0 0
        %2506 = vmatprep.subr.bf16.mxu0 0
        %2507 = vmatpush2.bf16.xpose.msra.mxu0 0
        %2508 = vmatprep.mubr.bf16.mxu0 0
        %2509 = vmatmul.mubr.bf16.gmra.mxu0 %v2471
        %v2510 = vpop.f32.mrf.mxu0
        %v2511 = vadd.f32 0.0, %v2510
        %v2512 = vpop.f32.mrf.mxu0
        %v2513 = vpop.f32.mrf.mxu0
        %v2514 = vpop.f32.mrf.mxu0
        %2515 = vdwg.mxu0
        %v2516 = vsel %vm2468, 1, 0
        %v2517 = vlaneseq
        %v2518 = vshrl.u32 %v2517, 7
        %v2519 = vsub.s32 0, %v2518
        %v2520 = vrot.slane %v2516, %v2519
        %vm2521 = vcmp.eq.s32.totalorder %v2520, 1
        %v2522 = vsel %vm2521, -3.4028235e+38, %v2511
        %v2523 = vsel %vm1880, %v2522, -inf
        %2524 = vmax.xlane.f32.xlu0 %v2523
        %v2525 = vpop.xlane.xlu0 %2524
        %v2526 = vsub.f32 %v2522, %v2525
        %v2527 = vmul.f32 %v2526, 1.442695
        %v2528 = vpow.pop %v2527
        %v2529 = vsel %vm1880, %v2528, 0.0
        %2530 = vadd.xlane.f32.xlu0 %v2529
        %v2531 = vpop.xlane.xlu0 %2530
        %v2532 = vrcp.pop %v2531
        %v2533 = vmul.f32 %v2528, %v2532
        %v2534 = vsel %vm2521, 0.0, %v2533
        %v2535 = vpack.c.bf16 %v2534, %v2534
        %2537 = vrot.lane.b32.xlu0 %v1810, 96
        %v2538 = vpop.permute.xlu0 %2537
        %v2541 = vsel %vm1880, %v2535, 0
        %2543 = vmatprep.subr.bf16.mxu0 0
        %2544 = vmatpush1.bf16.msra.mxu0 0
        %2545 = vmatprep.subr.bf16.mxu0 0
        %2546 = vmatpush1.bf16.msra.mxu0 0
        %2547 = vmatprep.subr.bf16.mxu0 0
        %2548 = vmatpush1.bf16.msra.mxu0 0
        %2549 = vmatprep.subr.bf16.mxu0 0
        %2550 = vmatpush1.bf16.msra.mxu0 0
        %2551 = vmatprep.subr.bf16.mxu0 0
        %2552 = vmatpush1.bf16.msra.mxu0 0
        %2553 = vmatprep.subr.bf16.mxu0 0
        %2554 = vmatpush1.bf16.msra.mxu0 0
        %2555 = vmatprep.subr.bf16.mxu0 0
        %2556 = vmatpush1.bf16.msra.mxu0 0
        %2557 = vmatprep.subr.bf16.mxu0 0
        %2558 = vmatpush1.bf16.msra.mxu0 %v2538
        %2559 = vmatprep.subr.bf16.mxu0 0
        %2560 = vmatpush2.bf16.msra.mxu0 0
        %2561 = vmatprep.subr.bf16.mxu0 0
        %2562 = vmatpush2.bf16.msra.mxu0 0
        %2563 = vmatprep.subr.bf16.mxu0 0
        %2564 = vmatpush2.bf16.msra.mxu0 0
        %2565 = vmatprep.subr.bf16.mxu0 0
        %2566 = vmatpush2.bf16.msra.mxu0 0
        %2567 = vmatprep.subr.bf16.mxu0 0
        %2568 = vmatpush2.bf16.msra.mxu0 0
        %2569 = vmatprep.subr.bf16.mxu0 0
        %2570 = vmatpush2.bf16.msra.mxu0 0
        %2571 = vmatprep.subr.bf16.mxu0 0
        %2572 = vmatpush2.bf16.msra.mxu0 0
        %2573 = vmatprep.subr.bf16.mxu0 0
        %2574 = vmatpush2.bf16.msra.mxu0 0
        %2575 = vmatprep.mubr.bf16.mxu0 0
        %2576 = vmatmul.mubr.bf16.gmra.mxu0 %v2541
        %v2577 = vpop.f32.mrf.mxu0
        %v2578 = vadd.f32 0.0, %v2577
        %v2579 = vpop.f32.mrf.mxu0
        %v2580 = vpop.f32.mrf.mxu0
        %v2581 = vpop.f32.mrf.mxu0
        %2582 = vdwg.mxu0
        %v2583 = vpack.c.bf16 %v2578, %v2578
        %v2585 = vsel %vm1826, %v2583, 0
        %2587 = vmatprep.subr.bf16.mxu0 0
        %2588 = vmatpush1.bf16.msra.mxu0 0
        %2589 = vmatprep.subr.bf16.mxu0 0
        %2590 = vmatpush1.bf16.msra.mxu0 0
        %2591 = vmatprep.subr.bf16.mxu0 0
        %2592 = vmatpush1.bf16.msra.mxu0 0
        %2593 = vmatprep.subr.bf16.mxu0 0
        %2594 = vmatpush1.bf16.msra.mxu0 0
        %2595 = vmatprep.subr.bf16.mxu0 0
        %2596 = vmatpush1.bf16.msra.mxu0 0
        %2597 = vmatprep.subr.bf16.mxu0 0
        %2598 = vmatpush1.bf16.msra.mxu0 0
        %2599 = vmatprep.subr.bf16.mxu0 0
        %2600 = vmatpush1.bf16.msra.mxu0 0
        %2601 = vmatprep.subr.bf16.mxu0 0
        %2602 = vmatpush1.bf16.msra.mxu0 %v1946
        %2603 = vmatprep.subr.bf16.mxu0 0
        %2604 = vmatpush2.bf16.msra.mxu0 0
        %2605 = vmatprep.subr.bf16.mxu0 0
        %2606 = vmatpush2.bf16.msra.mxu0 0
        %2607 = vmatprep.subr.bf16.mxu0 0
        %2608 = vmatpush2.bf16.msra.mxu0 0
        %2609 = vmatprep.subr.bf16.mxu0 0
        %2610 = vmatpush2.bf16.msra.mxu0 0
        %2611 = vmatprep.subr.bf16.mxu0 0
        %2612 = vmatpush2.bf16.msra.mxu0 0
        %2613 = vmatprep.subr.bf16.mxu0 0
        %2614 = vmatpush2.bf16.msra.mxu0 0
        %2615 = vmatprep.subr.bf16.mxu0 0
        %2616 = vmatpush2.bf16.msra.mxu0 0
        %2617 = vmatprep.subr.bf16.mxu0 0
        %2618 = vmatpush2.bf16.msra.mxu0 0
        %2619 = vmatprep.mubr.bf16.mxu0 0
        %2620 = vmatmul.mubr.bf16.gmra.mxu0 %v2585
        %v2621 = vpop.f32.mrf.mxu0
        %v2622 = vadd.f32 0.0, %v2621
        %v2623 = vpop.f32.mrf.mxu0
        %v2624 = vpop.f32.mrf.mxu0
        %v2625 = vpop.f32.mrf.mxu0
        %2626 = vdwg.mxu0
        %v2627 = vadd.f32 %v1824, %v2622
        %2629 = vrot.lane.b32.xlu0 %v2469, 120
        %v2630 = vpop.permute.xlu0 %2629
        %2631 = vrot.lane.b32.xlu0 %v1810, 120
        %v2632 = vpop.permute.xlu0 %2631
        %v2634 = vsel %vm1826, %v2630, 0
        %v2637 = vsel %vm1826, %v2632, 0
        %2639 = vmatprep.subr.bf16.mxu0 0
        %2640 = vmatpush1.bf16.xpose.msra.mxu0 0
        %2641 = vmatprep.subr.bf16.mxu0 0
        %2642 = vmatpush1.bf16.xpose.msra.mxu0 0
        %2643 = vmatprep.subr.bf16.mxu0 0
        %2644 = vmatpush1.bf16.xpose.msra.mxu0 0
        %2645 = vmatprep.subr.bf16.mxu0 0
        %2646 = vmatpush1.bf16.xpose.msra.mxu0 0
        %2647 = vmatprep.subr.bf16.mxu0 0
        %2648 = vmatpush1.bf16.xpose.msra.mxu0 0
        %2649 = vmatprep.subr.bf16.mxu0 0
        %2650 = vmatpush1.bf16.xpose.msra.mxu0 0
        %2651 = vmatprep.subr.bf16.mxu0 0
        %2652 = vmatpush1.bf16.xpose.msra.mxu0 0
        %2653 = vmatprep.subr.bf16.mxu0 0
        %2654 = vmatpush1.bf16.xpose.msra.mxu0 %v2637
        %2655 = vmatprep.subr.bf16.mxu0 0
        %2656 = vmatpush2.bf16.xpose.msra.mxu0 0
        %2657 = vmatprep.subr.bf16.mxu0 0
        %2658 = vmatpush2.bf16.xpose.msra.mxu0 0
        %2659 = vmatprep.subr.bf16.mxu0 0
        %2660 = vmatpush2.bf16.xpose.msra.mxu0 0
        %2661 = vmatprep.subr.bf16.mxu0 0
        %2662 = vmatpush2.bf16.xpose.msra.mxu0 0
        %2663 = vmatprep.subr.bf16.mxu0 0
        %2664 = vmatpush2.bf16.xpose.msra.mxu0 0
        %2665 = vmatprep.subr.bf16.mxu0 0
        %2666 = vmatpush2.bf16.xpose.msra.mxu0 0
        %2667 = vmatprep.subr.bf16.mxu0 0
        %2668 = vmatpush2.bf16.xpose.msra.mxu0 0
        %2669 = vmatprep.subr.bf16.mxu0 0
        %2670 = vmatpush2.bf16.xpose.msra.mxu0 0
        %2671 = vmatprep.mubr.bf16.mxu0 0
        %2672 = vmatmul.mubr.bf16.gmra.mxu0 %v2634
        %v2673 = vpop.f32.mrf.mxu0
        %v2674 = vadd.f32 0.0, %v2673
        %v2675 = vpop.f32.mrf.mxu0
        %v2676 = vpop.f32.mrf.mxu0
        %v2677 = vpop.f32.mrf.mxu0
        %2678 = vdwg.mxu0
        %v2679 = vsel %vm2521, -3.4028235e+38, %v2674
        %v2680 = vsel %vm1880, %v2679, -inf
        %2681 = vmax.xlane.f32.xlu0 %v2680
        %v2682 = vpop.xlane.xlu0 %2681
        %v2683 = vsub.f32 %v2679, %v2682
        %v2684 = vmul.f32 %v2683, 1.442695
        %v2685 = vpow.pop %v2684
        %v2686 = vsel %vm1880, %v2685, 0.0
        %2687 = vadd.xlane.f32.xlu0 %v2686
        %v2688 = vpop.xlane.xlu0 %2687
        %v2689 = vrcp.pop %v2688
        %v2690 = vmul.f32 %v2685, %v2689
        %v2691 = vsel %vm2521, 0.0, %v2690
        %v2692 = vpack.c.bf16 %v2691, %v2691
        %2693 = vrot.lane.b32.xlu0 %v1810, 88
        %v2694 = vpop.permute.xlu0 %2693
        %v2697 = vsel %vm1880, %v2692, 0
        %2699 = vmatprep.subr.bf16.mxu0 0
        %2700 = vmatpush1.bf16.msra.mxu0 0
        %2701 = vmatprep.subr.bf16.mxu0 0
        %2702 = vmatpush1.bf16.msra.mxu0 0
        %2703 = vmatprep.subr.bf16.mxu0 0
        %2704 = vmatpush1.bf16.msra.mxu0 0
        %2705 = vmatprep.subr.bf16.mxu0 0
        %2706 = vmatpush1.bf16.msra.mxu0 0
        %2707 = vmatprep.subr.bf16.mxu0 0
        %2708 = vmatpush1.bf16.msra.mxu0 0
        %2709 = vmatprep.subr.bf16.mxu0 0
        %2710 = vmatpush1.bf16.msra.mxu0 0
        %2711 = vmatprep.subr.bf16.mxu0 0
        %2712 = vmatpush1.bf16.msra.mxu0 0
        %2713 = vmatprep.subr.bf16.mxu0 0
        %2714 = vmatpush1.bf16.msra.mxu0 %v2694
        %2715 = vmatprep.subr.bf16.mxu0 0
        %2716 = vmatpush2.bf16.msra.mxu0 0
        %2717 = vmatprep.subr.bf16.mxu0 0
        %2718 = vmatpush2.bf16.msra.mxu0 0
        %2719 = vmatprep.subr.bf16.mxu0 0
        %2720 = vmatpush2.bf16.msra.mxu0 0
        %2721 = vmatprep.subr.bf16.mxu0 0
        %2722 = vmatpush2.bf16.msra.mxu0 0
        %2723 = vmatprep.subr.bf16.mxu0 0
        %2724 = vmatpush2.bf16.msra.mxu0 0
        %2725 = vmatprep.subr.bf16.mxu0 0
        %2726 = vmatpush2.bf16.msra.mxu0 0
        %2727 = vmatprep.subr.bf16.mxu0 0
        %2728 = vmatpush2.bf16.msra.mxu0 0
        %2729 = vmatprep.subr.bf16.mxu0 0
        %2730 = vmatpush2.bf16.msra.mxu0 0
        %2731 = vmatprep.mubr.bf16.mxu0 0
        %2732 = vmatmul.mubr.bf16.gmra.mxu0 %v2697
        %v2733 = vpop.f32.mrf.mxu0
        %v2734 = vadd.f32 0.0, %v2733
        %v2735 = vpop.f32.mrf.mxu0
        %v2736 = vpop.f32.mrf.mxu0
        %v2737 = vpop.f32.mrf.mxu0
        %2738 = vdwg.mxu0
        %v2739 = vpack.c.bf16 %v2734, %v2734
        %v2741 = vsel %vm1826, %v2739, 0
        %2743 = vmatprep.subr.bf16.mxu0 0
        %2744 = vmatpush1.bf16.msra.mxu0 0
        %2745 = vmatprep.subr.bf16.mxu0 0
        %2746 = vmatpush1.bf16.msra.mxu0 0
        %2747 = vmatprep.subr.bf16.mxu0 0
        %2748 = vmatpush1.bf16.msra.mxu0 0
        %2749 = vmatprep.subr.bf16.mxu0 0
        %2750 = vmatpush1.bf16.msra.mxu0 0
        %2751 = vmatprep.subr.bf16.mxu0 0
        %2752 = vmatpush1.bf16.msra.mxu0 0
        %2753 = vmatprep.subr.bf16.mxu0 0
        %2754 = vmatpush1.bf16.msra.mxu0 0
        %2755 = vmatprep.subr.bf16.mxu0 0
        %2756 = vmatpush1.bf16.msra.mxu0 0
        %2757 = vmatprep.subr.bf16.mxu0 0
        %2758 = vmatpush1.bf16.msra.mxu0 %v2105
        %2759 = vmatprep.subr.bf16.mxu0 0
        %2760 = vmatpush2.bf16.msra.mxu0 0
        %2761 = vmatprep.subr.bf16.mxu0 0
        %2762 = vmatpush2.bf16.msra.mxu0 0
        %2763 = vmatprep.subr.bf16.mxu0 0
        %2764 = vmatpush2.bf16.msra.mxu0 0
        %2765 = vmatprep.subr.bf16.mxu0 0
        %2766 = vmatpush2.bf16.msra.mxu0 0
        %2767 = vmatprep.subr.bf16.mxu0 0
        %2768 = vmatpush2.bf16.msra.mxu0 0
        %2769 = vmatprep.subr.bf16.mxu0 0
        %2770 = vmatpush2.bf16.msra.mxu0 0
        %2771 = vmatprep.subr.bf16.mxu0 0
        %2772 = vmatpush2.bf16.msra.mxu0 0
        %2773 = vmatprep.subr.bf16.mxu0 0
        %2774 = vmatpush2.bf16.msra.mxu0 0
        %2775 = vmatprep.mubr.bf16.mxu0 0
        %2776 = vmatmul.mubr.bf16.gmra.mxu0 %v2741
        %v2777 = vpop.f32.mrf.mxu0
        %v2778 = vadd.f32 0.0, %v2777
        %v2779 = vpop.f32.mrf.mxu0
        %v2780 = vpop.f32.mrf.mxu0
        %v2781 = vpop.f32.mrf.mxu0
        %2782 = vdwg.mxu0
        %v2783 = vadd.f32 %v2627, %v2778
        %2784 = vrot.lane.b32.xlu0 %v2469, 112
        %v2785 = vpop.permute.xlu0 %2784
        %2786 = vrot.lane.b32.xlu0 %v1810, 112
        %v2787 = vpop.permute.xlu0 %2786
        %v2789 = vsel %vm1826, %v2785, 0
        %v2792 = vsel %vm1826, %v2787, 0
        %2794 = vmatprep.subr.bf16.mxu0 0
        %2795 = vmatpush1.bf16.xpose.msra.mxu0 0
        %2796 = vmatprep.subr.bf16.mxu0 0
        %2797 = vmatpush1.bf16.xpose.msra.mxu0 0
        %2798 = vmatprep.subr.bf16.mxu0 0
        %2799 = vmatpush1.bf16.xpose.msra.mxu0 0
        %2800 = vmatprep.subr.bf16.mxu0 0
        %2801 = vmatpush1.bf16.xpose.msra.mxu0 0
        %2802 = vmatprep.subr.bf16.mxu0 0
        %2803 = vmatpush1.bf16.xpose.msra.mxu0 0
        %2804 = vmatprep.subr.bf16.mxu0 0
        %2805 = vmatpush1.bf16.xpose.msra.mxu0 0
        %2806 = vmatprep.subr.bf16.mxu0 0
        %2807 = vmatpush1.bf16.xpose.msra.mxu0 0
        %2808 = vmatprep.subr.bf16.mxu0 0
        %2809 = vmatpush1.bf16.xpose.msra.mxu0 %v2792
        %2810 = vmatprep.subr.bf16.mxu0 0
        %2811 = vmatpush2.bf16.xpose.msra.mxu0 0
        %2812 = vmatprep.subr.bf16.mxu0 0
        %2813 = vmatpush2.bf16.xpose.msra.mxu0 0
        %2814 = vmatprep.subr.bf16.mxu0 0
        %2815 = vmatpush2.bf16.xpose.msra.mxu0 0
        %2816 = vmatprep.subr.bf16.mxu0 0
        %2817 = vmatpush2.bf16.xpose.msra.mxu0 0
        %2818 = vmatprep.subr.bf16.mxu0 0
        %2819 = vmatpush2.bf16.xpose.msra.mxu0 0
        %2820 = vmatprep.subr.bf16.mxu0 0
        %2821 = vmatpush2.bf16.xpose.msra.mxu0 0
        %2822 = vmatprep.subr.bf16.mxu0 0
        %2823 = vmatpush2.bf16.xpose.msra.mxu0 0
        %2824 = vmatprep.subr.bf16.mxu0 0
        %2825 = vmatpush2.bf16.xpose.msra.mxu0 0
        %2826 = vmatprep.mubr.bf16.mxu0 0
        %2827 = vmatmul.mubr.bf16.gmra.mxu0 %v2789
        %v2828 = vpop.f32.mrf.mxu0
        %v2829 = vadd.f32 0.0, %v2828
        %v2830 = vpop.f32.mrf.mxu0
        %v2831 = vpop.f32.mrf.mxu0
        %v2832 = vpop.f32.mrf.mxu0
        %2833 = vdwg.mxu0
        %v2834 = vsel %vm2521, -3.4028235e+38, %v2829
        %v2835 = vsel %vm1880, %v2834, -inf
        %2836 = vmax.xlane.f32.xlu0 %v2835
        %v2837 = vpop.xlane.xlu0 %2836
        %v2838 = vsub.f32 %v2834, %v2837
        %v2839 = vmul.f32 %v2838, 1.442695
        %v2840 = vpow.pop %v2839
        %v2841 = vsel %vm1880, %v2840, 0.0
        %2842 = vadd.xlane.f32.xlu0 %v2841
        %v2843 = vpop.xlane.xlu0 %2842
        %v2844 = vrcp.pop %v2843
        %v2845 = vmul.f32 %v2840, %v2844
        %v2846 = vsel %vm2521, 0.0, %v2845
        %v2847 = vpack.c.bf16 %v2846, %v2846
        %2848 = vrot.lane.b32.xlu0 %v1810, 80
        %v2849 = vpop.permute.xlu0 %2848
        %v2852 = vsel %vm1880, %v2847, 0
        %2854 = vmatprep.subr.bf16.mxu0 0
        %2855 = vmatpush1.bf16.msra.mxu0 0
        %2856 = vmatprep.subr.bf16.mxu0 0
        %2857 = vmatpush1.bf16.msra.mxu0 0
        %2858 = vmatprep.subr.bf16.mxu0 0
        %2859 = vmatpush1.bf16.msra.mxu0 0
        %2860 = vmatprep.subr.bf16.mxu0 0
        %2861 = vmatpush1.bf16.msra.mxu0 0
        %2862 = vmatprep.subr.bf16.mxu0 0
        %2863 = vmatpush1.bf16.msra.mxu0 0
        %2864 = vmatprep.subr.bf16.mxu0 0
        %2865 = vmatpush1.bf16.msra.mxu0 0
        %2866 = vmatprep.subr.bf16.mxu0 0
        %2867 = vmatpush1.bf16.msra.mxu0 0
        %2868 = vmatprep.subr.bf16.mxu0 0
        %2869 = vmatpush1.bf16.msra.mxu0 %v2849
        %2870 = vmatprep.subr.bf16.mxu0 0
        %2871 = vmatpush2.bf16.msra.mxu0 0
        %2872 = vmatprep.subr.bf16.mxu0 0
        %2873 = vmatpush2.bf16.msra.mxu0 0
        %2874 = vmatprep.subr.bf16.mxu0 0
        %2875 = vmatpush2.bf16.msra.mxu0 0
        %2876 = vmatprep.subr.bf16.mxu0 0
        %2877 = vmatpush2.bf16.msra.mxu0 0
        %2878 = vmatprep.subr.bf16.mxu0 0
        %2879 = vmatpush2.bf16.msra.mxu0 0
        %2880 = vmatprep.subr.bf16.mxu0 0
        %2881 = vmatpush2.bf16.msra.mxu0 0
        %2882 = vmatprep.subr.bf16.mxu0 0
        %2883 = vmatpush2.bf16.msra.mxu0 0
        %2884 = vmatprep.subr.bf16.mxu0 0
        %2885 = vmatpush2.bf16.msra.mxu0 0
        %2886 = vmatprep.mubr.bf16.mxu0 0
        %2887 = vmatmul.mubr.bf16.gmra.mxu0 %v2852
        %v2888 = vpop.f32.mrf.mxu0
        %v2889 = vadd.f32 0.0, %v2888
        %v2890 = vpop.f32.mrf.mxu0
        %v2891 = vpop.f32.mrf.mxu0
        %v2892 = vpop.f32.mrf.mxu0
        %2893 = vdwg.mxu0
        %v2894 = vpack.c.bf16 %v2889, %v2889
        %v2896 = vsel %vm1826, %v2894, 0
        %2898 = vmatprep.subr.bf16.mxu0 0
        %2899 = vmatpush1.bf16.msra.mxu0 0
        %2900 = vmatprep.subr.bf16.mxu0 0
        %2901 = vmatpush1.bf16.msra.mxu0 0
        %2902 = vmatprep.subr.bf16.mxu0 0
        %2903 = vmatpush1.bf16.msra.mxu0 0
        %2904 = vmatprep.subr.bf16.mxu0 0
        %2905 = vmatpush1.bf16.msra.mxu0 0
        %2906 = vmatprep.subr.bf16.mxu0 0
        %2907 = vmatpush1.bf16.msra.mxu0 0
        %2908 = vmatprep.subr.bf16.mxu0 0
        %2909 = vmatpush1.bf16.msra.mxu0 0
        %2910 = vmatprep.subr.bf16.mxu0 0
        %2911 = vmatpush1.bf16.msra.mxu0 0
        %2912 = vmatprep.subr.bf16.mxu0 0
        %2913 = vmatpush1.bf16.msra.mxu0 %v2263
        %2914 = vmatprep.subr.bf16.mxu0 0
        %2915 = vmatpush2.bf16.msra.mxu0 0
        %2916 = vmatprep.subr.bf16.mxu0 0
        %2917 = vmatpush2.bf16.msra.mxu0 0
        %2918 = vmatprep.subr.bf16.mxu0 0
        %2919 = vmatpush2.bf16.msra.mxu0 0
        %2920 = vmatprep.subr.bf16.mxu0 0
        %2921 = vmatpush2.bf16.msra.mxu0 0
        %2922 = vmatprep.subr.bf16.mxu0 0
        %2923 = vmatpush2.bf16.msra.mxu0 0
        %2924 = vmatprep.subr.bf16.mxu0 0
        %2925 = vmatpush2.bf16.msra.mxu0 0
        %2926 = vmatprep.subr.bf16.mxu0 0
        %2927 = vmatpush2.bf16.msra.mxu0 0
        %2928 = vmatprep.subr.bf16.mxu0 0
        %2929 = vmatpush2.bf16.msra.mxu0 0
        %2930 = vmatprep.mubr.bf16.mxu0 0
        %2931 = vmatmul.mubr.bf16.gmra.mxu0 %v2896
        %v2932 = vpop.f32.mrf.mxu0
        %v2933 = vadd.f32 0.0, %v2932
        %v2934 = vpop.f32.mrf.mxu0
        %v2935 = vpop.f32.mrf.mxu0
        %v2936 = vpop.f32.mrf.mxu0
        %2937 = vdwg.mxu0
        %v2938 = vadd.f32 %v2783, %v2933
        %2939 = vrot.lane.b32.xlu0 %v2469, 104
        %v2940 = vpop.permute.xlu0 %2939
        %2941 = vrot.lane.b32.xlu0 %v1810, 104
        %v2942 = vpop.permute.xlu0 %2941
        %v2944 = vsel %vm1826, %v2940, 0
        %v2947 = vsel %vm1826, %v2942, 0
        %2949 = vmatprep.subr.bf16.mxu0 0
        %2950 = vmatpush1.bf16.xpose.msra.mxu0 0
        %2951 = vmatprep.subr.bf16.mxu0 0
        %2952 = vmatpush1.bf16.xpose.msra.mxu0 0
        %2953 = vmatprep.subr.bf16.mxu0 0
        %2954 = vmatpush1.bf16.xpose.msra.mxu0 0
        %2955 = vmatprep.subr.bf16.mxu0 0
        %2956 = vmatpush1.bf16.xpose.msra.mxu0 0
        %2957 = vmatprep.subr.bf16.mxu0 0
        %2958 = vmatpush1.bf16.xpose.msra.mxu0 0
        %2959 = vmatprep.subr.bf16.mxu0 0
        %2960 = vmatpush1.bf16.xpose.msra.mxu0 0
        %2961 = vmatprep.subr.bf16.mxu0 0
        %2962 = vmatpush1.bf16.xpose.msra.mxu0 0
        %2963 = vmatprep.subr.bf16.mxu0 0
        %2964 = vmatpush1.bf16.xpose.msra.mxu0 %v2947
        %2965 = vmatprep.subr.bf16.mxu0 0
        %2966 = vmatpush2.bf16.xpose.msra.mxu0 0
        %2967 = vmatprep.subr.bf16.mxu0 0
        %2968 = vmatpush2.bf16.xpose.msra.mxu0 0
        %2969 = vmatprep.subr.bf16.mxu0 0
        %2970 = vmatpush2.bf16.xpose.msra.mxu0 0
        %2971 = vmatprep.subr.bf16.mxu0 0
        %2972 = vmatpush2.bf16.xpose.msra.mxu0 0
        %2973 = vmatprep.subr.bf16.mxu0 0
        %2974 = vmatpush2.bf16.xpose.msra.mxu0 0
        %2975 = vmatprep.subr.bf16.mxu0 0
        %2976 = vmatpush2.bf16.xpose.msra.mxu0 0
        %2977 = vmatprep.subr.bf16.mxu0 0
        %2978 = vmatpush2.bf16.xpose.msra.mxu0 0
        %2979 = vmatprep.subr.bf16.mxu0 0
        %2980 = vmatpush2.bf16.xpose.msra.mxu0 0
        %2981 = vmatprep.mubr.bf16.mxu0 0
        %2982 = vmatmul.mubr.bf16.gmra.mxu0 %v2944
        %v2983 = vpop.f32.mrf.mxu0
        %v2984 = vadd.f32 0.0, %v2983
        %v2985 = vpop.f32.mrf.mxu0
        %v2986 = vpop.f32.mrf.mxu0
        %v2987 = vpop.f32.mrf.mxu0
        %2988 = vdwg.mxu0
        %v2989 = vsel %vm2521, -3.4028235e+38, %v2984
        %v2990 = vsel %vm1880, %v2989, -inf
        %2991 = vmax.xlane.f32.xlu0 %v2990
        %v2992 = vpop.xlane.xlu0 %2991
        %v2993 = vsub.f32 %v2989, %v2992
        %v2994 = vmul.f32 %v2993, 1.442695
        %v2995 = vpow.pop %v2994
        %v2996 = vsel %vm1880, %v2995, 0.0
        %2997 = vadd.xlane.f32.xlu0 %v2996
        %v2998 = vpop.xlane.xlu0 %2997
        %v2999 = vrcp.pop %v2998
        %v3000 = vmul.f32 %v2995, %v2999
        %v3001 = vsel %vm2521, 0.0, %v3000
        %v3002 = vpack.c.bf16 %v3001, %v3001
        %3003 = vrot.lane.b32.xlu0 %v1810, 72
        %v3004 = vpop.permute.xlu0 %3003
        %v3007 = vsel %vm1880, %v3002, 0
        %3009 = vmatprep.subr.bf16.mxu0 0
        %3010 = vmatpush1.bf16.msra.mxu0 0
        %3011 = vmatprep.subr.bf16.mxu0 0
        %3012 = vmatpush1.bf16.msra.mxu0 0
        %3013 = vmatprep.subr.bf16.mxu0 0
        %3014 = vmatpush1.bf16.msra.mxu0 0
        %3015 = vmatprep.subr.bf16.mxu0 0
        %3016 = vmatpush1.bf16.msra.mxu0 0
        %3017 = vmatprep.subr.bf16.mxu0 0
        %3018 = vmatpush1.bf16.msra.mxu0 0
        %3019 = vmatprep.subr.bf16.mxu0 0
        %3020 = vmatpush1.bf16.msra.mxu0 0
        %3021 = vmatprep.subr.bf16.mxu0 0
        %3022 = vmatpush1.bf16.msra.mxu0 0
        %3023 = vmatprep.subr.bf16.mxu0 0
        %3024 = vmatpush1.bf16.msra.mxu0 %v3004
        %3025 = vmatprep.subr.bf16.mxu0 0
        %3026 = vmatpush2.bf16.msra.mxu0 0
        %3027 = vmatprep.subr.bf16.mxu0 0
        %3028 = vmatpush2.bf16.msra.mxu0 0
        %3029 = vmatprep.subr.bf16.mxu0 0
        %3030 = vmatpush2.bf16.msra.mxu0 0
        %3031 = vmatprep.subr.bf16.mxu0 0
        %3032 = vmatpush2.bf16.msra.mxu0 0
        %3033 = vmatprep.subr.bf16.mxu0 0
        %3034 = vmatpush2.bf16.msra.mxu0 0
        %3035 = vmatprep.subr.bf16.mxu0 0
        %3036 = vmatpush2.bf16.msra.mxu0 0
        %3037 = vmatprep.subr.bf16.mxu0 0
        %3038 = vmatpush2.bf16.msra.mxu0 0
        %3039 = vmatprep.subr.bf16.mxu0 0
        %3040 = vmatpush2.bf16.msra.mxu0 0
        %3041 = vmatprep.mubr.bf16.mxu0 0
        %3042 = vmatmul.mubr.bf16.gmra.mxu0 %v3007
        %v3043 = vpop.f32.mrf.mxu0
        %v3044 = vadd.f32 0.0, %v3043
        %v3045 = vpop.f32.mrf.mxu0
        %v3046 = vpop.f32.mrf.mxu0
        %v3047 = vpop.f32.mrf.mxu0
        %3048 = vdwg.mxu0
        %v3049 = vpack.c.bf16 %v3044, %v3044
        %v3051 = vsel %vm1826, %v3049, 0
        %3053 = vmatprep.subr.bf16.mxu0 0
        %3054 = vmatpush1.bf16.msra.mxu0 0
        %3055 = vmatprep.subr.bf16.mxu0 0
        %3056 = vmatpush1.bf16.msra.mxu0 0
        %3057 = vmatprep.subr.bf16.mxu0 0
        %3058 = vmatpush1.bf16.msra.mxu0 0
        %3059 = vmatprep.subr.bf16.mxu0 0
        %3060 = vmatpush1.bf16.msra.mxu0 0
        %3061 = vmatprep.subr.bf16.mxu0 0
        %3062 = vmatpush1.bf16.msra.mxu0 0
        %3063 = vmatprep.subr.bf16.mxu0 0
        %3064 = vmatpush1.bf16.msra.mxu0 0
        %3065 = vmatprep.subr.bf16.mxu0 0
        %3066 = vmatpush1.bf16.msra.mxu0 0
        %3067 = vmatprep.subr.bf16.mxu0 0
        %3068 = vmatpush1.bf16.msra.mxu0 %v2421
        %3069 = vmatprep.subr.bf16.mxu0 0
        %3070 = vmatpush2.bf16.msra.mxu0 0
        %3071 = vmatprep.subr.bf16.mxu0 0
        %3072 = vmatpush2.bf16.msra.mxu0 0
        %3073 = vmatprep.subr.bf16.mxu0 0
        %3074 = vmatpush2.bf16.msra.mxu0 0
        %3075 = vmatprep.subr.bf16.mxu0 0
        %3076 = vmatpush2.bf16.msra.mxu0 0
        %3077 = vmatprep.subr.bf16.mxu0 0
        %3078 = vmatpush2.bf16.msra.mxu0 0
        %3079 = vmatprep.subr.bf16.mxu0 0
        %3080 = vmatpush2.bf16.msra.mxu0 0
        %3081 = vmatprep.subr.bf16.mxu0 0
        %3082 = vmatpush2.bf16.msra.mxu0 0
        %3083 = vmatprep.subr.bf16.mxu0 0
        %3084 = vmatpush2.bf16.msra.mxu0 0
        %3085 = vmatprep.mubr.bf16.mxu0 0
        %3086 = vmatmul.mubr.bf16.gmra.mxu0 %v3051
        %v3087 = vpop.f32.mrf.mxu0
        %v3088 = vadd.f32 0.0, %v3087
        %v3089 = vpop.f32.mrf.mxu0
        %v3090 = vpop.f32.mrf.mxu0
        %v3091 = vpop.f32.mrf.mxu0
        %3092 = vdwg.mxu0
        %v3093 = vadd.f32 %v2938, %v3088
        %v3094 = vadd.f32 %v1602, %v3093
        %s3095 = scalar_lea.vmem [#allocation20], 8
        %3096 = vst.msk [vmem:[%s3095] sm:$0xff] %vm1209, %v3094
        // Predicated region
        $region153: #{tpu_custom_call.1} parent=107 // pred_check
          %p3097 = pneg %p650
        $region154: #{tpu_custom_call.1} parent=107 // pred_check_branch
          %3099 = sbr.rel (%p3097) target = $region156
        $region155: #{tpu_custom_call.1} parent=107 // pred_region
          %s3100 = smul.u32 2, %s52
          %s3102 = ssub.s32 256, 256
          %3103 = vsyncadd [#allocation5], %s3102
          %s3104 = smul.addr %s3100, 128
          %s3105 = scalar_lea.hbm %s22, %s3104
          %s3106 = sshll.u32 [#allocation20], 4
          %s3107 = int_to_ptr.vmem [resolvable:$true] %s3106
          %3112 = dma.vmem_to_hbm [thread:$0]  %s3107, 256, %s3105, [#allocation5], 128, 128, 8
        $region156: #{tpu_custom_call.1} parent=107 // pred_fallthru
          _
        // Predicated region
        $region157: #{tpu_custom_call.1} parent=107 // pred_check
          %p3113 = pneg %p650
        $region158: #{tpu_custom_call.1} parent=107 // pred_check_branch
          %3115 = sbr.rel (%p3113) target = $region160
        $region159: #{tpu_custom_call.1} parent=107 // pred_region
          %3116 = dma.done [#allocation5], 256
        $region160: #{tpu_custom_call.1} parent=107 // pred_fallthru
          _
      $region108: #{tpu_custom_call.1} parent=5 // pred_fallthru
        _
      %p3117 = scmp.le.s32.totalorder 2, %s43
      // Predicated region
      $region161: #{tpu_custom_call.1} parent=5 // pred_check
        %p3118 = pneg %p3117
      $region162: #{tpu_custom_call.1} parent=5 // pred_check_branch
        %3120 = sbr.rel (%p3118) target = $region164
      $region163: #{tpu_custom_call.1} parent=5 // pred_region
        %s3121 = ssub.s32 %s43, 2
      $region164: #{tpu_custom_call.1} parent=5 // pred_fallthru
        _
    $region6: #{tpu_custom_call.1} parent=1 // loop_footer
      %s47 = sadd.s32 1, %s43
    $region7: #{tpu_custom_call.1} parent=1 // loop_footer_branch
      %42 = sbr.rel target = $region3
    $region8: #{tpu_custom_call.1} parent=1 // loop_exit
      _
    %3122 = vsyncpa [#allocation4], 1
    %s3123 = scalar_lea.sflag [#allocation4], 1
    %3124 = vsyncpa %s3123, 1
    %3125 = vsyncpa [#allocation7], 1
    %3126 = vsyncpa [#allocation10], 1
    %s3127 = scalar_lea.sflag [#allocation10], 1
    %3128 = vsyncpa %s3127, 1
    %3129 = vsyncpa [#allocation13], 1
    %s3130 = scalar_lea.sflag [#allocation13], 1
    %3131 = vsyncpa %s3130, 1
    %3132 = vsyncpa [#allocation16], 1
    %s3133 = scalar_lea.sflag [#allocation16], 1
    %3134 = vsyncpa %s3133, 1
    %3135 = vsyncpa [#allocation19], 1
    %s3136 = scalar_lea.sflag [#allocation19], 1
    %3137 = vsyncpa %s3136, 1
    %3138 = vsyncpa [#allocation5], 1
    %s3139 = scalar_lea.sflag [#allocation5], 1
    %3140 = vsyncpa %s3139, 1

</llo_original>
